<compile_context>
chip_gen: v5e
topology: v5e:2x2
jax: 0.10.0
libtpu: 0.0.40
codegen_flags: <defaults>
</compile_context>

<pallas_src>
import functools
import math

import jax
import jax.numpy as jnp
from jax.experimental import pallas as pl
from jax.experimental.pallas import tpu as pltpu

_VMEM = pltpu.MemorySpace.VMEM
_VMEM_LIMIT = 32 * 1024 * 1024


def _round_up(x, m):
    return ((x + m - 1) // m) * m


def compute_pad_slots(num_relations, feature, hidden1, mxu_depth=256):
    """Pad (root + R relation) slots so both folded K dims are multiples of 256."""
    mult = 1
    for f in (feature, hidden1):
        need = mxu_depth // math.gcd(mxu_depth, f)
        mult = mult * need // math.gcd(mult, need)
    return _round_up(num_relations + 1, mult)


def _num_row_blocks(m_rows):
    """1 row block on single-TC chips (v5e/v6e); 2 balanced blocks on v7x."""
    try:
        kind = jax.devices()[0].device_kind.lower()
    except Exception:
        return 1
    blocks = 2 if ("v7" in kind or "tpu7" in kind) else 1
    # keep block rows a multiple of 16 (bf16 sublane packing) and dividing M
    if m_rows % blocks != 0 or (m_rows // blocks) % 16 != 0:
        blocks = 1
    return blocks


# ----------------------------------------------------------------------------
# Pallas kernel 1: RGCN layer 1 (root folded into K)  out = relu(agg @ W + b)
# ----------------------------------------------------------------------------
def _rgcn1_kernel(agg_ref, w_ref, b_ref, out_ref):
    out = jnp.dot(agg_ref[...], w_ref[...],
                  preferred_element_type=jnp.float32) + b_ref[...]
    out_ref[...] = jnp.maximum(out, 0.0)


def rgcn_layer1(agg2d, w2d, bias):
    M, K = agg2d.shape
    Fout = w2d.shape[1]
    nb = _num_row_blocks(M)
    bm = M // nb
    cost = pl.CostEstimate(
        flops=2 * M * K * Fout + 2 * M * Fout,
        transcendentals=0,
        bytes_accessed=(M * K * agg2d.dtype.itemsize
                        + K * Fout * w2d.dtype.itemsize
                        + M * Fout * 4 + Fout * 4))
    return pl.pallas_call(
        _rgcn1_kernel,
        out_shape=jax.ShapeDtypeStruct((M, Fout), jnp.float32),
        grid_spec=pltpu.PrefetchScalarGridSpec(
            num_scalar_prefetch=0,
            grid=(nb,),
            in_specs=[
                pl.BlockSpec((bm, K), lambda i: (i, 0)),
                pl.BlockSpec((K, Fout), lambda i: (0, 0)),
                pl.BlockSpec((1, Fout), lambda i: (0, 0)),
            ],
            out_specs=pl.BlockSpec((bm, Fout), lambda i: (i, 0)),
        ),
        compiler_params=pltpu.CompilerParams(
            dimension_semantics=("parallel",),
            vmem_limit_bytes=_VMEM_LIMIT),
        cost_estimate=cost,
    )(agg2d, w2d, bias.reshape(1, Fout))


# ----------------------------------------------------------------------------
# Pallas kernel 2: RGCN layer 2 fused with AvgReadout + Sigmoid + Bilinear disc
#   x2 = agg @ W + b          (no relu)
#   c  = sigmoid(mean over original graph's N nodes)    (MXU contraction)
#   sc = x2 @ (W_bil @ c^T) + b_bil                     ([3N, 1] logits)
# ----------------------------------------------------------------------------
def _rgcn2_disc_kernel(agg_ref, w_ref, b_ref, wbil_ref, bbil_ref,
                       x2_ref, sc_ref, *, n_nodes):
    x2 = jnp.dot(agg_ref[...], w_ref[...],
                 preferred_element_type=jnp.float32) + b_ref[...]
    x2_ref[...] = x2
    # AvgReadout over the ORIGINAL graph's nodes as an MXU contraction.
    ones_row = jnp.full((1, n_nodes), 1.0 / n_nodes, dtype=jnp.float32)
    c = jax.nn.sigmoid(jnp.dot(ones_row, x2[:n_nodes, :],
                               preferred_element_type=jnp.float32))       # [1, H]
    # torch Bilinear f_k(h, c): h @ W @ c^T + b -- contract on the MXU.
    wc = jax.lax.dot_general(wbil_ref[...], c, (((1,), (1,)), ((), ())),
                             preferred_element_type=jnp.float32)          # [H, 1]
    sc_ref[...] = jnp.dot(x2, wc, preferred_element_type=jnp.float32) + bbil_ref[0, 0]


def rgcn_layer2_disc(agg2d, w2d, bias, w_bil, b_bil, n_nodes):
    M, K = agg2d.shape
    Fout = w2d.shape[1]
    cost = pl.CostEstimate(
        flops=2 * M * K * Fout + 2 * M * Fout + 2 * n_nodes * Fout
        + 2 * Fout * Fout + 2 * M * Fout,
        transcendentals=Fout,
        bytes_accessed=(M * K * agg2d.dtype.itemsize
                        + K * Fout * w2d.dtype.itemsize
                        + M * (Fout + 1) * 4 + (Fout * Fout + 2 * Fout) * 4))
    kernel = functools.partial(_rgcn2_disc_kernel, n_nodes=n_nodes)
    return pl.pallas_call(
        kernel,
        out_shape=(jax.ShapeDtypeStruct((M, Fout), jnp.float32),
                   jax.ShapeDtypeStruct((M, 1), jnp.float32)),
        in_specs=[pl.BlockSpec(memory_space=_VMEM)] * 5,
        out_specs=(pl.BlockSpec(memory_space=_VMEM),
                   pl.BlockSpec(memory_space=_VMEM)),
        compiler_params=pltpu.CompilerParams(vmem_limit_bytes=_VMEM_LIMIT),
        cost_estimate=cost,
    )(agg2d, w2d, bias.reshape(1, Fout), w_bil, b_bil.reshape(1, 1))


# ----------------------------------------------------------------------------
# Pallas kernel 3: pair classifier -- single K=2*(h1+h2)=128 matmul + bias
#   log = [entity1 | entity2] @ W_cls^T + b
# ----------------------------------------------------------------------------
def _cls_kernel(ent_ref, wt_ref, b_ref, out_ref):
    out_ref[...] = (jnp.dot(ent_ref[...], wt_ref[...],
                            preferred_element_type=jnp.float32) + b_ref[...])


def classifier(ent, w_cls_t, bias):
    num_pairs = ent.shape[0]
    d_out = w_cls_t.shape[1]
    return pl.pallas_call(
        _cls_kernel,
        out_shape=jax.ShapeDtypeStruct((num_pairs, d_out), jnp.float32),
        in_specs=[pl.BlockSpec(memory_space=_VMEM)] * 3,
        out_specs=pl.BlockSpec(memory_space=_VMEM),
    )(ent, w_cls_t, bias.reshape(1, d_out))


# ----------------------------------------------------------------------------
# JAX glue: stacked per-(node, relation) mean aggregation with root slot 0.
# TODO(synk): the data-dependent edge gather/segment_sum stays in plain JAX;
# fusing it into the RGCN kernel needs a sorted-edge scalar-prefetch DMA gather.
# ----------------------------------------------------------------------------
def build_stacked_graph(edge_index, e_type, e_type1, n_nodes, pad_slots):
    """Stack the 3 branches' edges with node offsets 0 / N / 2N."""
    src, dst = edge_index[0], edge_index[1]
    offs = (jnp.arange(3, dtype=src.dtype) * n_nodes)[:, None]        # [3, 1]
    src_s = (src[None, :] + offs).reshape(-1)                         # [3E]
    dst_s = (dst[None, :] + offs).reshape(-1)                         # [3E]
    et_s = jnp.concatenate([e_type, e_type, e_type1])                 # [3E]
    # slot 0 of every node is reserved for the root (self) features.
    seg_ids = dst_s * pad_slots + (et_s + 1)
    cnt = jax.ops.segment_sum(jnp.ones(src_s.shape, jnp.float32), seg_ids,
                              num_segments=3 * n_nodes * pad_slots)
    inv_cnt = 1.0 / jnp.maximum(cnt, 1.0)                             # PyG 'mean'
    return src_s, seg_ids, inv_cnt


def compute_agg_stacked(x_stack, src_s, seg_ids, inv_cnt, pad_slots):
    """[3N, pad_slots*Fin]; slot 0 = own features, slots 1..R = relation means."""
    m, f = x_stack.shape
    msg = x_stack[src_s]                                              # f32 gather
    summed = jax.ops.segment_sum(msg, seg_ids, num_segments=m * pad_slots)
    agg = (summed * inv_cnt[:, None]).reshape(m, pad_slots, f)        # mean in f32
    agg = agg.at[:, 0, :].set(x_stack)                                # root slot
    return agg.reshape(m, pad_slots * f).astype(jnp.bfloat16)         # matmul input


# ----------------------------------------------------------------------------
# MRCGNN forward (mirrors MRCGNN.forward)
# ----------------------------------------------------------------------------
@jax.jit
def mrcgnn_forward(params, x_o, x_a, edge_index, e_type, e_type1, idx):
    n_nodes, feature = x_o.shape
    pad_slots = params["w1_2d"].shape[0] // feature
    num_pairs = idx.shape[1]

    # Stack the three branches along rows: [x_o ; x_a ; x_o]
    x_stack = jnp.concatenate([x_o, x_a, x_o], axis=0)                # [3N, Fin]
    src_s, seg_ids, inv_cnt = build_stacked_graph(
        edge_index, e_type, e_type1, n_nodes, pad_slots)

    # TODO(synk): F.dropout treated as eval-mode identity (RNG-dependent op).
    agg1 = compute_agg_stacked(x_stack, src_s, seg_ids, inv_cnt, pad_slots)
    x1_stack = rgcn_layer1(agg1, params["w1_2d"], params["bias1"])    # [3N, h1] f32

    agg2 = compute_agg_stacked(x1_stack, src_s, seg_ids, inv_cnt, pad_slots)
    x2_stack, sc = rgcn_layer2_disc(agg2, params["w2_2d"], params["bias2"],
                                    params["w_bil"], params["b_bil"], n_nodes)

    x1_o = x1_stack[:n_nodes]
    x2_o = x2_stack[:n_nodes]

    sc_1 = sc[:n_nodes]
    sc_2 = sc[n_nodes:2 * n_nodes]
    sc_2a = sc[2 * n_nodes:]
    ret_os = jnp.concatenate([sc_1, sc_2], axis=1)                    # [N, 2]
    ret_os_a = jnp.concatenate([sc_1, sc_2a], axis=1)                 # [N, 2]

    attt = params["attt"]
    final = jnp.concatenate((attt[0] * x1_o, attt[1] * x2_o), axis=1)  # [N, h1+h2]

    # Interleaved pair gather -> [P, 2*(h1+h2)] so the classifier is one matmul.
    pair_ids = jnp.transpose(idx).reshape(-1).astype(jnp.int32)       # [a0,b0,a1,b1,...]
    ent = final[pair_ids].reshape(num_pairs, -1)                      # [P, 128]
    log = classifier(ent, params["w_cls_t"], params["b_cls"])
    return log, ret_os, ret_os_a, x2_o


# ----------------------------------------------------------------------------
# Deterministic parameter init (root folded + K-padded, weights pre-transposed)
# ----------------------------------------------------------------------------
def init_params(key, feature, hidden1, hidden2, num_relations=65):
    ks = jax.random.split(key, 8)
    pad_slots = compute_pad_slots(num_relations, feature, hidden1)
    n_cls_in = 2 * (hidden1 + hidden2)

    root1 = 0.1 * jax.random.normal(ks[0], (feature, hidden1), jnp.float32)
    w_rel1 = 0.1 * jax.random.normal(ks[1], (num_relations, feature, hidden1), jnp.float32)
    root2 = 0.1 * jax.random.normal(ks[2], (hidden1, hidden2), jnp.float32)
    w_rel2 = 0.1 * jax.random.normal(ks[3], (num_relations, hidden1, hidden2), jnp.float32)
    w_bil = 0.1 * jax.random.normal(ks[4], (32, 32), jnp.float32)     # Bilinear(32,32,1).weight[0]
    w_cls = 0.1 * jax.random.normal(ks[5], (65, n_cls_in), jnp.float32)  # torch Linear layout

    def stack_weights(root, w_rel, fin, fout):
        pad = jnp.zeros(((pad_slots - num_relations - 1) * fin, fout), jnp.float32)
        return jnp.concatenate(
            [root, w_rel.reshape(num_relations * fin, fout), pad], axis=0
        ).astype(jnp.bfloat16)                                        # [pad_slots*fin, fout]

    return {
        "w1_2d": stack_weights(root1, w_rel1, feature, hidden1),
        "bias1": jnp.zeros((hidden1,), jnp.float32),
        "w2_2d": stack_weights(root2, w_rel2, hidden1, hidden2),
        "bias2": jnp.zeros((hidden2,), jnp.float32),
        "attt": jnp.array([0.5, 0.5], jnp.float32),
        "w_bil": w_bil,
        "b_bil": jnp.zeros((1,), jnp.float32),                        # bias filled 0.0
        "w_cls_t": jnp.transpose(w_cls),                              # [2*(h1+h2), 65]
        "b_cls": jnp.zeros((65,), jnp.float32),
    }


if __name__ == "__main__":
    key = jax.random.PRNGKey(0)
    k_x, k_perm, k_src, k_dst, k_et, k_et1, k_idx, k_params = jax.random.split(key, 8)

    N, E, P = 64, 256, 8                      # nodes, edges, query pairs
    feature, hidden1, hidden2 = 16, 32, 32    # hidden2 must be 32 (Bilinear(32,32,1))
    R = 65

    x_o = jax.random.normal(k_x, (N, feature), jnp.float32)
    x_a = x_o[jax.random.permutation(k_perm, N)]          # data_s.x: shuffled features

    edge_index = jnp.stack([
        jax.random.randint(k_src, (E,), 0, N, jnp.int32),
        jax.random.randint(k_dst, (E,), 0, N, jnp.int32),
    ])
    e_type = jax.random.randint(k_et, (E,), 0, R, jnp.int32)
    e_type1 = jax.random.randint(k_et1, (E,), 0, R, jnp.int32)   # data_a.edge_type
    idx = jax.random.randint(k_idx, (2, P), 0, N, jnp.int32)

    params = init_params(k_params, feature, hidden1, hidden2, R)

    log, ret_os, ret_os_a, x2_o = mrcgnn_forward(
        params, x_o, x_a, edge_index, e_type, e_type1, idx)
    jax.block_until_ready((log, ret_os, ret_os_a, x2_o))

    assert log.shape == (P, 65)
    assert ret_os.shape == (N, 2) and ret_os_a.shape == (N, 2)
    assert x2_o.shape == (N, hidden2)
    print("KERNEL_OK")
</pallas_src>

<mosaic_0001>
module attributes {stable_mosaic.version = 11 : i64} {
  func.func @_rgcn1_kernel(%arg0: i32, %arg1: memref<192x1280xbf16, #tpu.memory_space<vmem>>, %arg2: memref<1280x32xbf16, #tpu.memory_space<vmem>>, %arg3: memref<1x32xf32, #tpu.memory_space<vmem>>, %arg4: memref<192x32xf32, #tpu.memory_space<vmem>>) attributes {dimension_semantics = [#tpu.dimension_semantics<parallel>], iteration_bounds = array<i64: 1>, scalar_prefetch = 0 : i64, scratch_operands = 0 : i64, tpu.core_type = #tpu.core_type<tc>, window_params = [{transform_indices = @transform_0, window_bounds = array<i64: 192, 1280>}, {pipeline_mode = #tpu.pipeline_mode<synchronous>, transform_indices = @transform_1, window_bounds = array<i64: 1280, 32>}, {pipeline_mode = #tpu.pipeline_mode<synchronous>, transform_indices = @transform_2, window_bounds = array<i64: 1, 32>}, {transform_indices = @transform_3, window_bounds = array<i64: 192, 32>}]} {
    %c0 = arith.constant 0 : index
    %c0_0 = arith.constant 0 : index
    %0 = vector.load %arg1[%c0, %c0_0] : memref<192x1280xbf16, #tpu.memory_space<vmem>>, vector<192x1280xbf16>
    %c0_1 = arith.constant 0 : index
    %c0_2 = arith.constant 0 : index
    %1 = vector.load %arg2[%c0_1, %c0_2] : memref<1280x32xbf16, #tpu.memory_space<vmem>>, vector<1280x32xbf16>
    %cst = arith.constant dense<0.000000e+00> : vector<192x32xf32>
    %2 = tpu.matmul %0, %1, %cst {dimension_numbers = #tpu.dot_dimension_numbers<[1], [0], [0], [1], [0, 0, 1, 1], [], []>} : vector<192x1280xbf16>, vector<1280x32xbf16>, vector<192x32xf32> -> vector<192x32xf32>
    %c0_3 = arith.constant 0 : index
    %c0_4 = arith.constant 0 : index
    %3 = vector.load %arg3[%c0_3, %c0_4] : memref<1x32xf32, #tpu.memory_space<vmem>>, vector<1x32xf32>
    %4 = vector.broadcast %3 : vector<1x32xf32> to vector<192x32xf32>
    %5 = arith.addf %2, %4 : vector<192x32xf32>
    %cst_5 = arith.constant 0.000000e+00 : f32
    %6 = vector.broadcast %cst_5 : f32 to vector<192x32xf32>
    %7 = arith.maximumf %5, %6 : vector<192x32xf32>
    %c0_6 = arith.constant 0 : index
    %c0_7 = arith.constant 0 : index
    %8 = vector.load %arg4[%c0_6, %c0_7] : memref<192x32xf32, #tpu.memory_space<vmem>>, vector<192x32xf32>
    tpu.vector_store %arg4[%c0_6, %c0_7], %7 {strides = array<i32>} : memref<192x32xf32, #tpu.memory_space<vmem>>, vector<192x32xf32>,
    return
  }
  func.func @transform_0(%arg0: i32) -> (i32, i32) {
    %c0_i32 = arith.constant 0 : i32
    %c0_i32_0 = arith.constant 0 : i32
    return %arg0, %c0_i32 : i32, i32
  }
  func.func @transform_1(%arg0: i32) -> (i32, i32) {
    %c0_i32 = arith.constant 0 : i32
    %c0_i32_0 = arith.constant 0 : i32
    %c0_i32_1 = arith.constant 0 : i32
    return %c0_i32, %c0_i32_0 : i32, i32
  }
  func.func @transform_2(%arg0: i32) -> (i32, i32) {
    %c0_i32 = arith.constant 0 : i32
    %c0_i32_0 = arith.constant 0 : i32
    %c0_i32_1 = arith.constant 0 : i32
    return %c0_i32, %c0_i32_0 : i32, i32
  }
  func.func @transform_3(%arg0: i32) -> (i32, i32) {
    %c0_i32 = arith.constant 0 : i32
    %c0_i32_0 = arith.constant 0 : i32
    return %arg0, %c0_i32 : i32, i32
  }
}

module attributes {stable_mosaic.version = 11 : i64} {
  func.func @_rgcn2_disc_kernel(%arg0: memref<192x2560xbf16, #tpu.memory_space<vmem>>, %arg1: memref<2560x32xbf16, #tpu.memory_space<vmem>>, %arg2: memref<1x32xf32, #tpu.memory_space<vmem>>, %arg3: memref<32x32xf32, #tpu.memory_space<vmem>>, %arg4: memref<1x1xf32, #tpu.memory_space<vmem>>, %arg5: memref<192x32xf32, #tpu.memory_space<vmem>>, %arg6: memref<192x1xf32, #tpu.memory_space<vmem>>) attributes {dimension_semantics = [], scalar_prefetch = 0 : i64, scratch_operands = 0 : i64, tpu.core_type = #tpu.core_type<tc>} {
    %c0 = arith.constant 0 : index
    %c0_0 = arith.constant 0 : index
    %0 = vector.load %arg0[%c0, %c0_0] : memref<192x2560xbf16, #tpu.memory_space<vmem>>, vector<192x2560xbf16>
    %c0_1 = arith.constant 0 : index
    %c0_2 = arith.constant 0 : index
    %1 = vector.load %arg1[%c0_1, %c0_2] : memref<2560x32xbf16, #tpu.memory_space<vmem>>, vector<2560x32xbf16>
    %cst = arith.constant dense<0.000000e+00> : vector<192x32xf32>
    %2 = tpu.matmul %0, %1, %cst {dimension_numbers = #tpu.dot_dimension_numbers<[1], [0], [0], [1], [0, 0, 1, 1], [], []>} : vector<192x2560xbf16>, vector<2560x32xbf16>, vector<192x32xf32> -> vector<192x32xf32>
    %c0_3 = arith.constant 0 : index
    %c0_4 = arith.constant 0 : index
    %3 = vector.load %arg2[%c0_3, %c0_4] : memref<1x32xf32, #tpu.memory_space<vmem>>, vector<1x32xf32>
    %4 = vector.broadcast %3 : vector<1x32xf32> to vector<192x32xf32>
    %5 = arith.addf %2, %4 : vector<192x32xf32>
    %c0_5 = arith.constant 0 : index
    %c0_6 = arith.constant 0 : index
    %6 = vector.load %arg5[%c0_5, %c0_6] : memref<192x32xf32, #tpu.memory_space<vmem>>, vector<192x32xf32>
    tpu.vector_store %arg5[%c0_5, %c0_6], %5 {strides = array<i32>} : memref<192x32xf32, #tpu.memory_space<vmem>>, vector<192x32xf32>,
    %cst_7 = arith.constant 1.562500e-02 : f32
    %7 = vector.broadcast %cst_7 : f32 to vector<1x64xf32>
    %8 = vector.extract_strided_slice %5 {offsets = [0, 0], sizes = [64, 32], strides = [1, 1]} : vector<192x32xf32> to vector<64x32xf32>
    %cst_8 = arith.constant dense<0.000000e+00> : vector<1x32xf32>
    %9 = tpu.matmul %7, %8, %cst_8 {dimension_numbers = #tpu.dot_dimension_numbers<[1], [0], [0], [1], [0, 0, 1, 1], [], []>} : vector<1x64xf32>, vector<64x32xf32>, vector<1x32xf32> -> vector<1x32xf32>
    %10 = arith.negf %9 : vector<1x32xf32>
    %11 = math.exp %10 : vector<1x32xf32>
    %cst_9 = arith.constant 1.000000e+00 : f32
    %12 = vector.broadcast %cst_9 : f32 to vector<1x32xf32>
    %13 = arith.addf %12, %11 : vector<1x32xf32>
    %14 = arith.divf %12, %13 : vector<1x32xf32>
    %c0_10 = arith.constant 0 : index
    %c0_11 = arith.constant 0 : index
    %15 = vector.load %arg3[%c0_10, %c0_11] : memref<32x32xf32, #tpu.memory_space<vmem>>, vector<32x32xf32>
    %cst_12 = arith.constant dense<0.000000e+00> : vector<32x1xf32>
    %16 = tpu.matmul %15, %14, %cst_12 {dimension_numbers = #tpu.dot_dimension_numbers<[1], [1], [0], [0], [0, 0, 1, 0], [], []>} : vector<32x32xf32>, vector<1x32xf32>, vector<32x1xf32> -> vector<32x1xf32>
    %cst_13 = arith.constant dense<0.000000e+00> : vector<192x1xf32>
    %17 = tpu.matmul %5, %16, %cst_13 {dimension_numbers = #tpu.dot_dimension_numbers<[1], [0], [0], [1], [0, 0, 1, 1], [], []>} : vector<192x32xf32>, vector<32x1xf32>, vector<192x1xf32> -> vector<192x1xf32>
    %c0_14 = arith.constant 0 : index
    %c0_15 = arith.constant 0 : index
    %18 = vector.load %arg4[%c0_14, %c0_15] : memref<1x1xf32, #tpu.memory_space<vmem>>, vector<1x1xf32>
    %19 = vector.extract %18[0, 0] : f32 from vector<1x1xf32>
    %20 = vector.broadcast %19 : f32 to vector<192x1xf32>
    %21 = arith.addf %17, %20 : vector<192x1xf32>
    %c0_16 = arith.constant 0 : index
    %c0_17 = arith.constant 0 : index
    %22 = vector.load %arg6[%c0_16, %c0_17] : memref<192x1xf32, #tpu.memory_space<vmem>>, vector<192x1xf32>
    tpu.vector_store %arg6[%c0_16, %c0_17], %21 {strides = array<i32>} : memref<192x1xf32, #tpu.memory_space<vmem>>, vector<192x1xf32>,
    return
  }
}

module attributes {stable_mosaic.version = 11 : i64} {
  func.func @_cls_kernel(%arg0: memref<8x128xf32, #tpu.memory_space<vmem>>, %arg1: memref<128x65xf32, #tpu.memory_space<vmem>>, %arg2: memref<1x65xf32, #tpu.memory_space<vmem>>, %arg3: memref<8x65xf32, #tpu.memory_space<vmem>>) attributes {dimension_semantics = [], scalar_prefetch = 0 : i64, scratch_operands = 0 : i64, tpu.core_type = #tpu.core_type<tc>} {
    %c0 = arith.constant 0 : index
    %c0_0 = arith.constant 0 : index
    %0 = vector.load %arg0[%c0, %c0_0] : memref<8x128xf32, #tpu.memory_space<vmem>>, vector<8x128xf32>
    %c0_1 = arith.constant 0 : index
    %c0_2 = arith.constant 0 : index
    %1 = vector.load %arg1[%c0_1, %c0_2] : memref<128x65xf32, #tpu.memory_space<vmem>>, vector<128x65xf32>
    %cst = arith.constant dense<0.000000e+00> : vector<8x65xf32>
    %2 = tpu.matmul %0, %1, %cst {dimension_numbers = #tpu.dot_dimension_numbers<[1], [0], [0], [1], [0, 0, 1, 1], [], []>} : vector<8x128xf32>, vector<128x65xf32>, vector<8x65xf32> -> vector<8x65xf32>
    %c0_3 = arith.constant 0 : index
    %c0_4 = arith.constant 0 : index
    %3 = vector.load %arg2[%c0_3, %c0_4] : memref<1x65xf32, #tpu.memory_space<vmem>>, vector<1x65xf32>
    %4 = vector.broadcast %3 : vector<1x65xf32> to vector<8x65xf32>
    %5 = arith.addf %2, %4 : vector<8x65xf32>
    %c0_5 = arith.constant 0 : index
    %c0_6 = arith.constant 0 : index
    %6 = vector.load %arg3[%c0_5, %c0_6] : memref<8x65xf32, #tpu.memory_space<vmem>>, vector<8x65xf32>
    tpu.vector_store %arg3[%c0_5, %c0_6], %5 {strides = array<i32>} : memref<8x65xf32, #tpu.memory_space<vmem>>, vector<8x65xf32>,
    return
  }
}

</mosaic_0001>

<llo_original>
// kernel: mrcgnn_forward.3
$region0: #{mrcgnn_forward.3}
  #allocation0 [shape = 'u32[]', space=smem, size = 0x4, offset = 0x4, fixed_abs, tag = 'smem constant byte address 0x4 - core index']
  #allocation1 [shape = 'u32[72,128]{1,0:T(1,128)}', space=vmem, size = 0x9000, scoped, tag = 'internal scratch']
  %s0 = inlined_call_operand.vmem [shape: bf16[192,1280], index: 0, kind: input, shape index: {}]
  %s1 = inlined_call_operand.vmem [shape: bf16[1280,32], index: 1, kind: input, shape index: {}]
  %s2 = inlined_call_operand.vmem [shape: f32[1,32], index: 2, kind: input, shape index: {}]
  %s3 = inlined_call_operand.vmem [shape: f32[192,32], index: 3, kind: output, shape index: {}]
  %s4 = sld [smem:[#allocation0]]
  $region22: #{mrcgnn_forward.3} parent=0
    _
  %s6 = ssub.s32 1, %s4
  %s7 = scalar_select 0, %s6, %s4
  // Predicated region
  $region2: #{mrcgnn_forward.3} parent=0 // pred_check
    _
  $region3: #{mrcgnn_forward.3} parent=0 // pred_check_branch
    %9 = sbr.rel (0) target = $region5
  $region4: #{mrcgnn_forward.3} parent=0 // pred_region
    _
  $region5: #{mrcgnn_forward.3} parent=0 // pred_fallthru
    _
  // Predicated region
  $region6: #{mrcgnn_forward.3} parent=0 // pred_check
    _
  $region7: #{mrcgnn_forward.3} parent=0 // pred_check_branch
    %11 = sbr.rel (0) target = $region9
  $region8: #{mrcgnn_forward.3} parent=0 // pred_region
    _
  $region9: #{mrcgnn_forward.3} parent=0 // pred_fallthru
    _
  // Predicated region
  $region10: #{mrcgnn_forward.3} parent=0 // pred_check
    _
  $region11: #{mrcgnn_forward.3} parent=0 // pred_check_branch
    %13 = sbr.rel (0) target = $region13
  $region12: #{mrcgnn_forward.3} parent=0 // pred_region
    _
  $region13: #{mrcgnn_forward.3} parent=0 // pred_fallthru
    _
  %v14 = vld [vmem:[%s0] sm:$0xff]
  %v15 = vld [vmem:[%s0 + $0x8] sm:$0xff]
  %v16 = vld [vmem:[%s0 + $0x10] sm:$0xff]
  %v17 = vld [vmem:[%s0 + $0x18] sm:$0xff]
  %v18 = vld [vmem:[%s0 + $0x20] sm:$0xff]
  %v19 = vld [vmem:[%s0 + $0x28] sm:$0xff]
  %v20 = vld [vmem:[%s0 + $0x30] sm:$0xff]
  %v21 = vld [vmem:[%s0 + $0x38] sm:$0xff]
  %v22 = vld [vmem:[%s0 + $0x40] sm:$0xff]
  %v23 = vld [vmem:[%s0 + $0x48] sm:$0xff]
  %v24 = vld [vmem:[%s0 + $0x50] sm:$0xff]
  %v25 = vld [vmem:[%s0 + $0x58] sm:$0xff]
  %v26 = vld [vmem:[%s0 + $0x60] sm:$0xff]
  %v27 = vld [vmem:[%s0 + $0x68] sm:$0xff]
  %v28 = vld [vmem:[%s0 + $0x70] sm:$0xff]
  %v29 = vld [vmem:[%s0 + $0x78] sm:$0xff]
  %v30 = vld [vmem:[%s0 + $0x80] sm:$0xff]
  %v31 = vld [vmem:[%s0 + $0x88] sm:$0xff]
  %v32 = vld [vmem:[%s0 + $0x90] sm:$0xff]
  %v33 = vld [vmem:[%s0 + $0x98] sm:$0xff]
  %v34 = vld [vmem:[%s0 + $0xa0] sm:$0xff]
  %v35 = vld [vmem:[%s0 + $0xa8] sm:$0xff]
  %v36 = vld [vmem:[%s0 + $0xb0] sm:$0xff]
  %v37 = vld [vmem:[%s0 + $0xb8] sm:$0xff]
  %v38 = vld [vmem:[%s0 + $0xc0] sm:$0xff]
  %v39 = vld [vmem:[%s0 + $0xc8] sm:$0xff]
  %v40 = vld [vmem:[%s0 + $0xd0] sm:$0xff]
  %v41 = vld [vmem:[%s0 + $0xd8] sm:$0xff]
  %v42 = vld [vmem:[%s0 + $0xe0] sm:$0xff]
  %v43 = vld [vmem:[%s0 + $0xe8] sm:$0xff]
  %v44 = vld [vmem:[%s0 + $0xf0] sm:$0xff]
  %v45 = vld [vmem:[%s0 + $0xf8] sm:$0xff]
  %v46 = vld [vmem:[%s0 + $0x100] sm:$0xff]
  %v47 = vld [vmem:[%s0 + $0x108] sm:$0xff]
  %v48 = vld [vmem:[%s0 + $0x110] sm:$0xff]
  %v49 = vld [vmem:[%s0 + $0x118] sm:$0xff]
  %v50 = vld [vmem:[%s0 + $0x120] sm:$0xff]
  %v51 = vld [vmem:[%s0 + $0x128] sm:$0xff]
  %v52 = vld [vmem:[%s0 + $0x130] sm:$0xff]
  %v53 = vld [vmem:[%s0 + $0x138] sm:$0xff]
  %v54 = vld [vmem:[%s0 + $0x140] sm:$0xff]
  %v55 = vld [vmem:[%s0 + $0x148] sm:$0xff]
  %v56 = vld [vmem:[%s0 + $0x150] sm:$0xff]
  %v57 = vld [vmem:[%s0 + $0x158] sm:$0xff]
  %v58 = vld [vmem:[%s0 + $0x160] sm:$0xff]
  %v59 = vld [vmem:[%s0 + $0x168] sm:$0xff]
  %v60 = vld [vmem:[%s0 + $0x170] sm:$0xff]
  %v61 = vld [vmem:[%s0 + $0x178] sm:$0xff]
  %v62 = vld [vmem:[%s0 + $0x180] sm:$0xff]
  %v63 = vld [vmem:[%s0 + $0x188] sm:$0xff]
  %v64 = vld [vmem:[%s0 + $0x190] sm:$0xff]
  %v65 = vld [vmem:[%s0 + $0x198] sm:$0xff]
  %v66 = vld [vmem:[%s0 + $0x1a0] sm:$0xff]
  %v67 = vld [vmem:[%s0 + $0x1a8] sm:$0xff]
  %v68 = vld [vmem:[%s0 + $0x1b0] sm:$0xff]
  %v69 = vld [vmem:[%s0 + $0x1b8] sm:$0xff]
  %v70 = vld [vmem:[%s0 + $0x1c0] sm:$0xff]
  %v71 = vld [vmem:[%s0 + $0x1c8] sm:$0xff]
  %v72 = vld [vmem:[%s0 + $0x1d0] sm:$0xff]
  %v73 = vld [vmem:[%s0 + $0x1d8] sm:$0xff]
  %v74 = vld [vmem:[%s0 + $0x1e0] sm:$0xff]
  %v75 = vld [vmem:[%s0 + $0x1e8] sm:$0xff]
  %v76 = vld [vmem:[%s0 + $0x1f0] sm:$0xff]
  %v77 = vld [vmem:[%s0 + $0x1f8] sm:$0xff]
  %v78 = vld [vmem:[%s0 + $0x200] sm:$0xff]
  %v79 = vld [vmem:[%s0 + $0x208] sm:$0xff]
  %v80 = vld [vmem:[%s0 + $0x210] sm:$0xff]
  %v81 = vld [vmem:[%s0 + $0x218] sm:$0xff]
  %v82 = vld [vmem:[%s0 + $0x220] sm:$0xff]
  %v83 = vld [vmem:[%s0 + $0x228] sm:$0xff]
  %v84 = vld [vmem:[%s0 + $0x230] sm:$0xff]
  %v85 = vld [vmem:[%s0 + $0x238] sm:$0xff]
  %v86 = vld [vmem:[%s0 + $0x240] sm:$0xff]
  %v87 = vld [vmem:[%s0 + $0x248] sm:$0xff]
  %v88 = vld [vmem:[%s0 + $0x250] sm:$0xff]
  %v89 = vld [vmem:[%s0 + $0x258] sm:$0xff]
  %v90 = vld [vmem:[%s0 + $0x260] sm:$0xff]
  %v91 = vld [vmem:[%s0 + $0x268] sm:$0xff]
  %v92 = vld [vmem:[%s0 + $0x270] sm:$0xff]
  %v93 = vld [vmem:[%s0 + $0x278] sm:$0xff]
  %v94 = vld [vmem:[%s0 + $0x280] sm:$0xff]
  %v95 = vld [vmem:[%s0 + $0x288] sm:$0xff]
  %v96 = vld [vmem:[%s0 + $0x290] sm:$0xff]
  %v97 = vld [vmem:[%s0 + $0x298] sm:$0xff]
  %v98 = vld [vmem:[%s0 + $0x2a0] sm:$0xff]
  %v99 = vld [vmem:[%s0 + $0x2a8] sm:$0xff]
  %v100 = vld [vmem:[%s0 + $0x2b0] sm:$0xff]
  %v101 = vld [vmem:[%s0 + $0x2b8] sm:$0xff]
  %v102 = vld [vmem:[%s0 + $0x2c0] sm:$0xff]
  %v103 = vld [vmem:[%s0 + $0x2c8] sm:$0xff]
  %v104 = vld [vmem:[%s0 + $0x2d0] sm:$0xff]
  %v105 = vld [vmem:[%s0 + $0x2d8] sm:$0xff]
  %v106 = vld [vmem:[%s0 + $0x2e0] sm:$0xff]
  %v107 = vld [vmem:[%s0 + $0x2e8] sm:$0xff]
  %v108 = vld [vmem:[%s0 + $0x2f0] sm:$0xff]
  %v109 = vld [vmem:[%s0 + $0x2f8] sm:$0xff]
  %v110 = vld [vmem:[%s0 + $0x300] sm:$0xff]
  %v111 = vld [vmem:[%s0 + $0x308] sm:$0xff]
  %v112 = vld [vmem:[%s0 + $0x310] sm:$0xff]
  %v113 = vld [vmem:[%s0 + $0x318] sm:$0xff]
  %v114 = vld [vmem:[%s0 + $0x320] sm:$0xff]
  %v115 = vld [vmem:[%s0 + $0x328] sm:$0xff]
  %v116 = vld [vmem:[%s0 + $0x330] sm:$0xff]
  %v117 = vld [vmem:[%s0 + $0x338] sm:$0xff]
  %v118 = vld [vmem:[%s0 + $0x340] sm:$0xff]
  %v119 = vld [vmem:[%s0 + $0x348] sm:$0xff]
  %v120 = vld [vmem:[%s0 + $0x350] sm:$0xff]
  %v121 = vld [vmem:[%s0 + $0x358] sm:$0xff]
  %v122 = vld [vmem:[%s0 + $0x360] sm:$0xff]
  %v123 = vld [vmem:[%s0 + $0x368] sm:$0xff]
  %v124 = vld [vmem:[%s0 + $0x370] sm:$0xff]
  %v125 = vld [vmem:[%s0 + $0x378] sm:$0xff]
  %v126 = vld [vmem:[%s0 + $0x380] sm:$0xff]
  %v127 = vld [vmem:[%s0 + $0x388] sm:$0xff]
  %v128 = vld [vmem:[%s0 + $0x390] sm:$0xff]
  %v129 = vld [vmem:[%s0 + $0x398] sm:$0xff]
  %v130 = vld [vmem:[%s0 + $0x3a0] sm:$0xff]
  %v131 = vld [vmem:[%s0 + $0x3a8] sm:$0xff]
  %v132 = vld [vmem:[%s0 + $0x3b0] sm:$0xff]
  %v133 = vld [vmem:[%s0 + $0x3b8] sm:$0xff]
  %v134 = vld [vmem:[%s1] sm:$0xf]
  %v135 = vld [vmem:[%s1 + $0x4] sm:$0xf]
  %v136 = vld [vmem:[%s1 + $0x8] sm:$0xf]
  %v137 = vld [vmem:[%s1 + $0xc] sm:$0xf]
  %v138 = vld [vmem:[%s1 + $0x10] sm:$0xf]
  %v139 = vld [vmem:[%s1 + $0x14] sm:$0xf]
  %v140 = vld [vmem:[%s1 + $0x18] sm:$0xf]
  %v141 = vld [vmem:[%s1 + $0x1c] sm:$0xf]
  %v142 = vld [vmem:[%s1 + $0x20] sm:$0xf]
  %v143 = vld [vmem:[%s1 + $0x24] sm:$0xf]
  %v144 = vld [vmem:[%s1 + $0x28] sm:$0xf]
  %v145 = vld [vmem:[%s1 + $0x2c] sm:$0xf]
  %v146 = vld [vmem:[%s1 + $0x30] sm:$0xf]
  %v147 = vld [vmem:[%s1 + $0x34] sm:$0xf]
  %v148 = vld [vmem:[%s1 + $0x38] sm:$0xf]
  %v149 = vld [vmem:[%s1 + $0x3c] sm:$0xf]
  %v150 = vld [vmem:[%s1 + $0x40] sm:$0xf]
  %v151 = vld [vmem:[%s1 + $0x44] sm:$0xf]
  %v152 = vld [vmem:[%s1 + $0x48] sm:$0xf]
  %v153 = vld [vmem:[%s1 + $0x4c] sm:$0xf]
  %v154 = vld [vmem:[%s1 + $0x50] sm:$0xf]
  %v155 = vld [vmem:[%s1 + $0x54] sm:$0xf]
  %v156 = vld [vmem:[%s1 + $0x58] sm:$0xf]
  %v157 = vld [vmem:[%s1 + $0x5c] sm:$0xf]
  %v158 = vld [vmem:[%s1 + $0x60] sm:$0xf]
  %v159 = vld [vmem:[%s1 + $0x64] sm:$0xf]
  %v160 = vld [vmem:[%s1 + $0x68] sm:$0xf]
  %v161 = vld [vmem:[%s1 + $0x6c] sm:$0xf]
  %v162 = vld [vmem:[%s1 + $0x70] sm:$0xf]
  %v163 = vld [vmem:[%s1 + $0x74] sm:$0xf]
  %v164 = vld [vmem:[%s1 + $0x78] sm:$0xf]
  %v165 = vld [vmem:[%s1 + $0x7c] sm:$0xf]
  %v166 = vld [vmem:[%s1 + $0x80] sm:$0xf]
  %v167 = vld [vmem:[%s1 + $0x84] sm:$0xf]
  %v168 = vld [vmem:[%s1 + $0x88] sm:$0xf]
  %v169 = vld [vmem:[%s1 + $0x8c] sm:$0xf]
  %v170 = vld [vmem:[%s1 + $0x90] sm:$0xf]
  %v171 = vld [vmem:[%s1 + $0x94] sm:$0xf]
  %v172 = vld [vmem:[%s1 + $0x98] sm:$0xf]
  %v173 = vld [vmem:[%s1 + $0x9c] sm:$0xf]
  %v174 = vld [vmem:[%s1 + $0xa0] sm:$0xf]
  %v175 = vld [vmem:[%s1 + $0xa4] sm:$0xf]
  %v176 = vld [vmem:[%s1 + $0xa8] sm:$0xf]
  %v177 = vld [vmem:[%s1 + $0xac] sm:$0xf]
  %v178 = vld [vmem:[%s1 + $0xb0] sm:$0xf]
  %v179 = vld [vmem:[%s1 + $0xb4] sm:$0xf]
  %v180 = vld [vmem:[%s1 + $0xb8] sm:$0xf]
  %v181 = vld [vmem:[%s1 + $0xbc] sm:$0xf]
  %v182 = vld [vmem:[%s1 + $0xc0] sm:$0xf]
  %v183 = vld [vmem:[%s1 + $0xc4] sm:$0xf]
  %v184 = vld [vmem:[%s1 + $0xc8] sm:$0xf]
  %v185 = vld [vmem:[%s1 + $0xcc] sm:$0xf]
  %v186 = vld [vmem:[%s1 + $0xd0] sm:$0xf]
  %v187 = vld [vmem:[%s1 + $0xd4] sm:$0xf]
  %v188 = vld [vmem:[%s1 + $0xd8] sm:$0xf]
  %v189 = vld [vmem:[%s1 + $0xdc] sm:$0xf]
  %v190 = vld [vmem:[%s1 + $0xe0] sm:$0xf]
  %v191 = vld [vmem:[%s1 + $0xe4] sm:$0xf]
  %v192 = vld [vmem:[%s1 + $0xe8] sm:$0xf]
  %v193 = vld [vmem:[%s1 + $0xec] sm:$0xf]
  %v194 = vld [vmem:[%s1 + $0xf0] sm:$0xf]
  %v195 = vld [vmem:[%s1 + $0xf4] sm:$0xf]
  %v196 = vld [vmem:[%s1 + $0xf8] sm:$0xf]
  %v197 = vld [vmem:[%s1 + $0xfc] sm:$0xf]
  %v198 = vld [vmem:[%s1 + $0x100] sm:$0xf]
  %v199 = vld [vmem:[%s1 + $0x104] sm:$0xf]
  %v200 = vld [vmem:[%s1 + $0x108] sm:$0xf]
  %v201 = vld [vmem:[%s1 + $0x10c] sm:$0xf]
  %v202 = vld [vmem:[%s1 + $0x110] sm:$0xf]
  %v203 = vld [vmem:[%s1 + $0x114] sm:$0xf]
  %v204 = vld [vmem:[%s1 + $0x118] sm:$0xf]
  %v205 = vld [vmem:[%s1 + $0x11c] sm:$0xf]
  %v206 = vld [vmem:[%s1 + $0x120] sm:$0xf]
  %v207 = vld [vmem:[%s1 + $0x124] sm:$0xf]
  %v208 = vld [vmem:[%s1 + $0x128] sm:$0xf]
  %v209 = vld [vmem:[%s1 + $0x12c] sm:$0xf]
  %v210 = vld [vmem:[%s1 + $0x130] sm:$0xf]
  %v211 = vld [vmem:[%s1 + $0x134] sm:$0xf]
  %v212 = vld [vmem:[%s1 + $0x138] sm:$0xf]
  %v213 = vld [vmem:[%s1 + $0x13c] sm:$0xf]
  %v214 = vld [vmem:[%s1 + $0x140] sm:$0xf]
  %v215 = vld [vmem:[%s1 + $0x144] sm:$0xf]
  %v216 = vld [vmem:[%s1 + $0x148] sm:$0xf]
  %v217 = vld [vmem:[%s1 + $0x14c] sm:$0xf]
  %v218 = vld [vmem:[%s1 + $0x150] sm:$0xf]
  %v219 = vld [vmem:[%s1 + $0x154] sm:$0xf]
  %v220 = vld [vmem:[%s1 + $0x158] sm:$0xf]
  %v221 = vld [vmem:[%s1 + $0x15c] sm:$0xf]
  %v222 = vld [vmem:[%s1 + $0x160] sm:$0xf]
  %v223 = vld [vmem:[%s1 + $0x164] sm:$0xf]
  %v224 = vld [vmem:[%s1 + $0x168] sm:$0xf]
  %v225 = vld [vmem:[%s1 + $0x16c] sm:$0xf]
  %v226 = vld [vmem:[%s1 + $0x170] sm:$0xf]
  %v227 = vld [vmem:[%s1 + $0x174] sm:$0xf]
  %v228 = vld [vmem:[%s1 + $0x178] sm:$0xf]
  %v229 = vld [vmem:[%s1 + $0x17c] sm:$0xf]
  %v230 = vld [vmem:[%s1 + $0x180] sm:$0xf]
  %v231 = vld [vmem:[%s1 + $0x184] sm:$0xf]
  %v232 = vld [vmem:[%s1 + $0x188] sm:$0xf]
  %v233 = vld [vmem:[%s1 + $0x18c] sm:$0xf]
  %v234 = vld [vmem:[%s1 + $0x190] sm:$0xf]
  %v235 = vld [vmem:[%s1 + $0x194] sm:$0xf]
  %v236 = vld [vmem:[%s1 + $0x198] sm:$0xf]
  %v237 = vld [vmem:[%s1 + $0x19c] sm:$0xf]
  %v238 = vld [vmem:[%s1 + $0x1a0] sm:$0xf]
  %v239 = vld [vmem:[%s1 + $0x1a4] sm:$0xf]
  %v240 = vld [vmem:[%s1 + $0x1a8] sm:$0xf]
  %v241 = vld [vmem:[%s1 + $0x1ac] sm:$0xf]
  %v242 = vld [vmem:[%s1 + $0x1b0] sm:$0xf]
  %v243 = vld [vmem:[%s1 + $0x1b4] sm:$0xf]
  %v244 = vld [vmem:[%s1 + $0x1b8] sm:$0xf]
  %v245 = vld [vmem:[%s1 + $0x1bc] sm:$0xf]
  %v246 = vld [vmem:[%s1 + $0x1c0] sm:$0xf]
  %v247 = vld [vmem:[%s1 + $0x1c4] sm:$0xf]
  %v248 = vld [vmem:[%s1 + $0x1c8] sm:$0xf]
  %v249 = vld [vmem:[%s1 + $0x1cc] sm:$0xf]
  %v250 = vld [vmem:[%s1 + $0x1d0] sm:$0xf]
  %v251 = vld [vmem:[%s1 + $0x1d4] sm:$0xf]
  %v252 = vld [vmem:[%s1 + $0x1d8] sm:$0xf]
  %v253 = vld [vmem:[%s1 + $0x1dc] sm:$0xf]
  %v254 = vld [vmem:[%s1 + $0x1e0] sm:$0xf]
  %v255 = vld [vmem:[%s1 + $0x1e4] sm:$0xf]
  %v256 = vld [vmem:[%s1 + $0x1e8] sm:$0xf]
  %v257 = vld [vmem:[%s1 + $0x1ec] sm:$0xf]
  %v258 = vld [vmem:[%s1 + $0x1f0] sm:$0xf]
  %v259 = vld [vmem:[%s1 + $0x1f4] sm:$0xf]
  %v260 = vld [vmem:[%s1 + $0x1f8] sm:$0xf]
  %v261 = vld [vmem:[%s1 + $0x1fc] sm:$0xf]
  %v262 = vld [vmem:[%s1 + $0x200] sm:$0xf]
  %v263 = vld [vmem:[%s1 + $0x204] sm:$0xf]
  %v264 = vld [vmem:[%s1 + $0x208] sm:$0xf]
  %v265 = vld [vmem:[%s1 + $0x20c] sm:$0xf]
  %v266 = vld [vmem:[%s1 + $0x210] sm:$0xf]
  %v267 = vld [vmem:[%s1 + $0x214] sm:$0xf]
  %v268 = vld [vmem:[%s1 + $0x218] sm:$0xf]
  %v269 = vld [vmem:[%s1 + $0x21c] sm:$0xf]
  %v270 = vld [vmem:[%s1 + $0x220] sm:$0xf]
  %v271 = vld [vmem:[%s1 + $0x224] sm:$0xf]
  %v272 = vld [vmem:[%s1 + $0x228] sm:$0xf]
  %v273 = vld [vmem:[%s1 + $0x22c] sm:$0xf]
  %v274 = vld [vmem:[%s1 + $0x230] sm:$0xf]
  %v275 = vld [vmem:[%s1 + $0x234] sm:$0xf]
  %v276 = vld [vmem:[%s1 + $0x238] sm:$0xf]
  %v277 = vld [vmem:[%s1 + $0x23c] sm:$0xf]
  %v278 = vld [vmem:[%s1 + $0x240] sm:$0xf]
  %v279 = vld [vmem:[%s1 + $0x244] sm:$0xf]
  %v280 = vld [vmem:[%s1 + $0x248] sm:$0xf]
  %v281 = vld [vmem:[%s1 + $0x24c] sm:$0xf]
  %v282 = vld [vmem:[%s1 + $0x250] sm:$0xf]
  %v283 = vld [vmem:[%s1 + $0x254] sm:$0xf]
  %v284 = vld [vmem:[%s1 + $0x258] sm:$0xf]
  %v285 = vld [vmem:[%s1 + $0x25c] sm:$0xf]
  %v286 = vld [vmem:[%s1 + $0x260] sm:$0xf]
  %v287 = vld [vmem:[%s1 + $0x264] sm:$0xf]
  %v288 = vld [vmem:[%s1 + $0x268] sm:$0xf]
  %v289 = vld [vmem:[%s1 + $0x26c] sm:$0xf]
  %v290 = vld [vmem:[%s1 + $0x270] sm:$0xf]
  %v291 = vld [vmem:[%s1 + $0x274] sm:$0xf]
  %v292 = vld [vmem:[%s1 + $0x278] sm:$0xf]
  %v293 = vld [vmem:[%s1 + $0x27c] sm:$0xf]
  %v294 = vld [vmem:[%s2] sm:$0x1]
  %v296 = vperm.slane %v294, 0
  %v418 = vunpack.c.l.b16 %v14
  %v419 = vunpack.c.h.b16 %v14
  %v420 = vunpack.c.l.b16 %v15
  %v421 = vunpack.c.h.b16 %v15
  %v422 = vunpack.c.l.b16 %v16
  %v423 = vunpack.c.h.b16 %v16
  %v424 = vunpack.c.l.b16 %v17
  %v425 = vunpack.c.h.b16 %v17
  %v426 = vunpack.c.l.b16 %v18
  %v427 = vunpack.c.h.b16 %v18
  %v428 = vunpack.c.l.b16 %v19
  %v429 = vunpack.c.h.b16 %v19
  %v430 = vunpack.c.l.b16 %v20
  %v431 = vunpack.c.h.b16 %v20
  %v432 = vunpack.c.l.b16 %v21
  %v433 = vunpack.c.h.b16 %v21
  %v434 = vunpack.c.l.b16 %v22
  %v435 = vunpack.c.h.b16 %v22
  %v436 = vunpack.c.l.b16 %v23
  %v437 = vunpack.c.h.b16 %v23
  %v438 = vunpack.c.l.b16 %v24
  %v439 = vunpack.c.h.b16 %v24
  %v440 = vunpack.c.l.b16 %v25
  %v441 = vunpack.c.h.b16 %v25
  %v442 = vunpack.c.l.b16 %v26
  %v443 = vunpack.c.h.b16 %v26
  %v444 = vunpack.c.l.b16 %v27
  %v445 = vunpack.c.h.b16 %v27
  %v446 = vunpack.c.l.b16 %v28
  %v447 = vunpack.c.h.b16 %v28
  %v448 = vunpack.c.l.b16 %v29
  %v449 = vunpack.c.h.b16 %v29
  %v450 = vunpack.c.l.b16 %v30
  %v451 = vunpack.c.h.b16 %v30
  %v452 = vunpack.c.l.b16 %v31
  %v453 = vunpack.c.h.b16 %v31
  %v454 = vunpack.c.l.b16 %v32
  %v455 = vunpack.c.h.b16 %v32
  %v456 = vunpack.c.l.b16 %v33
  %v457 = vunpack.c.h.b16 %v33
  %v458 = vunpack.c.l.b16 %v34
  %v459 = vunpack.c.h.b16 %v34
  %v460 = vunpack.c.l.b16 %v35
  %v461 = vunpack.c.h.b16 %v35
  %v462 = vunpack.c.l.b16 %v36
  %v463 = vunpack.c.h.b16 %v36
  %v464 = vunpack.c.l.b16 %v37
  %v465 = vunpack.c.h.b16 %v37
  %v466 = vunpack.c.l.b16 %v38
  %v467 = vunpack.c.h.b16 %v38
  %v468 = vunpack.c.l.b16 %v39
  %v469 = vunpack.c.h.b16 %v39
  %v470 = vunpack.c.l.b16 %v40
  %v471 = vunpack.c.h.b16 %v40
  %v472 = vunpack.c.l.b16 %v41
  %v473 = vunpack.c.h.b16 %v41
  %v474 = vunpack.c.l.b16 %v42
  %v475 = vunpack.c.h.b16 %v42
  %v476 = vunpack.c.l.b16 %v43
  %v477 = vunpack.c.h.b16 %v43
  %v478 = vunpack.c.l.b16 %v44
  %v479 = vunpack.c.h.b16 %v44
  %v480 = vunpack.c.l.b16 %v45
  %v481 = vunpack.c.h.b16 %v45
  %v482 = vunpack.c.l.b16 %v46
  %v483 = vunpack.c.h.b16 %v46
  %v484 = vunpack.c.l.b16 %v47
  %v485 = vunpack.c.h.b16 %v47
  %v486 = vunpack.c.l.b16 %v48
  %v487 = vunpack.c.h.b16 %v48
  %v488 = vunpack.c.l.b16 %v49
  %v489 = vunpack.c.h.b16 %v49
  %v490 = vunpack.c.l.b16 %v50
  %v491 = vunpack.c.h.b16 %v50
  %v492 = vunpack.c.l.b16 %v51
  %v493 = vunpack.c.h.b16 %v51
  %v494 = vunpack.c.l.b16 %v52
  %v495 = vunpack.c.h.b16 %v52
  %v496 = vunpack.c.l.b16 %v53
  %v497 = vunpack.c.h.b16 %v53
  %v498 = vunpack.c.l.b16 %v54
  %v499 = vunpack.c.h.b16 %v54
  %v500 = vunpack.c.l.b16 %v55
  %v501 = vunpack.c.h.b16 %v55
  %v502 = vunpack.c.l.b16 %v56
  %v503 = vunpack.c.h.b16 %v56
  %v504 = vunpack.c.l.b16 %v57
  %v505 = vunpack.c.h.b16 %v57
  %v506 = vunpack.c.l.b16 %v58
  %v507 = vunpack.c.h.b16 %v58
  %v508 = vunpack.c.l.b16 %v59
  %v509 = vunpack.c.h.b16 %v59
  %v510 = vunpack.c.l.b16 %v60
  %v511 = vunpack.c.h.b16 %v60
  %v512 = vunpack.c.l.b16 %v61
  %v513 = vunpack.c.h.b16 %v61
  %v514 = vunpack.c.l.b16 %v62
  %v515 = vunpack.c.h.b16 %v62
  %v516 = vunpack.c.l.b16 %v63
  %v517 = vunpack.c.h.b16 %v63
  %v518 = vunpack.c.l.b16 %v64
  %v519 = vunpack.c.h.b16 %v64
  %v520 = vunpack.c.l.b16 %v65
  %v521 = vunpack.c.h.b16 %v65
  %v522 = vunpack.c.l.b16 %v66
  %v523 = vunpack.c.h.b16 %v66
  %v524 = vunpack.c.l.b16 %v67
  %v525 = vunpack.c.h.b16 %v67
  %v526 = vunpack.c.l.b16 %v68
  %v527 = vunpack.c.h.b16 %v68
  %v528 = vunpack.c.l.b16 %v69
  %v529 = vunpack.c.h.b16 %v69
  %v530 = vunpack.c.l.b16 %v70
  %v531 = vunpack.c.h.b16 %v70
  %v532 = vunpack.c.l.b16 %v71
  %v533 = vunpack.c.h.b16 %v71
  %v534 = vunpack.c.l.b16 %v72
  %v535 = vunpack.c.h.b16 %v72
  %v536 = vunpack.c.l.b16 %v73
  %v537 = vunpack.c.h.b16 %v73
  %v538 = vunpack.c.l.b16 %v74
  %v539 = vunpack.c.h.b16 %v74
  %v540 = vunpack.c.l.b16 %v75
  %v541 = vunpack.c.h.b16 %v75
  %v542 = vunpack.c.l.b16 %v76
  %v543 = vunpack.c.h.b16 %v76
  %v544 = vunpack.c.l.b16 %v77
  %v545 = vunpack.c.h.b16 %v77
  %v546 = vunpack.c.l.b16 %v78
  %v547 = vunpack.c.h.b16 %v78
  %v548 = vunpack.c.l.b16 %v79
  %v549 = vunpack.c.h.b16 %v79
  %v550 = vunpack.c.l.b16 %v80
  %v551 = vunpack.c.h.b16 %v80
  %v552 = vunpack.c.l.b16 %v81
  %v553 = vunpack.c.h.b16 %v81
  %v554 = vunpack.c.l.b16 %v82
  %v555 = vunpack.c.h.b16 %v82
  %v556 = vunpack.c.l.b16 %v83
  %v557 = vunpack.c.h.b16 %v83
  %v558 = vunpack.c.l.b16 %v84
  %v559 = vunpack.c.h.b16 %v84
  %v560 = vunpack.c.l.b16 %v85
  %v561 = vunpack.c.h.b16 %v85
  %v562 = vunpack.c.l.b16 %v86
  %v563 = vunpack.c.h.b16 %v86
  %v564 = vunpack.c.l.b16 %v87
  %v565 = vunpack.c.h.b16 %v87
  %v566 = vunpack.c.l.b16 %v88
  %v567 = vunpack.c.h.b16 %v88
  %v568 = vunpack.c.l.b16 %v89
  %v569 = vunpack.c.h.b16 %v89
  %v570 = vunpack.c.l.b16 %v90
  %v571 = vunpack.c.h.b16 %v90
  %v572 = vunpack.c.l.b16 %v91
  %v573 = vunpack.c.h.b16 %v91
  %v574 = vunpack.c.l.b16 %v92
  %v575 = vunpack.c.h.b16 %v92
  %v576 = vunpack.c.l.b16 %v93
  %v577 = vunpack.c.h.b16 %v93
  %v578 = vunpack.c.l.b16 %v94
  %v579 = vunpack.c.h.b16 %v94
  %v580 = vunpack.c.l.b16 %v95
  %v581 = vunpack.c.h.b16 %v95
  %v582 = vunpack.c.l.b16 %v96
  %v583 = vunpack.c.h.b16 %v96
  %v584 = vunpack.c.l.b16 %v97
  %v585 = vunpack.c.h.b16 %v97
  %v586 = vunpack.c.l.b16 %v98
  %v587 = vunpack.c.h.b16 %v98
  %v588 = vunpack.c.l.b16 %v99
  %v589 = vunpack.c.h.b16 %v99
  %v590 = vunpack.c.l.b16 %v100
  %v591 = vunpack.c.h.b16 %v100
  %v592 = vunpack.c.l.b16 %v101
  %v593 = vunpack.c.h.b16 %v101
  %v594 = vunpack.c.l.b16 %v102
  %v595 = vunpack.c.h.b16 %v102
  %v596 = vunpack.c.l.b16 %v103
  %v597 = vunpack.c.h.b16 %v103
  %v598 = vunpack.c.l.b16 %v104
  %v599 = vunpack.c.h.b16 %v104
  %v600 = vunpack.c.l.b16 %v105
  %v601 = vunpack.c.h.b16 %v105
  %v602 = vunpack.c.l.b16 %v106
  %v603 = vunpack.c.h.b16 %v106
  %v604 = vunpack.c.l.b16 %v107
  %v605 = vunpack.c.h.b16 %v107
  %v606 = vunpack.c.l.b16 %v108
  %v607 = vunpack.c.h.b16 %v108
  %v608 = vunpack.c.l.b16 %v109
  %v609 = vunpack.c.h.b16 %v109
  %v610 = vunpack.c.l.b16 %v110
  %v611 = vunpack.c.h.b16 %v110
  %v612 = vunpack.c.l.b16 %v111
  %v613 = vunpack.c.h.b16 %v111
  %v614 = vunpack.c.l.b16 %v112
  %v615 = vunpack.c.h.b16 %v112
  %v616 = vunpack.c.l.b16 %v113
  %v617 = vunpack.c.h.b16 %v113
  %v618 = vunpack.c.l.b16 %v114
  %v619 = vunpack.c.h.b16 %v114
  %v620 = vunpack.c.l.b16 %v115
  %v621 = vunpack.c.h.b16 %v115
  %v622 = vunpack.c.l.b16 %v116
  %v623 = vunpack.c.h.b16 %v116
  %v624 = vunpack.c.l.b16 %v117
  %v625 = vunpack.c.h.b16 %v117
  %v626 = vunpack.c.l.b16 %v118
  %v627 = vunpack.c.h.b16 %v118
  %v628 = vunpack.c.l.b16 %v119
  %v629 = vunpack.c.h.b16 %v119
  %v630 = vunpack.c.l.b16 %v120
  %v631 = vunpack.c.h.b16 %v120
  %v632 = vunpack.c.l.b16 %v121
  %v633 = vunpack.c.h.b16 %v121
  %v634 = vunpack.c.l.b16 %v122
  %v635 = vunpack.c.h.b16 %v122
  %v636 = vunpack.c.l.b16 %v123
  %v637 = vunpack.c.h.b16 %v123
  %v638 = vunpack.c.l.b16 %v124
  %v639 = vunpack.c.h.b16 %v124
  %v640 = vunpack.c.l.b16 %v125
  %v641 = vunpack.c.h.b16 %v125
  %v642 = vunpack.c.l.b16 %v126
  %v643 = vunpack.c.h.b16 %v126
  %v644 = vunpack.c.l.b16 %v127
  %v645 = vunpack.c.h.b16 %v127
  %v646 = vunpack.c.l.b16 %v128
  %v647 = vunpack.c.h.b16 %v128
  %v648 = vunpack.c.l.b16 %v129
  %v649 = vunpack.c.h.b16 %v129
  %v650 = vunpack.c.l.b16 %v130
  %v651 = vunpack.c.h.b16 %v130
  %v652 = vunpack.c.l.b16 %v131
  %v653 = vunpack.c.h.b16 %v131
  %v654 = vunpack.c.l.b16 %v132
  %v655 = vunpack.c.h.b16 %v132
  %v656 = vunpack.c.l.b16 %v133
  %v657 = vunpack.c.h.b16 %v133
  %v658 = vpack.c.b16 %v428, %v418
  %v659 = vpack.c.b16 %v429, %v419
  %v660 = vpack.c.b16 %v430, %v420
  %v661 = vpack.c.b16 %v431, %v421
  %v662 = vpack.c.b16 %v432, %v422
  %v663 = vpack.c.b16 %v433, %v423
  %v664 = vpack.c.b16 %v434, %v424
  %v665 = vpack.c.b16 %v435, %v425
  %v666 = vpack.c.b16 %v436, %v426
  %v667 = vpack.c.b16 %v437, %v427
  %v668 = vpack.c.b16 %v448, %v438
  %v669 = vpack.c.b16 %v449, %v439
  %v670 = vpack.c.b16 %v450, %v440
  %v671 = vpack.c.b16 %v451, %v441
  %v672 = vpack.c.b16 %v452, %v442
  %v673 = vpack.c.b16 %v453, %v443
  %v674 = vpack.c.b16 %v454, %v444
  %v675 = vpack.c.b16 %v455, %v445
  %v676 = vpack.c.b16 %v456, %v446
  %v677 = vpack.c.b16 %v457, %v447
  %v678 = vpack.c.b16 %v468, %v458
  %v679 = vpack.c.b16 %v469, %v459
  %v680 = vpack.c.b16 %v470, %v460
  %v681 = vpack.c.b16 %v471, %v461
  %v682 = vpack.c.b16 %v472, %v462
  %v683 = vpack.c.b16 %v473, %v463
  %v684 = vpack.c.b16 %v474, %v464
  %v685 = vpack.c.b16 %v475, %v465
  %v686 = vpack.c.b16 %v476, %v466
  %v687 = vpack.c.b16 %v477, %v467
  %v688 = vpack.c.b16 %v488, %v478
  %v689 = vpack.c.b16 %v489, %v479
  %v690 = vpack.c.b16 %v490, %v480
  %v691 = vpack.c.b16 %v491, %v481
  %v692 = vpack.c.b16 %v492, %v482
  %v693 = vpack.c.b16 %v493, %v483
  %v694 = vpack.c.b16 %v494, %v484
  %v695 = vpack.c.b16 %v495, %v485
  %v696 = vpack.c.b16 %v496, %v486
  %v697 = vpack.c.b16 %v497, %v487
  %v698 = vpack.c.b16 %v508, %v498
  %v699 = vpack.c.b16 %v509, %v499
  %v700 = vpack.c.b16 %v510, %v500
  %v701 = vpack.c.b16 %v511, %v501
  %v702 = vpack.c.b16 %v512, %v502
  %v703 = vpack.c.b16 %v513, %v503
  %v704 = vpack.c.b16 %v514, %v504
  %v705 = vpack.c.b16 %v515, %v505
  %v706 = vpack.c.b16 %v516, %v506
  %v707 = vpack.c.b16 %v517, %v507
  %v708 = vpack.c.b16 %v528, %v518
  %v709 = vpack.c.b16 %v529, %v519
  %v710 = vpack.c.b16 %v530, %v520
  %v711 = vpack.c.b16 %v531, %v521
  %v712 = vpack.c.b16 %v532, %v522
  %v713 = vpack.c.b16 %v533, %v523
  %v714 = vpack.c.b16 %v534, %v524
  %v715 = vpack.c.b16 %v535, %v525
  %v716 = vpack.c.b16 %v536, %v526
  %v717 = vpack.c.b16 %v537, %v527
  %v718 = vpack.c.b16 %v548, %v538
  %v719 = vpack.c.b16 %v549, %v539
  %v720 = vpack.c.b16 %v550, %v540
  %v721 = vpack.c.b16 %v551, %v541
  %v722 = vpack.c.b16 %v552, %v542
  %v723 = vpack.c.b16 %v553, %v543
  %v724 = vpack.c.b16 %v554, %v544
  %v725 = vpack.c.b16 %v555, %v545
  %v726 = vpack.c.b16 %v556, %v546
  %v727 = vpack.c.b16 %v557, %v547
  %v728 = vpack.c.b16 %v568, %v558
  %v729 = vpack.c.b16 %v569, %v559
  %v730 = vpack.c.b16 %v570, %v560
  %v731 = vpack.c.b16 %v571, %v561
  %v732 = vpack.c.b16 %v572, %v562
  %v733 = vpack.c.b16 %v573, %v563
  %v734 = vpack.c.b16 %v574, %v564
  %v735 = vpack.c.b16 %v575, %v565
  %v736 = vpack.c.b16 %v576, %v566
  %v737 = vpack.c.b16 %v577, %v567
  %v738 = vpack.c.b16 %v588, %v578
  %v739 = vpack.c.b16 %v589, %v579
  %v740 = vpack.c.b16 %v590, %v580
  %v741 = vpack.c.b16 %v591, %v581
  %v742 = vpack.c.b16 %v592, %v582
  %v743 = vpack.c.b16 %v593, %v583
  %v744 = vpack.c.b16 %v594, %v584
  %v745 = vpack.c.b16 %v595, %v585
  %v746 = vpack.c.b16 %v596, %v586
  %v747 = vpack.c.b16 %v597, %v587
  %v748 = vpack.c.b16 %v608, %v598
  %v749 = vpack.c.b16 %v609, %v599
  %v750 = vpack.c.b16 %v610, %v600
  %v751 = vpack.c.b16 %v611, %v601
  %v752 = vpack.c.b16 %v612, %v602
  %v753 = vpack.c.b16 %v613, %v603
  %v754 = vpack.c.b16 %v614, %v604
  %v755 = vpack.c.b16 %v615, %v605
  %v756 = vpack.c.b16 %v616, %v606
  %v757 = vpack.c.b16 %v617, %v607
  %v758 = vpack.c.b16 %v628, %v618
  %v759 = vpack.c.b16 %v629, %v619
  %v760 = vpack.c.b16 %v630, %v620
  %v761 = vpack.c.b16 %v631, %v621
  %v762 = vpack.c.b16 %v632, %v622
  %v763 = vpack.c.b16 %v633, %v623
  %v764 = vpack.c.b16 %v634, %v624
  %v765 = vpack.c.b16 %v635, %v625
  %v766 = vpack.c.b16 %v636, %v626
  %v767 = vpack.c.b16 %v637, %v627
  %v768 = vpack.c.b16 %v648, %v638
  %v769 = vpack.c.b16 %v649, %v639
  %v770 = vpack.c.b16 %v650, %v640
  %v771 = vpack.c.b16 %v651, %v641
  %v772 = vpack.c.b16 %v652, %v642
  %v773 = vpack.c.b16 %v653, %v643
  %v774 = vpack.c.b16 %v654, %v644
  %v775 = vpack.c.b16 %v655, %v645
  %v776 = vpack.c.b16 %v656, %v646
  %v777 = vpack.c.b16 %v657, %v647
  %v1058 = vunpack.c.l.b16 %v134
  %v1059 = vunpack.c.l.b16 %v135
  %v1060 = vunpack.c.l.b16 %v136
  %v1061 = vunpack.c.l.b16 %v137
  %v1062 = vunpack.c.l.b16 %v138
  %v1063 = vunpack.c.l.b16 %v139
  %v1064 = vunpack.c.l.b16 %v140
  %v1065 = vunpack.c.l.b16 %v141
  %v1066 = vunpack.c.l.b16 %v142
  %v1067 = vunpack.c.l.b16 %v143
  %v1068 = vunpack.c.l.b16 %v144
  %v1069 = vunpack.c.l.b16 %v145
  %v1070 = vunpack.c.l.b16 %v146
  %v1071 = vunpack.c.l.b16 %v147
  %v1072 = vunpack.c.l.b16 %v148
  %v1073 = vunpack.c.l.b16 %v149
  %v1074 = vunpack.c.l.b16 %v150
  %v1075 = vunpack.c.l.b16 %v151
  %v1076 = vunpack.c.l.b16 %v152
  %v1077 = vunpack.c.l.b16 %v153
  %v1078 = vunpack.c.l.b16 %v154
  %v1079 = vunpack.c.l.b16 %v155
  %v1080 = vunpack.c.l.b16 %v156
  %v1081 = vunpack.c.l.b16 %v157
  %v1082 = vunpack.c.l.b16 %v158
  %v1083 = vunpack.c.l.b16 %v159
  %v1084 = vunpack.c.l.b16 %v160
  %v1085 = vunpack.c.l.b16 %v161
  %v1086 = vunpack.c.l.b16 %v162
  %v1087 = vunpack.c.l.b16 %v163
  %v1088 = vunpack.c.l.b16 %v164
  %v1089 = vunpack.c.l.b16 %v165
  %v1090 = vunpack.c.l.b16 %v166
  %v1091 = vunpack.c.l.b16 %v167
  %v1092 = vunpack.c.l.b16 %v168
  %v1093 = vunpack.c.l.b16 %v169
  %v1094 = vunpack.c.l.b16 %v170
  %v1095 = vunpack.c.l.b16 %v171
  %v1096 = vunpack.c.l.b16 %v172
  %v1097 = vunpack.c.l.b16 %v173
  %v1098 = vunpack.c.l.b16 %v174
  %v1099 = vunpack.c.l.b16 %v175
  %v1100 = vunpack.c.l.b16 %v176
  %v1101 = vunpack.c.l.b16 %v177
  %v1102 = vunpack.c.l.b16 %v178
  %v1103 = vunpack.c.l.b16 %v179
  %v1104 = vunpack.c.l.b16 %v180
  %v1105 = vunpack.c.l.b16 %v181
  %v1106 = vunpack.c.l.b16 %v182
  %v1107 = vunpack.c.l.b16 %v183
  %v1108 = vunpack.c.l.b16 %v184
  %v1109 = vunpack.c.l.b16 %v185
  %v1110 = vunpack.c.l.b16 %v186
  %v1111 = vunpack.c.l.b16 %v187
  %v1112 = vunpack.c.l.b16 %v188
  %v1113 = vunpack.c.l.b16 %v189
  %v1114 = vunpack.c.l.b16 %v190
  %v1115 = vunpack.c.l.b16 %v191
  %v1116 = vunpack.c.l.b16 %v192
  %v1117 = vunpack.c.l.b16 %v193
  %v1118 = vunpack.c.l.b16 %v194
  %v1119 = vunpack.c.l.b16 %v195
  %v1120 = vunpack.c.l.b16 %v196
  %v1121 = vunpack.c.l.b16 %v197
  %v1122 = vunpack.c.l.b16 %v198
  %v1123 = vunpack.c.l.b16 %v199
  %v1124 = vunpack.c.l.b16 %v200
  %v1125 = vunpack.c.l.b16 %v201
  %v1126 = vunpack.c.l.b16 %v202
  %v1127 = vunpack.c.l.b16 %v203
  %v1128 = vunpack.c.l.b16 %v204
  %v1129 = vunpack.c.l.b16 %v205
  %v1130 = vunpack.c.l.b16 %v206
  %v1131 = vunpack.c.l.b16 %v207
  %v1132 = vunpack.c.l.b16 %v208
  %v1133 = vunpack.c.l.b16 %v209
  %v1134 = vunpack.c.l.b16 %v210
  %v1135 = vunpack.c.l.b16 %v211
  %v1136 = vunpack.c.l.b16 %v212
  %v1137 = vunpack.c.l.b16 %v213
  %v1138 = vunpack.c.l.b16 %v214
  %v1139 = vunpack.c.l.b16 %v215
  %v1140 = vunpack.c.l.b16 %v216
  %v1141 = vunpack.c.l.b16 %v217
  %v1142 = vunpack.c.l.b16 %v218
  %v1143 = vunpack.c.l.b16 %v219
  %v1144 = vunpack.c.l.b16 %v220
  %v1145 = vunpack.c.l.b16 %v221
  %v1146 = vunpack.c.l.b16 %v222
  %v1147 = vunpack.c.l.b16 %v223
  %v1148 = vunpack.c.l.b16 %v224
  %v1149 = vunpack.c.l.b16 %v225
  %v1150 = vunpack.c.l.b16 %v226
  %v1151 = vunpack.c.l.b16 %v227
  %v1152 = vunpack.c.l.b16 %v228
  %v1153 = vunpack.c.l.b16 %v229
  %v1154 = vunpack.c.l.b16 %v230
  %v1155 = vunpack.c.l.b16 %v231
  %v1156 = vunpack.c.l.b16 %v232
  %v1157 = vunpack.c.l.b16 %v233
  %v1158 = vunpack.c.l.b16 %v234
  %v1159 = vunpack.c.l.b16 %v235
  %v1160 = vunpack.c.l.b16 %v236
  %v1161 = vunpack.c.l.b16 %v237
  %v1162 = vunpack.c.l.b16 %v238
  %v1163 = vunpack.c.l.b16 %v239
  %v1164 = vunpack.c.l.b16 %v240
  %v1165 = vunpack.c.l.b16 %v241
  %v1166 = vunpack.c.l.b16 %v242
  %v1167 = vunpack.c.l.b16 %v243
  %v1168 = vunpack.c.l.b16 %v244
  %v1169 = vunpack.c.l.b16 %v245
  %v1170 = vunpack.c.l.b16 %v246
  %v1171 = vunpack.c.l.b16 %v247
  %v1172 = vunpack.c.l.b16 %v248
  %v1173 = vunpack.c.l.b16 %v249
  %v1174 = vunpack.c.l.b16 %v250
  %v1175 = vunpack.c.l.b16 %v251
  %v1176 = vunpack.c.l.b16 %v252
  %v1177 = vunpack.c.l.b16 %v253
  %v1178 = vunpack.c.l.b16 %v254
  %v1179 = vunpack.c.l.b16 %v255
  %v1180 = vunpack.c.l.b16 %v256
  %v1181 = vunpack.c.l.b16 %v257
  %v1182 = vunpack.c.l.b16 %v258
  %v1183 = vunpack.c.l.b16 %v259
  %v1184 = vunpack.c.l.b16 %v260
  %v1185 = vunpack.c.l.b16 %v261
  %v1186 = vunpack.c.l.b16 %v262
  %v1187 = vunpack.c.l.b16 %v263
  %v1188 = vunpack.c.l.b16 %v264
  %v1189 = vunpack.c.l.b16 %v265
  %v1190 = vunpack.c.l.b16 %v266
  %v1191 = vunpack.c.l.b16 %v267
  %v1192 = vunpack.c.l.b16 %v268
  %v1193 = vunpack.c.l.b16 %v269
  %v1194 = vunpack.c.l.b16 %v270
  %v1195 = vunpack.c.l.b16 %v271
  %v1196 = vunpack.c.l.b16 %v272
  %v1197 = vunpack.c.l.b16 %v273
  %v1198 = vunpack.c.l.b16 %v274
  %v1199 = vunpack.c.l.b16 %v275
  %v1200 = vunpack.c.l.b16 %v276
  %v1201 = vunpack.c.l.b16 %v277
  %v1202 = vunpack.c.l.b16 %v278
  %v1203 = vunpack.c.l.b16 %v279
  %v1204 = vunpack.c.l.b16 %v280
  %v1205 = vunpack.c.l.b16 %v281
  %v1206 = vunpack.c.l.b16 %v282
  %v1207 = vunpack.c.l.b16 %v283
  %v1208 = vunpack.c.l.b16 %v284
  %v1209 = vunpack.c.l.b16 %v285
  %v1210 = vunpack.c.l.b16 %v286
  %v1211 = vunpack.c.l.b16 %v287
  %v1212 = vunpack.c.l.b16 %v288
  %v1213 = vunpack.c.l.b16 %v289
  %v1214 = vunpack.c.l.b16 %v290
  %v1215 = vunpack.c.l.b16 %v291
  %v1216 = vunpack.c.l.b16 %v292
  %v1217 = vunpack.c.l.b16 %v293
  %v1218 = vpack.c.b16 %v1059, %v1058
  %v1219 = vpack.c.b16 %v1061, %v1060
  %v1220 = vpack.c.b16 %v1063, %v1062
  %v1221 = vpack.c.b16 %v1065, %v1064
  %v1222 = vpack.c.b16 %v1067, %v1066
  %v1223 = vpack.c.b16 %v1069, %v1068
  %v1224 = vpack.c.b16 %v1071, %v1070
  %v1225 = vpack.c.b16 %v1073, %v1072
  %v1226 = vpack.c.b16 %v1075, %v1074
  %v1227 = vpack.c.b16 %v1077, %v1076
  %v1228 = vpack.c.b16 %v1079, %v1078
  %v1229 = vpack.c.b16 %v1081, %v1080
  %v1230 = vpack.c.b16 %v1083, %v1082
  %v1231 = vpack.c.b16 %v1085, %v1084
  %v1232 = vpack.c.b16 %v1087, %v1086
  %v1233 = vpack.c.b16 %v1089, %v1088
  %v1234 = vpack.c.b16 %v1091, %v1090
  %v1235 = vpack.c.b16 %v1093, %v1092
  %v1236 = vpack.c.b16 %v1095, %v1094
  %v1237 = vpack.c.b16 %v1097, %v1096
  %v1238 = vpack.c.b16 %v1099, %v1098
  %v1239 = vpack.c.b16 %v1101, %v1100
  %v1240 = vpack.c.b16 %v1103, %v1102
  %v1241 = vpack.c.b16 %v1105, %v1104
  %v1242 = vpack.c.b16 %v1107, %v1106
  %v1243 = vpack.c.b16 %v1109, %v1108
  %v1244 = vpack.c.b16 %v1111, %v1110
  %v1245 = vpack.c.b16 %v1113, %v1112
  %v1246 = vpack.c.b16 %v1115, %v1114
  %v1247 = vpack.c.b16 %v1117, %v1116
  %v1248 = vpack.c.b16 %v1119, %v1118
  %v1249 = vpack.c.b16 %v1121, %v1120
  %v1250 = vpack.c.b16 %v1123, %v1122
  %v1251 = vpack.c.b16 %v1125, %v1124
  %v1252 = vpack.c.b16 %v1127, %v1126
  %v1253 = vpack.c.b16 %v1129, %v1128
  %v1254 = vpack.c.b16 %v1131, %v1130
  %v1255 = vpack.c.b16 %v1133, %v1132
  %v1256 = vpack.c.b16 %v1135, %v1134
  %v1257 = vpack.c.b16 %v1137, %v1136
  %v1258 = vpack.c.b16 %v1139, %v1138
  %v1259 = vpack.c.b16 %v1141, %v1140
  %v1260 = vpack.c.b16 %v1143, %v1142
  %v1261 = vpack.c.b16 %v1145, %v1144
  %v1262 = vpack.c.b16 %v1147, %v1146
  %v1263 = vpack.c.b16 %v1149, %v1148
  %v1264 = vpack.c.b16 %v1151, %v1150
  %v1265 = vpack.c.b16 %v1153, %v1152
  %v1266 = vpack.c.b16 %v1155, %v1154
  %v1267 = vpack.c.b16 %v1157, %v1156
  %v1268 = vpack.c.b16 %v1159, %v1158
  %v1269 = vpack.c.b16 %v1161, %v1160
  %v1270 = vpack.c.b16 %v1163, %v1162
  %v1271 = vpack.c.b16 %v1165, %v1164
  %v1272 = vpack.c.b16 %v1167, %v1166
  %v1273 = vpack.c.b16 %v1169, %v1168
  %v1274 = vpack.c.b16 %v1171, %v1170
  %v1275 = vpack.c.b16 %v1173, %v1172
  %v1276 = vpack.c.b16 %v1175, %v1174
  %v1277 = vpack.c.b16 %v1177, %v1176
  %v1278 = vpack.c.b16 %v1179, %v1178
  %v1279 = vpack.c.b16 %v1181, %v1180
  %v1280 = vpack.c.b16 %v1183, %v1182
  %v1281 = vpack.c.b16 %v1185, %v1184
  %v1282 = vpack.c.b16 %v1187, %v1186
  %v1283 = vpack.c.b16 %v1189, %v1188
  %v1284 = vpack.c.b16 %v1191, %v1190
  %v1285 = vpack.c.b16 %v1193, %v1192
  %v1286 = vpack.c.b16 %v1195, %v1194
  %v1287 = vpack.c.b16 %v1197, %v1196
  %v1288 = vpack.c.b16 %v1199, %v1198
  %v1289 = vpack.c.b16 %v1201, %v1200
  %v1290 = vpack.c.b16 %v1203, %v1202
  %v1291 = vpack.c.b16 %v1205, %v1204
  %v1292 = vpack.c.b16 %v1207, %v1206
  %v1293 = vpack.c.b16 %v1209, %v1208
  %v1294 = vpack.c.b16 %v1211, %v1210
  %v1295 = vpack.c.b16 %v1213, %v1212
  %v1296 = vpack.c.b16 %v1215, %v1214
  %v1297 = vpack.c.b16 %v1217, %v1216
  %1378 = vmatpush.bf16.msra.mxu0 %v1225
  %1379 = vmatpush.bf16.msra.mxu0 %v1224
  %1380 = vmatpush.bf16.msra.mxu0 %v1223
  %1381 = vmatpush.bf16.msra.mxu0 %v1222
  %1382 = vmatpush.bf16.msra.mxu0 %v1221
  %1383 = vmatpush.bf16.msra.mxu0 %v1220
  %1384 = vmatpush.bf16.msra.mxu0 %v1219
  %1385 = vmatpush.bf16.msra.mxu0 %v1218
  %1386 = vmatmul.bf16.gmra.mxu0 %v658
  %v1387 = vpop.f32.mrf.mxu0
  %v1388 = vadd.f32 %v296, %v1387
  %v1389 = vpop.f32.mrf.mxu0
  %v1390 = vadd.f32 %v296, %v1389
  %1391 = vmatmul.bf16.gmra.mxu0 %v668
  %v1392 = vpop.f32.mrf.mxu0
  %v1393 = vadd.f32 %v296, %v1392
  %v1394 = vpop.f32.mrf.mxu0
  %v1395 = vadd.f32 %v296, %v1394
  %1396 = vmatmul.bf16.gmra.mxu0 %v678
  %v1397 = vpop.f32.mrf.mxu0
  %v1398 = vadd.f32 %v296, %v1397
  %v1399 = vpop.f32.mrf.mxu0
  %v1400 = vadd.f32 %v296, %v1399
  %1401 = vmatmul.bf16.gmra.mxu0 %v688
  %v1402 = vpop.f32.mrf.mxu0
  %v1403 = vadd.f32 %v296, %v1402
  %v1404 = vpop.f32.mrf.mxu0
  %v1405 = vadd.f32 %v296, %v1404
  %1406 = vmatmul.bf16.gmra.mxu0 %v698
  %v1407 = vpop.f32.mrf.mxu0
  %v1408 = vadd.f32 %v296, %v1407
  %v1409 = vpop.f32.mrf.mxu0
  %v1410 = vadd.f32 %v296, %v1409
  %1411 = vmatmul.bf16.gmra.mxu0 %v708
  %v1412 = vpop.f32.mrf.mxu0
  %v1413 = vadd.f32 %v296, %v1412
  %v1414 = vpop.f32.mrf.mxu0
  %v1415 = vadd.f32 %v296, %v1414
  %1416 = vmatmul.bf16.gmra.mxu0 %v718
  %v1417 = vpop.f32.mrf.mxu0
  %v1418 = vadd.f32 %v296, %v1417
  %v1419 = vpop.f32.mrf.mxu0
  %v1420 = vadd.f32 %v296, %v1419
  %1421 = vmatmul.bf16.gmra.mxu0 %v728
  %v1422 = vpop.f32.mrf.mxu0
  %v1423 = vadd.f32 %v296, %v1422
  %v1424 = vpop.f32.mrf.mxu0
  %v1425 = vadd.f32 %v296, %v1424
  %1426 = vmatmul.bf16.gmra.mxu0 %v738
  %v1427 = vpop.f32.mrf.mxu0
  %v1428 = vadd.f32 %v296, %v1427
  %v1429 = vpop.f32.mrf.mxu0
  %v1430 = vadd.f32 %v296, %v1429
  %1431 = vmatmul.bf16.gmra.mxu0 %v748
  %v1432 = vpop.f32.mrf.mxu0
  %v1433 = vadd.f32 %v296, %v1432
  %v1434 = vpop.f32.mrf.mxu0
  %v1435 = vadd.f32 %v296, %v1434
  %1436 = vmatmul.bf16.gmra.mxu0 %v758
  %v1437 = vpop.f32.mrf.mxu0
  %v1438 = vadd.f32 %v296, %v1437
  %v1439 = vpop.f32.mrf.mxu0
  %v1440 = vadd.f32 %v296, %v1439
  %1441 = vmatmul.bf16.gmra.mxu0 %v768
  %v1442 = vpop.f32.mrf.mxu0
  %v1443 = vadd.f32 %v296, %v1442
  %v1444 = vpop.f32.mrf.mxu0
  %v1445 = vadd.f32 %v296, %v1444
  %1446 = vdwg.mxu0
  %1447 = vmatpush.bf16.msra.mxu0 %v1233
  %1448 = vmatpush.bf16.msra.mxu0 %v1232
  %1449 = vmatpush.bf16.msra.mxu0 %v1231
  %1450 = vmatpush.bf16.msra.mxu0 %v1230
  %1451 = vmatpush.bf16.msra.mxu0 %v1229
  %1452 = vmatpush.bf16.msra.mxu0 %v1228
  %1453 = vmatpush.bf16.msra.mxu0 %v1227
  %1454 = vmatpush.bf16.msra.mxu0 %v1226
  %1455 = vmatmul.bf16.gmra.mxu0 %v659
  %v1456 = vpop.f32.mrf.mxu0
  %v1457 = vadd.f32 %v1388, %v1456
  %v1458 = vpop.f32.mrf.mxu0
  %v1459 = vadd.f32 %v1390, %v1458
  %1460 = vmatmul.bf16.gmra.mxu0 %v669
  %v1461 = vpop.f32.mrf.mxu0
  %v1462 = vadd.f32 %v1393, %v1461
  %v1463 = vpop.f32.mrf.mxu0
  %v1464 = vadd.f32 %v1395, %v1463
  %1465 = vmatmul.bf16.gmra.mxu0 %v679
  %v1466 = vpop.f32.mrf.mxu0
  %v1467 = vadd.f32 %v1398, %v1466
  %v1468 = vpop.f32.mrf.mxu0
  %v1469 = vadd.f32 %v1400, %v1468
  %1470 = vmatmul.bf16.gmra.mxu0 %v689
  %v1471 = vpop.f32.mrf.mxu0
  %v1472 = vadd.f32 %v1403, %v1471
  %v1473 = vpop.f32.mrf.mxu0
  %v1474 = vadd.f32 %v1405, %v1473
  %1475 = vmatmul.bf16.gmra.mxu0 %v699
  %v1476 = vpop.f32.mrf.mxu0
  %v1477 = vadd.f32 %v1408, %v1476
  %v1478 = vpop.f32.mrf.mxu0
  %v1479 = vadd.f32 %v1410, %v1478
  %1480 = vmatmul.bf16.gmra.mxu0 %v709
  %v1481 = vpop.f32.mrf.mxu0
  %v1482 = vadd.f32 %v1413, %v1481
  %v1483 = vpop.f32.mrf.mxu0
  %v1484 = vadd.f32 %v1415, %v1483
  %1485 = vmatmul.bf16.gmra.mxu0 %v719
  %v1486 = vpop.f32.mrf.mxu0
  %v1487 = vadd.f32 %v1418, %v1486
  %v1488 = vpop.f32.mrf.mxu0
  %v1489 = vadd.f32 %v1420, %v1488
  %1490 = vmatmul.bf16.gmra.mxu0 %v729
  %v1491 = vpop.f32.mrf.mxu0
  %v1492 = vadd.f32 %v1423, %v1491
  %v1493 = vpop.f32.mrf.mxu0
  %v1494 = vadd.f32 %v1425, %v1493
  %1495 = vmatmul.bf16.gmra.mxu0 %v739
  %v1496 = vpop.f32.mrf.mxu0
  %v1497 = vadd.f32 %v1428, %v1496
  %v1498 = vpop.f32.mrf.mxu0
  %v1499 = vadd.f32 %v1430, %v1498
  %1500 = vmatmul.bf16.gmra.mxu0 %v749
  %v1501 = vpop.f32.mrf.mxu0
  %v1502 = vadd.f32 %v1433, %v1501
  %v1503 = vpop.f32.mrf.mxu0
  %v1504 = vadd.f32 %v1435, %v1503
  %1505 = vmatmul.bf16.gmra.mxu0 %v759
  %v1506 = vpop.f32.mrf.mxu0
  %v1507 = vadd.f32 %v1438, %v1506
  %v1508 = vpop.f32.mrf.mxu0
  %v1509 = vadd.f32 %v1440, %v1508
  %1510 = vmatmul.bf16.gmra.mxu0 %v769
  %v1511 = vpop.f32.mrf.mxu0
  %v1512 = vadd.f32 %v1443, %v1511
  %v1513 = vpop.f32.mrf.mxu0
  %v1514 = vadd.f32 %v1445, %v1513
  %1515 = vdwg.mxu0
  %1516 = vmatpush.bf16.msra.mxu0 %v1241
  %1517 = vmatpush.bf16.msra.mxu0 %v1240
  %1518 = vmatpush.bf16.msra.mxu0 %v1239
  %1519 = vmatpush.bf16.msra.mxu0 %v1238
  %1520 = vmatpush.bf16.msra.mxu0 %v1237
  %1521 = vmatpush.bf16.msra.mxu0 %v1236
  %1522 = vmatpush.bf16.msra.mxu0 %v1235
  %1523 = vmatpush.bf16.msra.mxu0 %v1234
  %1524 = vmatmul.bf16.gmra.mxu0 %v660
  %v1525 = vpop.f32.mrf.mxu0
  %v1526 = vadd.f32 %v1457, %v1525
  %v1527 = vpop.f32.mrf.mxu0
  %v1528 = vadd.f32 %v1459, %v1527
  %1529 = vmatmul.bf16.gmra.mxu0 %v670
  %v1530 = vpop.f32.mrf.mxu0
  %v1531 = vadd.f32 %v1462, %v1530
  %v1532 = vpop.f32.mrf.mxu0
  %v1533 = vadd.f32 %v1464, %v1532
  %1534 = vmatmul.bf16.gmra.mxu0 %v680
  %v1535 = vpop.f32.mrf.mxu0
  %v1536 = vadd.f32 %v1467, %v1535
  %v1537 = vpop.f32.mrf.mxu0
  %v1538 = vadd.f32 %v1469, %v1537
  %1539 = vmatmul.bf16.gmra.mxu0 %v690
  %v1540 = vpop.f32.mrf.mxu0
  %v1541 = vadd.f32 %v1472, %v1540
  %v1542 = vpop.f32.mrf.mxu0
  %v1543 = vadd.f32 %v1474, %v1542
  %1544 = vmatmul.bf16.gmra.mxu0 %v700
  %v1545 = vpop.f32.mrf.mxu0
  %v1546 = vadd.f32 %v1477, %v1545
  %v1547 = vpop.f32.mrf.mxu0
  %v1548 = vadd.f32 %v1479, %v1547
  %1549 = vmatmul.bf16.gmra.mxu0 %v710
  %v1550 = vpop.f32.mrf.mxu0
  %v1551 = vadd.f32 %v1482, %v1550
  %v1552 = vpop.f32.mrf.mxu0
  %v1553 = vadd.f32 %v1484, %v1552
  %1554 = vmatmul.bf16.gmra.mxu0 %v720
  %v1555 = vpop.f32.mrf.mxu0
  %v1556 = vadd.f32 %v1487, %v1555
  %v1557 = vpop.f32.mrf.mxu0
  %v1558 = vadd.f32 %v1489, %v1557
  %1559 = vmatmul.bf16.gmra.mxu0 %v730
  %v1560 = vpop.f32.mrf.mxu0
  %v1561 = vadd.f32 %v1492, %v1560
  %v1562 = vpop.f32.mrf.mxu0
  %v1563 = vadd.f32 %v1494, %v1562
  %1564 = vmatmul.bf16.gmra.mxu0 %v740
  %v1565 = vpop.f32.mrf.mxu0
  %v1566 = vadd.f32 %v1497, %v1565
  %v1567 = vpop.f32.mrf.mxu0
  %v1568 = vadd.f32 %v1499, %v1567
  %1569 = vmatmul.bf16.gmra.mxu0 %v750
  %v1570 = vpop.f32.mrf.mxu0
  %v1571 = vadd.f32 %v1502, %v1570
  %v1572 = vpop.f32.mrf.mxu0
  %v1573 = vadd.f32 %v1504, %v1572
  %1574 = vmatmul.bf16.gmra.mxu0 %v760
  %v1575 = vpop.f32.mrf.mxu0
  %v1576 = vadd.f32 %v1507, %v1575
  %v1577 = vpop.f32.mrf.mxu0
  %v1578 = vadd.f32 %v1509, %v1577
  %1579 = vmatmul.bf16.gmra.mxu0 %v770
  %v1580 = vpop.f32.mrf.mxu0
  %v1581 = vadd.f32 %v1512, %v1580
  %v1582 = vpop.f32.mrf.mxu0
  %v1583 = vadd.f32 %v1514, %v1582
  %1584 = vdwg.mxu0
  %1585 = vmatpush.bf16.msra.mxu0 %v1249
  %1586 = vmatpush.bf16.msra.mxu0 %v1248
  %1587 = vmatpush.bf16.msra.mxu0 %v1247
  %1588 = vmatpush.bf16.msra.mxu0 %v1246
  %1589 = vmatpush.bf16.msra.mxu0 %v1245
  %1590 = vmatpush.bf16.msra.mxu0 %v1244
  %1591 = vmatpush.bf16.msra.mxu0 %v1243
  %1592 = vmatpush.bf16.msra.mxu0 %v1242
  %1593 = vmatmul.bf16.gmra.mxu0 %v661
  %v1594 = vpop.f32.mrf.mxu0
  %v1595 = vadd.f32 %v1526, %v1594
  %v1596 = vpop.f32.mrf.mxu0
  %v1597 = vadd.f32 %v1528, %v1596
  %1598 = vmatmul.bf16.gmra.mxu0 %v671
  %v1599 = vpop.f32.mrf.mxu0
  %v1600 = vadd.f32 %v1531, %v1599
  %v1601 = vpop.f32.mrf.mxu0
  %v1602 = vadd.f32 %v1533, %v1601
  %1603 = vmatmul.bf16.gmra.mxu0 %v681
  %v1604 = vpop.f32.mrf.mxu0
  %v1605 = vadd.f32 %v1536, %v1604
  %v1606 = vpop.f32.mrf.mxu0
  %v1607 = vadd.f32 %v1538, %v1606
  %1608 = vmatmul.bf16.gmra.mxu0 %v691
  %v1609 = vpop.f32.mrf.mxu0
  %v1610 = vadd.f32 %v1541, %v1609
  %v1611 = vpop.f32.mrf.mxu0
  %v1612 = vadd.f32 %v1543, %v1611
  %1613 = vmatmul.bf16.gmra.mxu0 %v701
  %v1614 = vpop.f32.mrf.mxu0
  %v1615 = vadd.f32 %v1546, %v1614
  %v1616 = vpop.f32.mrf.mxu0
  %v1617 = vadd.f32 %v1548, %v1616
  %1618 = vmatmul.bf16.gmra.mxu0 %v711
  %v1619 = vpop.f32.mrf.mxu0
  %v1620 = vadd.f32 %v1551, %v1619
  %v1621 = vpop.f32.mrf.mxu0
  %v1622 = vadd.f32 %v1553, %v1621
  %1623 = vmatmul.bf16.gmra.mxu0 %v721
  %v1624 = vpop.f32.mrf.mxu0
  %v1625 = vadd.f32 %v1556, %v1624
  %v1626 = vpop.f32.mrf.mxu0
  %v1627 = vadd.f32 %v1558, %v1626
  %1628 = vmatmul.bf16.gmra.mxu0 %v731
  %v1629 = vpop.f32.mrf.mxu0
  %v1630 = vadd.f32 %v1561, %v1629
  %v1631 = vpop.f32.mrf.mxu0
  %v1632 = vadd.f32 %v1563, %v1631
  %1633 = vmatmul.bf16.gmra.mxu0 %v741
  %v1634 = vpop.f32.mrf.mxu0
  %v1635 = vadd.f32 %v1566, %v1634
  %v1636 = vpop.f32.mrf.mxu0
  %v1637 = vadd.f32 %v1568, %v1636
  %1638 = vmatmul.bf16.gmra.mxu0 %v751
  %v1639 = vpop.f32.mrf.mxu0
  %v1640 = vadd.f32 %v1571, %v1639
  %v1641 = vpop.f32.mrf.mxu0
  %v1642 = vadd.f32 %v1573, %v1641
  %1643 = vmatmul.bf16.gmra.mxu0 %v761
  %v1644 = vpop.f32.mrf.mxu0
  %v1645 = vadd.f32 %v1576, %v1644
  %v1646 = vpop.f32.mrf.mxu0
  %v1647 = vadd.f32 %v1578, %v1646
  %1648 = vmatmul.bf16.gmra.mxu0 %v771
  %v1649 = vpop.f32.mrf.mxu0
  %v1650 = vadd.f32 %v1581, %v1649
  %v1651 = vpop.f32.mrf.mxu0
  %v1652 = vadd.f32 %v1583, %v1651
  %1653 = vdwg.mxu0
  %1654 = vmatpush.bf16.msra.mxu0 %v1257
  %1655 = vmatpush.bf16.msra.mxu0 %v1256
  %1656 = vmatpush.bf16.msra.mxu0 %v1255
  %1657 = vmatpush.bf16.msra.mxu0 %v1254
  %1658 = vmatpush.bf16.msra.mxu0 %v1253
  %1659 = vmatpush.bf16.msra.mxu0 %v1252
  %1660 = vmatpush.bf16.msra.mxu0 %v1251
  %1661 = vmatpush.bf16.msra.mxu0 %v1250
  %1662 = vmatmul.bf16.gmra.mxu0 %v662
  %v1663 = vpop.f32.mrf.mxu0
  %v1664 = vadd.f32 %v1595, %v1663
  %v1665 = vpop.f32.mrf.mxu0
  %v1666 = vadd.f32 %v1597, %v1665
  %1667 = vmatmul.bf16.gmra.mxu0 %v672
  %v1668 = vpop.f32.mrf.mxu0
  %v1669 = vadd.f32 %v1600, %v1668
  %v1670 = vpop.f32.mrf.mxu0
  %v1671 = vadd.f32 %v1602, %v1670
  %1672 = vmatmul.bf16.gmra.mxu0 %v682
  %v1673 = vpop.f32.mrf.mxu0
  %v1674 = vadd.f32 %v1605, %v1673
  %v1675 = vpop.f32.mrf.mxu0
  %v1676 = vadd.f32 %v1607, %v1675
  %1677 = vmatmul.bf16.gmra.mxu0 %v692
  %v1678 = vpop.f32.mrf.mxu0
  %v1679 = vadd.f32 %v1610, %v1678
  %v1680 = vpop.f32.mrf.mxu0
  %v1681 = vadd.f32 %v1612, %v1680
  %1682 = vmatmul.bf16.gmra.mxu0 %v702
  %v1683 = vpop.f32.mrf.mxu0
  %v1684 = vadd.f32 %v1615, %v1683
  %v1685 = vpop.f32.mrf.mxu0
  %v1686 = vadd.f32 %v1617, %v1685
  %1687 = vmatmul.bf16.gmra.mxu0 %v712
  %v1688 = vpop.f32.mrf.mxu0
  %v1689 = vadd.f32 %v1620, %v1688
  %v1690 = vpop.f32.mrf.mxu0
  %v1691 = vadd.f32 %v1622, %v1690
  %1692 = vmatmul.bf16.gmra.mxu0 %v722
  %v1693 = vpop.f32.mrf.mxu0
  %v1694 = vadd.f32 %v1625, %v1693
  %v1695 = vpop.f32.mrf.mxu0
  %v1696 = vadd.f32 %v1627, %v1695
  %1697 = vmatmul.bf16.gmra.mxu0 %v732
  %v1698 = vpop.f32.mrf.mxu0
  %v1699 = vadd.f32 %v1630, %v1698
  %v1700 = vpop.f32.mrf.mxu0
  %v1701 = vadd.f32 %v1632, %v1700
  %1702 = vmatmul.bf16.gmra.mxu0 %v742
  %v1703 = vpop.f32.mrf.mxu0
  %v1704 = vadd.f32 %v1635, %v1703
  %v1705 = vpop.f32.mrf.mxu0
  %v1706 = vadd.f32 %v1637, %v1705
  %1707 = vmatmul.bf16.gmra.mxu0 %v752
  %v1708 = vpop.f32.mrf.mxu0
  %v1709 = vadd.f32 %v1640, %v1708
  %v1710 = vpop.f32.mrf.mxu0
  %v1711 = vadd.f32 %v1642, %v1710
  %1712 = vmatmul.bf16.gmra.mxu0 %v762
  %v1713 = vpop.f32.mrf.mxu0
  %v1714 = vadd.f32 %v1645, %v1713
  %v1715 = vpop.f32.mrf.mxu0
  %v1716 = vadd.f32 %v1647, %v1715
  %1717 = vmatmul.bf16.gmra.mxu0 %v772
  %v1718 = vpop.f32.mrf.mxu0
  %v1719 = vadd.f32 %v1650, %v1718
  %v1720 = vpop.f32.mrf.mxu0
  %v1721 = vadd.f32 %v1652, %v1720
  %1722 = vdwg.mxu0
  %1723 = vmatpush.bf16.msra.mxu0 %v1265
  %1724 = vmatpush.bf16.msra.mxu0 %v1264
  %1725 = vmatpush.bf16.msra.mxu0 %v1263
  %1726 = vmatpush.bf16.msra.mxu0 %v1262
  %1727 = vmatpush.bf16.msra.mxu0 %v1261
  %1728 = vmatpush.bf16.msra.mxu0 %v1260
  %1729 = vmatpush.bf16.msra.mxu0 %v1259
  %1730 = vmatpush.bf16.msra.mxu0 %v1258
  %1731 = vmatmul.bf16.gmra.mxu0 %v663
  %v1732 = vpop.f32.mrf.mxu0
  %v1733 = vadd.f32 %v1664, %v1732
  %v1734 = vpop.f32.mrf.mxu0
  %v1735 = vadd.f32 %v1666, %v1734
  %1736 = vmatmul.bf16.gmra.mxu0 %v673
  %v1737 = vpop.f32.mrf.mxu0
  %v1738 = vadd.f32 %v1669, %v1737
  %v1739 = vpop.f32.mrf.mxu0
  %v1740 = vadd.f32 %v1671, %v1739
  %1741 = vmatmul.bf16.gmra.mxu0 %v683
  %v1742 = vpop.f32.mrf.mxu0
  %v1743 = vadd.f32 %v1674, %v1742
  %v1744 = vpop.f32.mrf.mxu0
  %v1745 = vadd.f32 %v1676, %v1744
  %1746 = vmatmul.bf16.gmra.mxu0 %v693
  %v1747 = vpop.f32.mrf.mxu0
  %v1748 = vadd.f32 %v1679, %v1747
  %v1749 = vpop.f32.mrf.mxu0
  %v1750 = vadd.f32 %v1681, %v1749
  %1751 = vmatmul.bf16.gmra.mxu0 %v703
  %v1752 = vpop.f32.mrf.mxu0
  %v1753 = vadd.f32 %v1684, %v1752
  %v1754 = vpop.f32.mrf.mxu0
  %v1755 = vadd.f32 %v1686, %v1754
  %1756 = vmatmul.bf16.gmra.mxu0 %v713
  %v1757 = vpop.f32.mrf.mxu0
  %v1758 = vadd.f32 %v1689, %v1757
  %v1759 = vpop.f32.mrf.mxu0
  %v1760 = vadd.f32 %v1691, %v1759
  %1761 = vmatmul.bf16.gmra.mxu0 %v723
  %v1762 = vpop.f32.mrf.mxu0
  %v1763 = vadd.f32 %v1694, %v1762
  %v1764 = vpop.f32.mrf.mxu0
  %v1765 = vadd.f32 %v1696, %v1764
  %1766 = vmatmul.bf16.gmra.mxu0 %v733
  %v1767 = vpop.f32.mrf.mxu0
  %v1768 = vadd.f32 %v1699, %v1767
  %v1769 = vpop.f32.mrf.mxu0
  %v1770 = vadd.f32 %v1701, %v1769
  %1771 = vmatmul.bf16.gmra.mxu0 %v743
  %v1772 = vpop.f32.mrf.mxu0
  %v1773 = vadd.f32 %v1704, %v1772
  %v1774 = vpop.f32.mrf.mxu0
  %v1775 = vadd.f32 %v1706, %v1774
  %1776 = vmatmul.bf16.gmra.mxu0 %v753
  %v1777 = vpop.f32.mrf.mxu0
  %v1778 = vadd.f32 %v1709, %v1777
  %v1779 = vpop.f32.mrf.mxu0
  %v1780 = vadd.f32 %v1711, %v1779
  %1781 = vmatmul.bf16.gmra.mxu0 %v763
  %v1782 = vpop.f32.mrf.mxu0
  %v1783 = vadd.f32 %v1714, %v1782
  %v1784 = vpop.f32.mrf.mxu0
  %v1785 = vadd.f32 %v1716, %v1784
  %1786 = vmatmul.bf16.gmra.mxu0 %v773
  %v1787 = vpop.f32.mrf.mxu0
  %v1788 = vadd.f32 %v1719, %v1787
  %v1789 = vpop.f32.mrf.mxu0
  %v1790 = vadd.f32 %v1721, %v1789
  %1791 = vdwg.mxu0
  %1792 = vmatpush.bf16.msra.mxu0 %v1273
  %1793 = vmatpush.bf16.msra.mxu0 %v1272
  %1794 = vmatpush.bf16.msra.mxu0 %v1271
  %1795 = vmatpush.bf16.msra.mxu0 %v1270
  %1796 = vmatpush.bf16.msra.mxu0 %v1269
  %1797 = vmatpush.bf16.msra.mxu0 %v1268
  %1798 = vmatpush.bf16.msra.mxu0 %v1267
  %1799 = vmatpush.bf16.msra.mxu0 %v1266
  %1800 = vmatmul.bf16.gmra.mxu0 %v664
  %v1801 = vpop.f32.mrf.mxu0
  %v1802 = vadd.f32 %v1733, %v1801
  %v1803 = vpop.f32.mrf.mxu0
  %v1804 = vadd.f32 %v1735, %v1803
  %1805 = vmatmul.bf16.gmra.mxu0 %v674
  %v1806 = vpop.f32.mrf.mxu0
  %v1807 = vadd.f32 %v1738, %v1806
  %v1808 = vpop.f32.mrf.mxu0
  %v1809 = vadd.f32 %v1740, %v1808
  %1810 = vmatmul.bf16.gmra.mxu0 %v684
  %v1811 = vpop.f32.mrf.mxu0
  %v1812 = vadd.f32 %v1743, %v1811
  %v1813 = vpop.f32.mrf.mxu0
  %v1814 = vadd.f32 %v1745, %v1813
  %1815 = vmatmul.bf16.gmra.mxu0 %v694
  %v1816 = vpop.f32.mrf.mxu0
  %v1817 = vadd.f32 %v1748, %v1816
  %v1818 = vpop.f32.mrf.mxu0
  %v1819 = vadd.f32 %v1750, %v1818
  %1820 = vmatmul.bf16.gmra.mxu0 %v704
  %v1821 = vpop.f32.mrf.mxu0
  %v1822 = vadd.f32 %v1753, %v1821
  %v1823 = vpop.f32.mrf.mxu0
  %v1824 = vadd.f32 %v1755, %v1823
  %1825 = vmatmul.bf16.gmra.mxu0 %v714
  %v1826 = vpop.f32.mrf.mxu0
  %v1827 = vadd.f32 %v1758, %v1826
  %v1828 = vpop.f32.mrf.mxu0
  %v1829 = vadd.f32 %v1760, %v1828
  %1830 = vmatmul.bf16.gmra.mxu0 %v724
  %v1831 = vpop.f32.mrf.mxu0
  %v1832 = vadd.f32 %v1763, %v1831
  %v1833 = vpop.f32.mrf.mxu0
  %v1834 = vadd.f32 %v1765, %v1833
  %1835 = vmatmul.bf16.gmra.mxu0 %v734
  %v1836 = vpop.f32.mrf.mxu0
  %v1837 = vadd.f32 %v1768, %v1836
  %v1838 = vpop.f32.mrf.mxu0
  %v1839 = vadd.f32 %v1770, %v1838
  %1840 = vmatmul.bf16.gmra.mxu0 %v744
  %v1841 = vpop.f32.mrf.mxu0
  %v1842 = vadd.f32 %v1773, %v1841
  %v1843 = vpop.f32.mrf.mxu0
  %v1844 = vadd.f32 %v1775, %v1843
  %1845 = vmatmul.bf16.gmra.mxu0 %v754
  %v1846 = vpop.f32.mrf.mxu0
  %v1847 = vadd.f32 %v1778, %v1846
  %v1848 = vpop.f32.mrf.mxu0
  %v1849 = vadd.f32 %v1780, %v1848
  %1850 = vmatmul.bf16.gmra.mxu0 %v764
  %v1851 = vpop.f32.mrf.mxu0
  %v1852 = vadd.f32 %v1783, %v1851
  %v1853 = vpop.f32.mrf.mxu0
  %v1854 = vadd.f32 %v1785, %v1853
  %1855 = vmatmul.bf16.gmra.mxu0 %v774
  %v1856 = vpop.f32.mrf.mxu0
  %v1857 = vadd.f32 %v1788, %v1856
  %v1858 = vpop.f32.mrf.mxu0
  %v1859 = vadd.f32 %v1790, %v1858
  %1860 = vdwg.mxu0
  %1861 = vmatpush.bf16.msra.mxu0 %v1281
  %1862 = vmatpush.bf16.msra.mxu0 %v1280
  %1863 = vmatpush.bf16.msra.mxu0 %v1279
  %1864 = vmatpush.bf16.msra.mxu0 %v1278
  %1865 = vmatpush.bf16.msra.mxu0 %v1277
  %1866 = vmatpush.bf16.msra.mxu0 %v1276
  %1867 = vmatpush.bf16.msra.mxu0 %v1275
  %1868 = vmatpush.bf16.msra.mxu0 %v1274
  %1869 = vmatmul.bf16.gmra.mxu0 %v665
  %v1870 = vpop.f32.mrf.mxu0
  %v1871 = vadd.f32 %v1802, %v1870
  %v1872 = vpop.f32.mrf.mxu0
  %v1873 = vadd.f32 %v1804, %v1872
  %1874 = vmatmul.bf16.gmra.mxu0 %v675
  %v1875 = vpop.f32.mrf.mxu0
  %v1876 = vadd.f32 %v1807, %v1875
  %v1877 = vpop.f32.mrf.mxu0
  %v1878 = vadd.f32 %v1809, %v1877
  %1879 = vmatmul.bf16.gmra.mxu0 %v685
  %v1880 = vpop.f32.mrf.mxu0
  %v1881 = vadd.f32 %v1812, %v1880
  %v1882 = vpop.f32.mrf.mxu0
  %v1883 = vadd.f32 %v1814, %v1882
  %1884 = vmatmul.bf16.gmra.mxu0 %v695
  %v1885 = vpop.f32.mrf.mxu0
  %v1886 = vadd.f32 %v1817, %v1885
  %v1887 = vpop.f32.mrf.mxu0
  %v1888 = vadd.f32 %v1819, %v1887
  %1889 = vmatmul.bf16.gmra.mxu0 %v705
  %v1890 = vpop.f32.mrf.mxu0
  %v1891 = vadd.f32 %v1822, %v1890
  %v1892 = vpop.f32.mrf.mxu0
  %v1893 = vadd.f32 %v1824, %v1892
  %1894 = vmatmul.bf16.gmra.mxu0 %v715
  %v1895 = vpop.f32.mrf.mxu0
  %v1896 = vadd.f32 %v1827, %v1895
  %v1897 = vpop.f32.mrf.mxu0
  %v1898 = vadd.f32 %v1829, %v1897
  %1899 = vmatmul.bf16.gmra.mxu0 %v725
  %v1900 = vpop.f32.mrf.mxu0
  %v1901 = vadd.f32 %v1832, %v1900
  %v1902 = vpop.f32.mrf.mxu0
  %v1903 = vadd.f32 %v1834, %v1902
  %1904 = vmatmul.bf16.gmra.mxu0 %v735
  %v1905 = vpop.f32.mrf.mxu0
  %v1906 = vadd.f32 %v1837, %v1905
  %v1907 = vpop.f32.mrf.mxu0
  %v1908 = vadd.f32 %v1839, %v1907
  %1909 = vmatmul.bf16.gmra.mxu0 %v745
  %v1910 = vpop.f32.mrf.mxu0
  %v1911 = vadd.f32 %v1842, %v1910
  %v1912 = vpop.f32.mrf.mxu0
  %v1913 = vadd.f32 %v1844, %v1912
  %1914 = vmatmul.bf16.gmra.mxu0 %v755
  %v1915 = vpop.f32.mrf.mxu0
  %v1916 = vadd.f32 %v1847, %v1915
  %v1917 = vpop.f32.mrf.mxu0
  %v1918 = vadd.f32 %v1849, %v1917
  %1919 = vmatmul.bf16.gmra.mxu0 %v765
  %v1920 = vpop.f32.mrf.mxu0
  %v1921 = vadd.f32 %v1852, %v1920
  %v1922 = vpop.f32.mrf.mxu0
  %v1923 = vadd.f32 %v1854, %v1922
  %1924 = vmatmul.bf16.gmra.mxu0 %v775
  %v1925 = vpop.f32.mrf.mxu0
  %v1926 = vadd.f32 %v1857, %v1925
  %v1927 = vpop.f32.mrf.mxu0
  %v1928 = vadd.f32 %v1859, %v1927
  %1929 = vdwg.mxu0
  %1930 = vmatpush.bf16.msra.mxu0 %v1289
  %1931 = vmatpush.bf16.msra.mxu0 %v1288
  %1932 = vmatpush.bf16.msra.mxu0 %v1287
  %1933 = vmatpush.bf16.msra.mxu0 %v1286
  %1934 = vmatpush.bf16.msra.mxu0 %v1285
  %1935 = vmatpush.bf16.msra.mxu0 %v1284
  %1936 = vmatpush.bf16.msra.mxu0 %v1283
  %1937 = vmatpush.bf16.msra.mxu0 %v1282
  %1938 = vmatmul.bf16.gmra.mxu0 %v666
  %v1939 = vpop.f32.mrf.mxu0
  %v1940 = vadd.f32 %v1871, %v1939
  %v1941 = vpop.f32.mrf.mxu0
  %v1942 = vadd.f32 %v1873, %v1941
  %1943 = vmatmul.bf16.gmra.mxu0 %v676
  %v1944 = vpop.f32.mrf.mxu0
  %v1945 = vadd.f32 %v1876, %v1944
  %v1946 = vpop.f32.mrf.mxu0
  %v1947 = vadd.f32 %v1878, %v1946
  %1948 = vmatmul.bf16.gmra.mxu0 %v686
  %v1949 = vpop.f32.mrf.mxu0
  %v1950 = vadd.f32 %v1881, %v1949
  %v1951 = vpop.f32.mrf.mxu0
  %v1952 = vadd.f32 %v1883, %v1951
  %1953 = vmatmul.bf16.gmra.mxu0 %v696
  %v1954 = vpop.f32.mrf.mxu0
  %v1955 = vadd.f32 %v1886, %v1954
  %v1956 = vpop.f32.mrf.mxu0
  %v1957 = vadd.f32 %v1888, %v1956
  %1958 = vmatmul.bf16.gmra.mxu0 %v706
  %v1959 = vpop.f32.mrf.mxu0
  %v1960 = vadd.f32 %v1891, %v1959
  %v1961 = vpop.f32.mrf.mxu0
  %v1962 = vadd.f32 %v1893, %v1961
  %1963 = vmatmul.bf16.gmra.mxu0 %v716
  %v1964 = vpop.f32.mrf.mxu0
  %v1965 = vadd.f32 %v1896, %v1964
  %v1966 = vpop.f32.mrf.mxu0
  %v1967 = vadd.f32 %v1898, %v1966
  %1968 = vmatmul.bf16.gmra.mxu0 %v726
  %v1969 = vpop.f32.mrf.mxu0
  %v1970 = vadd.f32 %v1901, %v1969
  %v1971 = vpop.f32.mrf.mxu0
  %v1972 = vadd.f32 %v1903, %v1971
  %1973 = vmatmul.bf16.gmra.mxu0 %v736
  %v1974 = vpop.f32.mrf.mxu0
  %v1975 = vadd.f32 %v1906, %v1974
  %v1976 = vpop.f32.mrf.mxu0
  %v1977 = vadd.f32 %v1908, %v1976
  %1978 = vmatmul.bf16.gmra.mxu0 %v746
  %v1979 = vpop.f32.mrf.mxu0
  %v1980 = vadd.f32 %v1911, %v1979
  %v1981 = vpop.f32.mrf.mxu0
  %v1982 = vadd.f32 %v1913, %v1981
  %1983 = vmatmul.bf16.gmra.mxu0 %v756
  %v1984 = vpop.f32.mrf.mxu0
  %v1985 = vadd.f32 %v1916, %v1984
  %v1986 = vpop.f32.mrf.mxu0
  %v1987 = vadd.f32 %v1918, %v1986
  %1988 = vmatmul.bf16.gmra.mxu0 %v766
  %v1989 = vpop.f32.mrf.mxu0
  %v1990 = vadd.f32 %v1921, %v1989
  %v1991 = vpop.f32.mrf.mxu0
  %v1992 = vadd.f32 %v1923, %v1991
  %1993 = vmatmul.bf16.gmra.mxu0 %v776
  %v1994 = vpop.f32.mrf.mxu0
  %v1995 = vadd.f32 %v1926, %v1994
  %v1996 = vpop.f32.mrf.mxu0
  %v1997 = vadd.f32 %v1928, %v1996
  %1998 = vdwg.mxu0
  %1999 = vmatpush.bf16.msra.mxu0 %v1297
  %2000 = vmatpush.bf16.msra.mxu0 %v1296
  %2001 = vmatpush.bf16.msra.mxu0 %v1295
  %2002 = vmatpush.bf16.msra.mxu0 %v1294
  %2003 = vmatpush.bf16.msra.mxu0 %v1293
  %2004 = vmatpush.bf16.msra.mxu0 %v1292
  %2005 = vmatpush.bf16.msra.mxu0 %v1291
  %2006 = vmatpush.bf16.msra.mxu0 %v1290
  %2007 = vmatmul.bf16.gmra.mxu0 %v667
  %v2008 = vpop.f32.mrf.mxu0
  %v2009 = vadd.f32 %v1940, %v2008
  %v2010 = vpop.f32.mrf.mxu0
  %v2011 = vadd.f32 %v1942, %v2010
  %2012 = vmatmul.bf16.gmra.mxu0 %v677
  %v2013 = vpop.f32.mrf.mxu0
  %v2014 = vadd.f32 %v1945, %v2013
  %v2015 = vpop.f32.mrf.mxu0
  %v2016 = vadd.f32 %v1947, %v2015
  %2017 = vmatmul.bf16.gmra.mxu0 %v687
  %v2018 = vpop.f32.mrf.mxu0
  %v2019 = vadd.f32 %v1950, %v2018
  %v2020 = vpop.f32.mrf.mxu0
  %v2021 = vadd.f32 %v1952, %v2020
  %2022 = vmatmul.bf16.gmra.mxu0 %v697
  %v2023 = vpop.f32.mrf.mxu0
  %v2024 = vadd.f32 %v1955, %v2023
  %v2025 = vpop.f32.mrf.mxu0
  %v2026 = vadd.f32 %v1957, %v2025
  %2027 = vmatmul.bf16.gmra.mxu0 %v707
  %v2028 = vpop.f32.mrf.mxu0
  %v2029 = vadd.f32 %v1960, %v2028
  %v2030 = vpop.f32.mrf.mxu0
  %v2031 = vadd.f32 %v1962, %v2030
  %2032 = vmatmul.bf16.gmra.mxu0 %v717
  %v2033 = vpop.f32.mrf.mxu0
  %v2034 = vadd.f32 %v1965, %v2033
  %v2035 = vpop.f32.mrf.mxu0
  %v2036 = vadd.f32 %v1967, %v2035
  %2037 = vmatmul.bf16.gmra.mxu0 %v727
  %v2038 = vpop.f32.mrf.mxu0
  %v2039 = vadd.f32 %v1970, %v2038
  %v2040 = vpop.f32.mrf.mxu0
  %v2041 = vadd.f32 %v1972, %v2040
  %2042 = vmatmul.bf16.gmra.mxu0 %v737
  %v2043 = vpop.f32.mrf.mxu0
  %v2044 = vadd.f32 %v1975, %v2043
  %v2045 = vpop.f32.mrf.mxu0
  %v2046 = vadd.f32 %v1977, %v2045
  %2047 = vmatmul.bf16.gmra.mxu0 %v747
  %v2048 = vpop.f32.mrf.mxu0
  %v2049 = vadd.f32 %v1980, %v2048
  %v2050 = vpop.f32.mrf.mxu0
  %v2051 = vadd.f32 %v1982, %v2050
  %2052 = vmatmul.bf16.gmra.mxu0 %v757
  %v2053 = vpop.f32.mrf.mxu0
  %v2054 = vadd.f32 %v1985, %v2053
  %v2055 = vpop.f32.mrf.mxu0
  %v2056 = vadd.f32 %v1987, %v2055
  %2057 = vmatmul.bf16.gmra.mxu0 %v767
  %v2058 = vpop.f32.mrf.mxu0
  %v2059 = vadd.f32 %v1990, %v2058
  %v2060 = vpop.f32.mrf.mxu0
  %v2061 = vadd.f32 %v1992, %v2060
  %2062 = vmatmul.bf16.gmra.mxu0 %v777
  %v2063 = vpop.f32.mrf.mxu0
  %v2064 = vadd.f32 %v1995, %v2063
  %v2065 = vpop.f32.mrf.mxu0
  %v2066 = vadd.f32 %v1997, %v2065
  %2067 = vdwg.mxu0
  %v2068 = vmax.f32 %v2009, 0.0
  %v2069 = vmax.f32 %v2011, 0.0
  %v2070 = vmax.f32 %v2014, 0.0
  %v2071 = vmax.f32 %v2016, 0.0
  %v2072 = vmax.f32 %v2019, 0.0
  %v2073 = vmax.f32 %v2021, 0.0
  %v2074 = vmax.f32 %v2024, 0.0
  %v2075 = vmax.f32 %v2026, 0.0
  %v2076 = vmax.f32 %v2029, 0.0
  %v2077 = vmax.f32 %v2031, 0.0
  %v2078 = vmax.f32 %v2034, 0.0
  %v2079 = vmax.f32 %v2036, 0.0
  %v2080 = vmax.f32 %v2039, 0.0
  %v2081 = vmax.f32 %v2041, 0.0
  %v2082 = vmax.f32 %v2044, 0.0
  %v2083 = vmax.f32 %v2046, 0.0
  %v2084 = vmax.f32 %v2049, 0.0
  %v2085 = vmax.f32 %v2051, 0.0
  %v2086 = vmax.f32 %v2054, 0.0
  %v2087 = vmax.f32 %v2056, 0.0
  %v2088 = vmax.f32 %v2059, 0.0
  %v2089 = vmax.f32 %v2061, 0.0
  %v2090 = vmax.f32 %v2064, 0.0
  %v2091 = vmax.f32 %v2066, 0.0
  %vm2092 = vcmask 261120
  %2093 = vst.msk [vmem:[%s3] sm:$0xff] %vm2092, %v2068
  %2094 = vst.msk [vmem:[%s3 + $0x8] sm:$0xff] %vm2092, %v2069
  %2095 = vst.msk [vmem:[%s3 + $0x10] sm:$0xff] %vm2092, %v2070
  %2096 = vst.msk [vmem:[%s3 + $0x18] sm:$0xff] %vm2092, %v2071
  %2097 = vst.msk [vmem:[%s3 + $0x20] sm:$0xff] %vm2092, %v2072
  %2098 = vst.msk [vmem:[%s3 + $0x28] sm:$0xff] %vm2092, %v2073
  %2099 = vst.msk [vmem:[%s3 + $0x30] sm:$0xff] %vm2092, %v2074
  %2100 = vst.msk [vmem:[%s3 + $0x38] sm:$0xff] %vm2092, %v2075
  %2101 = vst.msk [vmem:[%s3 + $0x40] sm:$0xff] %vm2092, %v2076
  %2102 = vst.msk [vmem:[%s3 + $0x48] sm:$0xff] %vm2092, %v2077
  %2103 = vst.msk [vmem:[%s3 + $0x50] sm:$0xff] %vm2092, %v2078
  %2104 = vst.msk [vmem:[%s3 + $0x58] sm:$0xff] %vm2092, %v2079
  %2105 = vst.msk [vmem:[%s3 + $0x60] sm:$0xff] %vm2092, %v2080
  %2106 = vst.msk [vmem:[%s3 + $0x68] sm:$0xff] %vm2092, %v2081
  %2107 = vst.msk [vmem:[%s3 + $0x70] sm:$0xff] %vm2092, %v2082
  %2108 = vst.msk [vmem:[%s3 + $0x78] sm:$0xff] %vm2092, %v2083
  %2109 = vst.msk [vmem:[%s3 + $0x80] sm:$0xff] %vm2092, %v2084
  %2110 = vst.msk [vmem:[%s3 + $0x88] sm:$0xff] %vm2092, %v2085
  %2111 = vst.msk [vmem:[%s3 + $0x90] sm:$0xff] %vm2092, %v2086
  %2112 = vst.msk [vmem:[%s3 + $0x98] sm:$0xff] %vm2092, %v2087
  %2113 = vst.msk [vmem:[%s3 + $0xa0] sm:$0xff] %vm2092, %v2088
  %2114 = vst.msk [vmem:[%s3 + $0xa8] sm:$0xff] %vm2092, %v2089
  %2115 = vst.msk [vmem:[%s3 + $0xb0] sm:$0xff] %vm2092, %v2090
  %2116 = vst.msk [vmem:[%s3 + $0xb8] sm:$0xff] %vm2092, %v2091
  // Predicated region
  $region14: #{mrcgnn_forward.3} parent=0 // pred_check
    _
  $region15: #{mrcgnn_forward.3} parent=0 // pred_check_branch
    %2118 = sbr.rel (0) target = $region17
  $region16: #{mrcgnn_forward.3} parent=0 // pred_region
    _
  $region17: #{mrcgnn_forward.3} parent=0 // pred_fallthru
    _
  // Predicated region
  $region18: #{mrcgnn_forward.3} parent=0 // pred_check
    _
  $region19: #{mrcgnn_forward.3} parent=0 // pred_check_branch
    %2120 = sbr.rel (0) target = $region21
  $region20: #{mrcgnn_forward.3} parent=0 // pred_region
    _
  $region21: #{mrcgnn_forward.3} parent=0 // pred_fallthru
    _

// kernel: mrcgnn_forward.5
$region0: #{mrcgnn_forward.5}
  #allocation0 [shape = 'u32[]', space=smem, size = 0x4, offset = 0x4, fixed_abs, tag = 'smem constant byte address 0x4 - core index']
  #allocation1 [shape = 'u32[72,128]{1,0:T(1,128)}', space=vmem, size = 0x9000, scoped, tag = 'internal scratch']
  %s0 = inlined_call_operand.vmem [shape: f32[8,128], index: 0, kind: input, shape index: {}]
  %s1 = inlined_call_operand.vmem [shape: f32[128,65], index: 1, kind: input, shape index: {}]
  %s2 = inlined_call_operand.vmem [shape: f32[1,65], index: 2, kind: input, shape index: {}]
  %s3 = inlined_call_operand.hbm [shape: f32[8,65], index: 3, kind: output, shape index: {}]
  %s4 = sld [smem:[#allocation0]]
  $region22: #{mrcgnn_forward.5} parent=0
    _
  %s6 = ssub.s32 1, %s4
  %s7 = scalar_select 0, %s6, %s4
  $region1: #{mrcgnn_forward.5} parent=0
    #allocation2 [shape = 'u8[4096]{0}', space=vmem, size = 0x1000, scoped, tag = 'output window, operand 0, single buffered']
    #allocation3 [shape = 's32[1]{0}', space=sflag, size = 0x4, scoped, tag = 'scoped memory for mrcgnn_forward.5']
    %8 = vsyncpa [#allocation3], 0
    // Predicated region
    $region2: #{mrcgnn_forward.5} parent=1 // pred_check
      _
    $region3: #{mrcgnn_forward.5} parent=1 // pred_check_branch
      %10 = sbr.rel (0) target = $region5
    $region4: #{mrcgnn_forward.5} parent=1 // pred_region
      _
    $region5: #{mrcgnn_forward.5} parent=1 // pred_fallthru
      _
    // Predicated region
    $region6: #{mrcgnn_forward.5} parent=1 // pred_check
      _
    $region7: #{mrcgnn_forward.5} parent=1 // pred_check_branch
      %12 = sbr.rel (0) target = $region9
    $region8: #{mrcgnn_forward.5} parent=1 // pred_region
      _
    $region9: #{mrcgnn_forward.5} parent=1 // pred_fallthru
      _
    // Predicated region
    $region10: #{mrcgnn_forward.5} parent=1 // pred_check
      _
    $region11: #{mrcgnn_forward.5} parent=1 // pred_check_branch
      %14 = sbr.rel (0) target = $region13
    $region12: #{mrcgnn_forward.5} parent=1 // pred_region
      _
    $region13: #{mrcgnn_forward.5} parent=1 // pred_fallthru
      _
    %v15 = vld [vmem:[%s0] sm:$0xff]
    %v16 = vld [vmem:[%s1] sm:$0xff]
    %v17 = vld [vmem:[%s1 + $0x8] sm:$0xff]
    %v18 = vld [vmem:[%s1 + $0x10] sm:$0xff]
    %v19 = vld [vmem:[%s1 + $0x18] sm:$0xff]
    %v20 = vld [vmem:[%s1 + $0x20] sm:$0xff]
    %v21 = vld [vmem:[%s1 + $0x28] sm:$0xff]
    %v22 = vld [vmem:[%s1 + $0x30] sm:$0xff]
    %v23 = vld [vmem:[%s1 + $0x38] sm:$0xff]
    %v24 = vld [vmem:[%s1 + $0x40] sm:$0xff]
    %v25 = vld [vmem:[%s1 + $0x48] sm:$0xff]
    %v26 = vld [vmem:[%s1 + $0x50] sm:$0xff]
    %v27 = vld [vmem:[%s1 + $0x58] sm:$0xff]
    %v28 = vld [vmem:[%s1 + $0x60] sm:$0xff]
    %v29 = vld [vmem:[%s1 + $0x68] sm:$0xff]
    %v30 = vld [vmem:[%s1 + $0x70] sm:$0xff]
    %v31 = vld [vmem:[%s1 + $0x78] sm:$0xff]
    %v32 = vld [vmem:[%s2] sm:$0x1]
    %v34 = vperm.slane %v32, 0
    %36 = vmatpush.msra.mxu0 %v31
    %37 = vmatpush.msra.mxu0 %v30
    %38 = vmatpush.msra.mxu0 %v29
    %39 = vmatpush.msra.mxu0 %v28
    %40 = vmatpush.msra.mxu0 %v27
    %41 = vmatpush.msra.mxu0 %v26
    %42 = vmatpush.msra.mxu0 %v25
    %43 = vmatpush.msra.mxu0 %v24
    %44 = vmatpush.msra.mxu0 %v23
    %45 = vmatpush.msra.mxu0 %v22
    %46 = vmatpush.msra.mxu0 %v21
    %47 = vmatpush.msra.mxu0 %v20
    %48 = vmatpush.msra.mxu0 %v19
    %49 = vmatpush.msra.mxu0 %v18
    %50 = vmatpush.msra.mxu0 %v17
    %51 = vmatpush.msra.mxu0 %v16
    %52 = vmatmul.f32.gmra.mxu0 %v15
    %v53 = vpop.f32.mrf.mxu0
    %v54 = vadd.f32 %v34, %v53
    %55 = vdwg.mxu0
    %vm56 = vcmask 531456
    %57 = vst.msk [vmem:[#allocation2] sm:$0xff] %vm56, %v54
    // Predicated region
    $region14: #{mrcgnn_forward.5} parent=1 // pred_check
      _
    $region15: #{mrcgnn_forward.5} parent=1 // pred_check_branch
      %59 = sbr.rel (0) target = $region17
    $region16: #{mrcgnn_forward.5} parent=1 // pred_region
      %61 = vsyncadd [#allocation3], 0
      %s63 = sshll.u32 [#allocation2], 4
      %s64 = int_to_ptr.vmem [resolvable:$true] %s63
      %s65 = sshll.u32 %s3, 4
      %s66 = int_to_ptr.hbm [resolvable:$true] %s65
      %68 = dma.vmem_to_hbm [thread:$0]  %s64, 128, %s66, [#allocation3]
    $region17: #{mrcgnn_forward.5} parent=1 // pred_fallthru
      _
    // Predicated region
    $region18: #{mrcgnn_forward.5} parent=1 // pred_check
      _
    $region19: #{mrcgnn_forward.5} parent=1 // pred_check_branch
      %70 = sbr.rel (0) target = $region21
    $region20: #{mrcgnn_forward.5} parent=1 // pred_region
      %72 = dma.done [#allocation3], 128
    $region21: #{mrcgnn_forward.5} parent=1 // pred_fallthru
      _
    %73 = vsyncpa [#allocation3], 1

// kernel: mrcgnn_forward.4
$region0: #{mrcgnn_forward.4}
  #allocation0 [shape = 'u32[]', space=smem, size = 0x4, offset = 0x4, fixed_abs, tag = 'smem constant byte address 0x4 - core index']
  #allocation1 [shape = 'u32[72,128]{1,0:T(1,128)}', space=vmem, size = 0x9000, scoped, tag = 'internal scratch']
  #allocation2 [shape = 'f32[1,1]{1,0:T(1,128)S(1)}', space=vmem, size = 0x200, scoped, tag = 'scoped memory for mrcgnn_forward.4']
  %s0 = inlined_call_operand.vmem [shape: bf16[192,2560], index: 0, kind: input, shape index: {}]
  %s1 = inlined_call_operand.vmem [shape: bf16[2560,32], index: 1, kind: input, shape index: {}]
  %s2 = inlined_call_operand.vmem [shape: f32[1,32], index: 2, kind: input, shape index: {}]
  %s3 = inlined_call_operand.vmem [shape: f32[32,32], index: 3, kind: input, shape index: {}]
  %s4 = inlined_call_operand.<no memory space> [shape: f32[1,1], index: 4, kind: input, shape index: {}]
  %s5 = inlined_call_operand.vmem [shape: f32[192,32], index: 5, kind: output, shape index: {0}]
  %s6 = inlined_call_operand.vmem [shape: f32[192,1], index: 6, kind: output, shape index: {1}]
  %7 = xla_tuple %s5, %s6
  %s8 = sld [smem:[#allocation0]]
  $region38: #{mrcgnn_forward.4} parent=0
    _
  %s10 = ssub.s32 1, %s8
  %s11 = scalar_select 0, %s10, %s8
  %v12 = vstv %s4
  %13 = vst [vmem:[#allocation2] sm:$0x1] %v12
  // Predicated region
  $region2: #{mrcgnn_forward.4} parent=0 // pred_check
    _
  $region3: #{mrcgnn_forward.4} parent=0 // pred_check_branch
    %15 = sbr.rel (0) target = $region5
  $region4: #{mrcgnn_forward.4} parent=0 // pred_region
    _
  $region5: #{mrcgnn_forward.4} parent=0 // pred_fallthru
    _
  // Predicated region
  $region6: #{mrcgnn_forward.4} parent=0 // pred_check
    _
  $region7: #{mrcgnn_forward.4} parent=0 // pred_check_branch
    %17 = sbr.rel (0) target = $region9
  $region8: #{mrcgnn_forward.4} parent=0 // pred_region
    _
  $region9: #{mrcgnn_forward.4} parent=0 // pred_fallthru
    _
  // Predicated region
  $region10: #{mrcgnn_forward.4} parent=0 // pred_check
    _
  $region11: #{mrcgnn_forward.4} parent=0 // pred_check_branch
    %19 = sbr.rel (0) target = $region13
  $region12: #{mrcgnn_forward.4} parent=0 // pred_region
    _
  $region13: #{mrcgnn_forward.4} parent=0 // pred_fallthru
    _
  // Predicated region
  $region14: #{mrcgnn_forward.4} parent=0 // pred_check
    _
  $region15: #{mrcgnn_forward.4} parent=0 // pred_check_branch
    %21 = sbr.rel (0) target = $region17
  $region16: #{mrcgnn_forward.4} parent=0 // pred_region
    _
  $region17: #{mrcgnn_forward.4} parent=0 // pred_fallthru
    _
  // Predicated region
  $region18: #{mrcgnn_forward.4} parent=0 // pred_check
    _
  $region19: #{mrcgnn_forward.4} parent=0 // pred_check_branch
    %23 = sbr.rel (0) target = $region21
  $region20: #{mrcgnn_forward.4} parent=0 // pred_region
    _
  $region21: #{mrcgnn_forward.4} parent=0 // pred_fallthru
    _
  %v24 = vld [vmem:[%s0] sm:$0xff]
  %v25 = vld [vmem:[%s0 + $0x8] sm:$0xff]
  %v26 = vld [vmem:[%s0 + $0x10] sm:$0xff]
  %v27 = vld [vmem:[%s0 + $0x18] sm:$0xff]
  %v28 = vld [vmem:[%s0 + $0x20] sm:$0xff]
  %v29 = vld [vmem:[%s0 + $0x28] sm:$0xff]
  %v30 = vld [vmem:[%s0 + $0x30] sm:$0xff]
  %v31 = vld [vmem:[%s0 + $0x38] sm:$0xff]
  %v32 = vld [vmem:[%s0 + $0x40] sm:$0xff]
  %v33 = vld [vmem:[%s0 + $0x48] sm:$0xff]
  %v34 = vld [vmem:[%s0 + $0x50] sm:$0xff]
  %v35 = vld [vmem:[%s0 + $0x58] sm:$0xff]
  %v36 = vld [vmem:[%s0 + $0x60] sm:$0xff]
  %v37 = vld [vmem:[%s0 + $0x68] sm:$0xff]
  %v38 = vld [vmem:[%s0 + $0x70] sm:$0xff]
  %v39 = vld [vmem:[%s0 + $0x78] sm:$0xff]
  %v40 = vld [vmem:[%s0 + $0x80] sm:$0xff]
  %v41 = vld [vmem:[%s0 + $0x88] sm:$0xff]
  %v42 = vld [vmem:[%s0 + $0x90] sm:$0xff]
  %v43 = vld [vmem:[%s0 + $0x98] sm:$0xff]
  %v44 = vld [vmem:[%s0 + $0xa0] sm:$0xff]
  %v45 = vld [vmem:[%s0 + $0xa8] sm:$0xff]
  %v46 = vld [vmem:[%s0 + $0xb0] sm:$0xff]
  %v47 = vld [vmem:[%s0 + $0xb8] sm:$0xff]
  %v48 = vld [vmem:[%s0 + $0xc0] sm:$0xff]
  %v49 = vld [vmem:[%s0 + $0xc8] sm:$0xff]
  %v50 = vld [vmem:[%s0 + $0xd0] sm:$0xff]
  %v51 = vld [vmem:[%s0 + $0xd8] sm:$0xff]
  %v52 = vld [vmem:[%s0 + $0xe0] sm:$0xff]
  %v53 = vld [vmem:[%s0 + $0xe8] sm:$0xff]
  %v54 = vld [vmem:[%s0 + $0xf0] sm:$0xff]
  %v55 = vld [vmem:[%s0 + $0xf8] sm:$0xff]
  %v56 = vld [vmem:[%s0 + $0x100] sm:$0xff]
  %v57 = vld [vmem:[%s0 + $0x108] sm:$0xff]
  %v58 = vld [vmem:[%s0 + $0x110] sm:$0xff]
  %v59 = vld [vmem:[%s0 + $0x118] sm:$0xff]
  %v60 = vld [vmem:[%s0 + $0x120] sm:$0xff]
  %v61 = vld [vmem:[%s0 + $0x128] sm:$0xff]
  %v62 = vld [vmem:[%s0 + $0x130] sm:$0xff]
  %v63 = vld [vmem:[%s0 + $0x138] sm:$0xff]
  %v64 = vld [vmem:[%s0 + $0x140] sm:$0xff]
  %v65 = vld [vmem:[%s0 + $0x148] sm:$0xff]
  %v66 = vld [vmem:[%s0 + $0x150] sm:$0xff]
  %v67 = vld [vmem:[%s0 + $0x158] sm:$0xff]
  %v68 = vld [vmem:[%s0 + $0x160] sm:$0xff]
  %v69 = vld [vmem:[%s0 + $0x168] sm:$0xff]
  %v70 = vld [vmem:[%s0 + $0x170] sm:$0xff]
  %v71 = vld [vmem:[%s0 + $0x178] sm:$0xff]
  %v72 = vld [vmem:[%s0 + $0x180] sm:$0xff]
  %v73 = vld [vmem:[%s0 + $0x188] sm:$0xff]
  %v74 = vld [vmem:[%s0 + $0x190] sm:$0xff]
  %v75 = vld [vmem:[%s0 + $0x198] sm:$0xff]
  %v76 = vld [vmem:[%s0 + $0x1a0] sm:$0xff]
  %v77 = vld [vmem:[%s0 + $0x1a8] sm:$0xff]
  %v78 = vld [vmem:[%s0 + $0x1b0] sm:$0xff]
  %v79 = vld [vmem:[%s0 + $0x1b8] sm:$0xff]
  %v80 = vld [vmem:[%s0 + $0x1c0] sm:$0xff]
  %v81 = vld [vmem:[%s0 + $0x1c8] sm:$0xff]
  %v82 = vld [vmem:[%s0 + $0x1d0] sm:$0xff]
  %v83 = vld [vmem:[%s0 + $0x1d8] sm:$0xff]
  %v84 = vld [vmem:[%s0 + $0x1e0] sm:$0xff]
  %v85 = vld [vmem:[%s0 + $0x1e8] sm:$0xff]
  %v86 = vld [vmem:[%s0 + $0x1f0] sm:$0xff]
  %v87 = vld [vmem:[%s0 + $0x1f8] sm:$0xff]
  %v88 = vld [vmem:[%s0 + $0x200] sm:$0xff]
  %v89 = vld [vmem:[%s0 + $0x208] sm:$0xff]
  %v90 = vld [vmem:[%s0 + $0x210] sm:$0xff]
  %v91 = vld [vmem:[%s0 + $0x218] sm:$0xff]
  %v92 = vld [vmem:[%s0 + $0x220] sm:$0xff]
  %v93 = vld [vmem:[%s0 + $0x228] sm:$0xff]
  %v94 = vld [vmem:[%s0 + $0x230] sm:$0xff]
  %v95 = vld [vmem:[%s0 + $0x238] sm:$0xff]
  %v96 = vld [vmem:[%s0 + $0x240] sm:$0xff]
  %v97 = vld [vmem:[%s0 + $0x248] sm:$0xff]
  %v98 = vld [vmem:[%s0 + $0x250] sm:$0xff]
  %v99 = vld [vmem:[%s0 + $0x258] sm:$0xff]
  %v100 = vld [vmem:[%s0 + $0x260] sm:$0xff]
  %v101 = vld [vmem:[%s0 + $0x268] sm:$0xff]
  %v102 = vld [vmem:[%s0 + $0x270] sm:$0xff]
  %v103 = vld [vmem:[%s0 + $0x278] sm:$0xff]
  %v104 = vld [vmem:[%s0 + $0x280] sm:$0xff]
  %v105 = vld [vmem:[%s0 + $0x288] sm:$0xff]
  %v106 = vld [vmem:[%s0 + $0x290] sm:$0xff]
  %v107 = vld [vmem:[%s0 + $0x298] sm:$0xff]
  %v108 = vld [vmem:[%s0 + $0x2a0] sm:$0xff]
  %v109 = vld [vmem:[%s0 + $0x2a8] sm:$0xff]
  %v110 = vld [vmem:[%s0 + $0x2b0] sm:$0xff]
  %v111 = vld [vmem:[%s0 + $0x2b8] sm:$0xff]
  %v112 = vld [vmem:[%s0 + $0x2c0] sm:$0xff]
  %v113 = vld [vmem:[%s0 + $0x2c8] sm:$0xff]
  %v114 = vld [vmem:[%s0 + $0x2d0] sm:$0xff]
  %v115 = vld [vmem:[%s0 + $0x2d8] sm:$0xff]
  %v116 = vld [vmem:[%s0 + $0x2e0] sm:$0xff]
  %v117 = vld [vmem:[%s0 + $0x2e8] sm:$0xff]
  %v118 = vld [vmem:[%s0 + $0x2f0] sm:$0xff]
  %v119 = vld [vmem:[%s0 + $0x2f8] sm:$0xff]
  %v120 = vld [vmem:[%s0 + $0x300] sm:$0xff]
  %v121 = vld [vmem:[%s0 + $0x308] sm:$0xff]
  %v122 = vld [vmem:[%s0 + $0x310] sm:$0xff]
  %v123 = vld [vmem:[%s0 + $0x318] sm:$0xff]
  %v124 = vld [vmem:[%s0 + $0x320] sm:$0xff]
  %v125 = vld [vmem:[%s0 + $0x328] sm:$0xff]
  %v126 = vld [vmem:[%s0 + $0x330] sm:$0xff]
  %v127 = vld [vmem:[%s0 + $0x338] sm:$0xff]
  %v128 = vld [vmem:[%s0 + $0x340] sm:$0xff]
  %v129 = vld [vmem:[%s0 + $0x348] sm:$0xff]
  %v130 = vld [vmem:[%s0 + $0x350] sm:$0xff]
  %v131 = vld [vmem:[%s0 + $0x358] sm:$0xff]
  %v132 = vld [vmem:[%s0 + $0x360] sm:$0xff]
  %v133 = vld [vmem:[%s0 + $0x368] sm:$0xff]
  %v134 = vld [vmem:[%s0 + $0x370] sm:$0xff]
  %v135 = vld [vmem:[%s0 + $0x378] sm:$0xff]
  %v136 = vld [vmem:[%s0 + $0x380] sm:$0xff]
  %v137 = vld [vmem:[%s0 + $0x388] sm:$0xff]
  %v138 = vld [vmem:[%s0 + $0x390] sm:$0xff]
  %v139 = vld [vmem:[%s0 + $0x398] sm:$0xff]
  %v140 = vld [vmem:[%s0 + $0x3a0] sm:$0xff]
  %v141 = vld [vmem:[%s0 + $0x3a8] sm:$0xff]
  %v142 = vld [vmem:[%s0 + $0x3b0] sm:$0xff]
  %v143 = vld [vmem:[%s0 + $0x3b8] sm:$0xff]
  %v144 = vld [vmem:[%s0 + $0x3c0] sm:$0xff]
  %v145 = vld [vmem:[%s0 + $0x3c8] sm:$0xff]
  %v146 = vld [vmem:[%s0 + $0x3d0] sm:$0xff]
  %v147 = vld [vmem:[%s0 + $0x3d8] sm:$0xff]
  %v148 = vld [vmem:[%s0 + $0x3e0] sm:$0xff]
  %v149 = vld [vmem:[%s0 + $0x3e8] sm:$0xff]
  %v150 = vld [vmem:[%s0 + $0x3f0] sm:$0xff]
  %v151 = vld [vmem:[%s0 + $0x3f8] sm:$0xff]
  %v152 = vld [vmem:[%s0 + $0x400] sm:$0xff]
  %v153 = vld [vmem:[%s0 + $0x408] sm:$0xff]
  %v154 = vld [vmem:[%s0 + $0x410] sm:$0xff]
  %v155 = vld [vmem:[%s0 + $0x418] sm:$0xff]
  %v156 = vld [vmem:[%s0 + $0x420] sm:$0xff]
  %v157 = vld [vmem:[%s0 + $0x428] sm:$0xff]
  %v158 = vld [vmem:[%s0 + $0x430] sm:$0xff]
  %v159 = vld [vmem:[%s0 + $0x438] sm:$0xff]
  %v160 = vld [vmem:[%s0 + $0x440] sm:$0xff]
  %v161 = vld [vmem:[%s0 + $0x448] sm:$0xff]
  %v162 = vld [vmem:[%s0 + $0x450] sm:$0xff]
  %v163 = vld [vmem:[%s0 + $0x458] sm:$0xff]
  %v164 = vld [vmem:[%s0 + $0x460] sm:$0xff]
  %v165 = vld [vmem:[%s0 + $0x468] sm:$0xff]
  %v166 = vld [vmem:[%s0 + $0x470] sm:$0xff]
  %v167 = vld [vmem:[%s0 + $0x478] sm:$0xff]
  %v168 = vld [vmem:[%s0 + $0x480] sm:$0xff]
  %v169 = vld [vmem:[%s0 + $0x488] sm:$0xff]
  %v170 = vld [vmem:[%s0 + $0x490] sm:$0xff]
  %v171 = vld [vmem:[%s0 + $0x498] sm:$0xff]
  %v172 = vld [vmem:[%s0 + $0x4a0] sm:$0xff]
  %v173 = vld [vmem:[%s0 + $0x4a8] sm:$0xff]
  %v174 = vld [vmem:[%s0 + $0x4b0] sm:$0xff]
  %v175 = vld [vmem:[%s0 + $0x4b8] sm:$0xff]
  %v176 = vld [vmem:[%s0 + $0x4c0] sm:$0xff]
  %v177 = vld [vmem:[%s0 + $0x4c8] sm:$0xff]
  %v178 = vld [vmem:[%s0 + $0x4d0] sm:$0xff]
  %v179 = vld [vmem:[%s0 + $0x4d8] sm:$0xff]
  %v180 = vld [vmem:[%s0 + $0x4e0] sm:$0xff]
  %v181 = vld [vmem:[%s0 + $0x4e8] sm:$0xff]
  %v182 = vld [vmem:[%s0 + $0x4f0] sm:$0xff]
  %v183 = vld [vmem:[%s0 + $0x4f8] sm:$0xff]
  %v184 = vld [vmem:[%s0 + $0x500] sm:$0xff]
  %v185 = vld [vmem:[%s0 + $0x508] sm:$0xff]
  %v186 = vld [vmem:[%s0 + $0x510] sm:$0xff]
  %v187 = vld [vmem:[%s0 + $0x518] sm:$0xff]
  %v188 = vld [vmem:[%s0 + $0x520] sm:$0xff]
  %v189 = vld [vmem:[%s0 + $0x528] sm:$0xff]
  %v190 = vld [vmem:[%s0 + $0x530] sm:$0xff]
  %v191 = vld [vmem:[%s0 + $0x538] sm:$0xff]
  %v192 = vld [vmem:[%s0 + $0x540] sm:$0xff]
  %v193 = vld [vmem:[%s0 + $0x548] sm:$0xff]
  %v194 = vld [vmem:[%s0 + $0x550] sm:$0xff]
  %v195 = vld [vmem:[%s0 + $0x558] sm:$0xff]
  %v196 = vld [vmem:[%s0 + $0x560] sm:$0xff]
  %v197 = vld [vmem:[%s0 + $0x568] sm:$0xff]
  %v198 = vld [vmem:[%s0 + $0x570] sm:$0xff]
  %v199 = vld [vmem:[%s0 + $0x578] sm:$0xff]
  %v200 = vld [vmem:[%s0 + $0x580] sm:$0xff]
  %v201 = vld [vmem:[%s0 + $0x588] sm:$0xff]
  %v202 = vld [vmem:[%s0 + $0x590] sm:$0xff]
  %v203 = vld [vmem:[%s0 + $0x598] sm:$0xff]
  %v204 = vld [vmem:[%s0 + $0x5a0] sm:$0xff]
  %v205 = vld [vmem:[%s0 + $0x5a8] sm:$0xff]
  %v206 = vld [vmem:[%s0 + $0x5b0] sm:$0xff]
  %v207 = vld [vmem:[%s0 + $0x5b8] sm:$0xff]
  %v208 = vld [vmem:[%s0 + $0x5c0] sm:$0xff]
  %v209 = vld [vmem:[%s0 + $0x5c8] sm:$0xff]
  %v210 = vld [vmem:[%s0 + $0x5d0] sm:$0xff]
  %v211 = vld [vmem:[%s0 + $0x5d8] sm:$0xff]
  %v212 = vld [vmem:[%s0 + $0x5e0] sm:$0xff]
  %v213 = vld [vmem:[%s0 + $0x5e8] sm:$0xff]
  %v214 = vld [vmem:[%s0 + $0x5f0] sm:$0xff]
  %v215 = vld [vmem:[%s0 + $0x5f8] sm:$0xff]
  %v216 = vld [vmem:[%s0 + $0x600] sm:$0xff]
  %v217 = vld [vmem:[%s0 + $0x608] sm:$0xff]
  %v218 = vld [vmem:[%s0 + $0x610] sm:$0xff]
  %v219 = vld [vmem:[%s0 + $0x618] sm:$0xff]
  %v220 = vld [vmem:[%s0 + $0x620] sm:$0xff]
  %v221 = vld [vmem:[%s0 + $0x628] sm:$0xff]
  %v222 = vld [vmem:[%s0 + $0x630] sm:$0xff]
  %v223 = vld [vmem:[%s0 + $0x638] sm:$0xff]
  %v224 = vld [vmem:[%s0 + $0x640] sm:$0xff]
  %v225 = vld [vmem:[%s0 + $0x648] sm:$0xff]
  %v226 = vld [vmem:[%s0 + $0x650] sm:$0xff]
  %v227 = vld [vmem:[%s0 + $0x658] sm:$0xff]
  %v228 = vld [vmem:[%s0 + $0x660] sm:$0xff]
  %v229 = vld [vmem:[%s0 + $0x668] sm:$0xff]
  %v230 = vld [vmem:[%s0 + $0x670] sm:$0xff]
  %v231 = vld [vmem:[%s0 + $0x678] sm:$0xff]
  %v232 = vld [vmem:[%s0 + $0x680] sm:$0xff]
  %v233 = vld [vmem:[%s0 + $0x688] sm:$0xff]
  %v234 = vld [vmem:[%s0 + $0x690] sm:$0xff]
  %v235 = vld [vmem:[%s0 + $0x698] sm:$0xff]
  %v236 = vld [vmem:[%s0 + $0x6a0] sm:$0xff]
  %v237 = vld [vmem:[%s0 + $0x6a8] sm:$0xff]
  %v238 = vld [vmem:[%s0 + $0x6b0] sm:$0xff]
  %v239 = vld [vmem:[%s0 + $0x6b8] sm:$0xff]
  %v240 = vld [vmem:[%s0 + $0x6c0] sm:$0xff]
  %v241 = vld [vmem:[%s0 + $0x6c8] sm:$0xff]
  %v242 = vld [vmem:[%s0 + $0x6d0] sm:$0xff]
  %v243 = vld [vmem:[%s0 + $0x6d8] sm:$0xff]
  %v244 = vld [vmem:[%s0 + $0x6e0] sm:$0xff]
  %v245 = vld [vmem:[%s0 + $0x6e8] sm:$0xff]
  %v246 = vld [vmem:[%s0 + $0x6f0] sm:$0xff]
  %v247 = vld [vmem:[%s0 + $0x6f8] sm:$0xff]
  %v248 = vld [vmem:[%s0 + $0x700] sm:$0xff]
  %v249 = vld [vmem:[%s0 + $0x708] sm:$0xff]
  %v250 = vld [vmem:[%s0 + $0x710] sm:$0xff]
  %v251 = vld [vmem:[%s0 + $0x718] sm:$0xff]
  %v252 = vld [vmem:[%s0 + $0x720] sm:$0xff]
  %v253 = vld [vmem:[%s0 + $0x728] sm:$0xff]
  %v254 = vld [vmem:[%s0 + $0x730] sm:$0xff]
  %v255 = vld [vmem:[%s0 + $0x738] sm:$0xff]
  %v256 = vld [vmem:[%s0 + $0x740] sm:$0xff]
  %v257 = vld [vmem:[%s0 + $0x748] sm:$0xff]
  %v258 = vld [vmem:[%s0 + $0x750] sm:$0xff]
  %v259 = vld [vmem:[%s0 + $0x758] sm:$0xff]
  %v260 = vld [vmem:[%s0 + $0x760] sm:$0xff]
  %v261 = vld [vmem:[%s0 + $0x768] sm:$0xff]
  %v262 = vld [vmem:[%s0 + $0x770] sm:$0xff]
  %v263 = vld [vmem:[%s0 + $0x778] sm:$0xff]
  %v264 = vld [vmem:[%s1] sm:$0xf]
  %v265 = vld [vmem:[%s1 + $0x4] sm:$0xf]
  %v266 = vld [vmem:[%s1 + $0x8] sm:$0xf]
  %v267 = vld [vmem:[%s1 + $0xc] sm:$0xf]
  %v268 = vld [vmem:[%s1 + $0x10] sm:$0xf]
  %v269 = vld [vmem:[%s1 + $0x14] sm:$0xf]
  %v270 = vld [vmem:[%s1 + $0x18] sm:$0xf]
  %v271 = vld [vmem:[%s1 + $0x1c] sm:$0xf]
  %v272 = vld [vmem:[%s1 + $0x20] sm:$0xf]
  %v273 = vld [vmem:[%s1 + $0x24] sm:$0xf]
  %v274 = vld [vmem:[%s1 + $0x28] sm:$0xf]
  %v275 = vld [vmem:[%s1 + $0x2c] sm:$0xf]
  %v276 = vld [vmem:[%s1 + $0x30] sm:$0xf]
  %v277 = vld [vmem:[%s1 + $0x34] sm:$0xf]
  %v278 = vld [vmem:[%s1 + $0x38] sm:$0xf]
  %v279 = vld [vmem:[%s1 + $0x3c] sm:$0xf]
  %v280 = vld [vmem:[%s1 + $0x40] sm:$0xf]
  %v281 = vld [vmem:[%s1 + $0x44] sm:$0xf]
  %v282 = vld [vmem:[%s1 + $0x48] sm:$0xf]
  %v283 = vld [vmem:[%s1 + $0x4c] sm:$0xf]
  %v284 = vld [vmem:[%s1 + $0x50] sm:$0xf]
  %v285 = vld [vmem:[%s1 + $0x54] sm:$0xf]
  %v286 = vld [vmem:[%s1 + $0x58] sm:$0xf]
  %v287 = vld [vmem:[%s1 + $0x5c] sm:$0xf]
  %v288 = vld [vmem:[%s1 + $0x60] sm:$0xf]
  %v289 = vld [vmem:[%s1 + $0x64] sm:$0xf]
  %v290 = vld [vmem:[%s1 + $0x68] sm:$0xf]
  %v291 = vld [vmem:[%s1 + $0x6c] sm:$0xf]
  %v292 = vld [vmem:[%s1 + $0x70] sm:$0xf]
  %v293 = vld [vmem:[%s1 + $0x74] sm:$0xf]
  %v294 = vld [vmem:[%s1 + $0x78] sm:$0xf]
  %v295 = vld [vmem:[%s1 + $0x7c] sm:$0xf]
  %v296 = vld [vmem:[%s1 + $0x80] sm:$0xf]
  %v297 = vld [vmem:[%s1 + $0x84] sm:$0xf]
  %v298 = vld [vmem:[%s1 + $0x88] sm:$0xf]
  %v299 = vld [vmem:[%s1 + $0x8c] sm:$0xf]
  %v300 = vld [vmem:[%s1 + $0x90] sm:$0xf]
  %v301 = vld [vmem:[%s1 + $0x94] sm:$0xf]
  %v302 = vld [vmem:[%s1 + $0x98] sm:$0xf]
  %v303 = vld [vmem:[%s1 + $0x9c] sm:$0xf]
  %v304 = vld [vmem:[%s1 + $0xa0] sm:$0xf]
  %v305 = vld [vmem:[%s1 + $0xa4] sm:$0xf]
  %v306 = vld [vmem:[%s1 + $0xa8] sm:$0xf]
  %v307 = vld [vmem:[%s1 + $0xac] sm:$0xf]
  %v308 = vld [vmem:[%s1 + $0xb0] sm:$0xf]
  %v309 = vld [vmem:[%s1 + $0xb4] sm:$0xf]
  %v310 = vld [vmem:[%s1 + $0xb8] sm:$0xf]
  %v311 = vld [vmem:[%s1 + $0xbc] sm:$0xf]
  %v312 = vld [vmem:[%s1 + $0xc0] sm:$0xf]
  %v313 = vld [vmem:[%s1 + $0xc4] sm:$0xf]
  %v314 = vld [vmem:[%s1 + $0xc8] sm:$0xf]
  %v315 = vld [vmem:[%s1 + $0xcc] sm:$0xf]
  %v316 = vld [vmem:[%s1 + $0xd0] sm:$0xf]
  %v317 = vld [vmem:[%s1 + $0xd4] sm:$0xf]
  %v318 = vld [vmem:[%s1 + $0xd8] sm:$0xf]
  %v319 = vld [vmem:[%s1 + $0xdc] sm:$0xf]
  %v320 = vld [vmem:[%s1 + $0xe0] sm:$0xf]
  %v321 = vld [vmem:[%s1 + $0xe4] sm:$0xf]
  %v322 = vld [vmem:[%s1 + $0xe8] sm:$0xf]
  %v323 = vld [vmem:[%s1 + $0xec] sm:$0xf]
  %v324 = vld [vmem:[%s1 + $0xf0] sm:$0xf]
  %v325 = vld [vmem:[%s1 + $0xf4] sm:$0xf]
  %v326 = vld [vmem:[%s1 + $0xf8] sm:$0xf]
  %v327 = vld [vmem:[%s1 + $0xfc] sm:$0xf]
  %v328 = vld [vmem:[%s1 + $0x100] sm:$0xf]
  %v329 = vld [vmem:[%s1 + $0x104] sm:$0xf]
  %v330 = vld [vmem:[%s1 + $0x108] sm:$0xf]
  %v331 = vld [vmem:[%s1 + $0x10c] sm:$0xf]
  %v332 = vld [vmem:[%s1 + $0x110] sm:$0xf]
  %v333 = vld [vmem:[%s1 + $0x114] sm:$0xf]
  %v334 = vld [vmem:[%s1 + $0x118] sm:$0xf]
  %v335 = vld [vmem:[%s1 + $0x11c] sm:$0xf]
  %v336 = vld [vmem:[%s1 + $0x120] sm:$0xf]
  %v337 = vld [vmem:[%s1 + $0x124] sm:$0xf]
  %v338 = vld [vmem:[%s1 + $0x128] sm:$0xf]
  %v339 = vld [vmem:[%s1 + $0x12c] sm:$0xf]
  %v340 = vld [vmem:[%s1 + $0x130] sm:$0xf]
  %v341 = vld [vmem:[%s1 + $0x134] sm:$0xf]
  %v342 = vld [vmem:[%s1 + $0x138] sm:$0xf]
  %v343 = vld [vmem:[%s1 + $0x13c] sm:$0xf]
  %v344 = vld [vmem:[%s1 + $0x140] sm:$0xf]
  %v345 = vld [vmem:[%s1 + $0x144] sm:$0xf]
  %v346 = vld [vmem:[%s1 + $0x148] sm:$0xf]
  %v347 = vld [vmem:[%s1 + $0x14c] sm:$0xf]
  %v348 = vld [vmem:[%s1 + $0x150] sm:$0xf]
  %v349 = vld [vmem:[%s1 + $0x154] sm:$0xf]
  %v350 = vld [vmem:[%s1 + $0x158] sm:$0xf]
  %v351 = vld [vmem:[%s1 + $0x15c] sm:$0xf]
  %v352 = vld [vmem:[%s1 + $0x160] sm:$0xf]
  %v353 = vld [vmem:[%s1 + $0x164] sm:$0xf]
  %v354 = vld [vmem:[%s1 + $0x168] sm:$0xf]
  %v355 = vld [vmem:[%s1 + $0x16c] sm:$0xf]
  %v356 = vld [vmem:[%s1 + $0x170] sm:$0xf]
  %v357 = vld [vmem:[%s1 + $0x174] sm:$0xf]
  %v358 = vld [vmem:[%s1 + $0x178] sm:$0xf]
  %v359 = vld [vmem:[%s1 + $0x17c] sm:$0xf]
  %v360 = vld [vmem:[%s1 + $0x180] sm:$0xf]
  %v361 = vld [vmem:[%s1 + $0x184] sm:$0xf]
  %v362 = vld [vmem:[%s1 + $0x188] sm:$0xf]
  %v363 = vld [vmem:[%s1 + $0x18c] sm:$0xf]
  %v364 = vld [vmem:[%s1 + $0x190] sm:$0xf]
  %v365 = vld [vmem:[%s1 + $0x194] sm:$0xf]
  %v366 = vld [vmem:[%s1 + $0x198] sm:$0xf]
  %v367 = vld [vmem:[%s1 + $0x19c] sm:$0xf]
  %v368 = vld [vmem:[%s1 + $0x1a0] sm:$0xf]
  %v369 = vld [vmem:[%s1 + $0x1a4] sm:$0xf]
  %v370 = vld [vmem:[%s1 + $0x1a8] sm:$0xf]
  %v371 = vld [vmem:[%s1 + $0x1ac] sm:$0xf]
  %v372 = vld [vmem:[%s1 + $0x1b0] sm:$0xf]
  %v373 = vld [vmem:[%s1 + $0x1b4] sm:$0xf]
  %v374 = vld [vmem:[%s1 + $0x1b8] sm:$0xf]
  %v375 = vld [vmem:[%s1 + $0x1bc] sm:$0xf]
  %v376 = vld [vmem:[%s1 + $0x1c0] sm:$0xf]
  %v377 = vld [vmem:[%s1 + $0x1c4] sm:$0xf]
  %v378 = vld [vmem:[%s1 + $0x1c8] sm:$0xf]
  %v379 = vld [vmem:[%s1 + $0x1cc] sm:$0xf]
  %v380 = vld [vmem:[%s1 + $0x1d0] sm:$0xf]
  %v381 = vld [vmem:[%s1 + $0x1d4] sm:$0xf]
  %v382 = vld [vmem:[%s1 + $0x1d8] sm:$0xf]
  %v383 = vld [vmem:[%s1 + $0x1dc] sm:$0xf]
  %v384 = vld [vmem:[%s1 + $0x1e0] sm:$0xf]
  %v385 = vld [vmem:[%s1 + $0x1e4] sm:$0xf]
  %v386 = vld [vmem:[%s1 + $0x1e8] sm:$0xf]
  %v387 = vld [vmem:[%s1 + $0x1ec] sm:$0xf]
  %v388 = vld [vmem:[%s1 + $0x1f0] sm:$0xf]
  %v389 = vld [vmem:[%s1 + $0x1f4] sm:$0xf]
  %v390 = vld [vmem:[%s1 + $0x1f8] sm:$0xf]
  %v391 = vld [vmem:[%s1 + $0x1fc] sm:$0xf]
  %v392 = vld [vmem:[%s1 + $0x200] sm:$0xf]
  %v393 = vld [vmem:[%s1 + $0x204] sm:$0xf]
  %v394 = vld [vmem:[%s1 + $0x208] sm:$0xf]
  %v395 = vld [vmem:[%s1 + $0x20c] sm:$0xf]
  %v396 = vld [vmem:[%s1 + $0x210] sm:$0xf]
  %v397 = vld [vmem:[%s1 + $0x214] sm:$0xf]
  %v398 = vld [vmem:[%s1 + $0x218] sm:$0xf]
  %v399 = vld [vmem:[%s1 + $0x21c] sm:$0xf]
  %v400 = vld [vmem:[%s1 + $0x220] sm:$0xf]
  %v401 = vld [vmem:[%s1 + $0x224] sm:$0xf]
  %v402 = vld [vmem:[%s1 + $0x228] sm:$0xf]
  %v403 = vld [vmem:[%s1 + $0x22c] sm:$0xf]
  %v404 = vld [vmem:[%s1 + $0x230] sm:$0xf]
  %v405 = vld [vmem:[%s1 + $0x234] sm:$0xf]
  %v406 = vld [vmem:[%s1 + $0x238] sm:$0xf]
  %v407 = vld [vmem:[%s1 + $0x23c] sm:$0xf]
  %v408 = vld [vmem:[%s1 + $0x240] sm:$0xf]
  %v409 = vld [vmem:[%s1 + $0x244] sm:$0xf]
  %v410 = vld [vmem:[%s1 + $0x248] sm:$0xf]
  %v411 = vld [vmem:[%s1 + $0x24c] sm:$0xf]
  %v412 = vld [vmem:[%s1 + $0x250] sm:$0xf]
  %v413 = vld [vmem:[%s1 + $0x254] sm:$0xf]
  %v414 = vld [vmem:[%s1 + $0x258] sm:$0xf]
  %v415 = vld [vmem:[%s1 + $0x25c] sm:$0xf]
  %v416 = vld [vmem:[%s1 + $0x260] sm:$0xf]
  %v417 = vld [vmem:[%s1 + $0x264] sm:$0xf]
  %v418 = vld [vmem:[%s1 + $0x268] sm:$0xf]
  %v419 = vld [vmem:[%s1 + $0x26c] sm:$0xf]
  %v420 = vld [vmem:[%s1 + $0x270] sm:$0xf]
  %v421 = vld [vmem:[%s1 + $0x274] sm:$0xf]
  %v422 = vld [vmem:[%s1 + $0x278] sm:$0xf]
  %v423 = vld [vmem:[%s1 + $0x27c] sm:$0xf]
  %v424 = vld [vmem:[%s1 + $0x280] sm:$0xf]
  %v425 = vld [vmem:[%s1 + $0x284] sm:$0xf]
  %v426 = vld [vmem:[%s1 + $0x288] sm:$0xf]
  %v427 = vld [vmem:[%s1 + $0x28c] sm:$0xf]
  %v428 = vld [vmem:[%s1 + $0x290] sm:$0xf]
  %v429 = vld [vmem:[%s1 + $0x294] sm:$0xf]
  %v430 = vld [vmem:[%s1 + $0x298] sm:$0xf]
  %v431 = vld [vmem:[%s1 + $0x29c] sm:$0xf]
  %v432 = vld [vmem:[%s1 + $0x2a0] sm:$0xf]
  %v433 = vld [vmem:[%s1 + $0x2a4] sm:$0xf]
  %v434 = vld [vmem:[%s1 + $0x2a8] sm:$0xf]
  %v435 = vld [vmem:[%s1 + $0x2ac] sm:$0xf]
  %v436 = vld [vmem:[%s1 + $0x2b0] sm:$0xf]
  %v437 = vld [vmem:[%s1 + $0x2b4] sm:$0xf]
  %v438 = vld [vmem:[%s1 + $0x2b8] sm:$0xf]
  %v439 = vld [vmem:[%s1 + $0x2bc] sm:$0xf]
  %v440 = vld [vmem:[%s1 + $0x2c0] sm:$0xf]
  %v441 = vld [vmem:[%s1 + $0x2c4] sm:$0xf]
  %v442 = vld [vmem:[%s1 + $0x2c8] sm:$0xf]
  %v443 = vld [vmem:[%s1 + $0x2cc] sm:$0xf]
  %v444 = vld [vmem:[%s1 + $0x2d0] sm:$0xf]
  %v445 = vld [vmem:[%s1 + $0x2d4] sm:$0xf]
  %v446 = vld [vmem:[%s1 + $0x2d8] sm:$0xf]
  %v447 = vld [vmem:[%s1 + $0x2dc] sm:$0xf]
  %v448 = vld [vmem:[%s1 + $0x2e0] sm:$0xf]
  %v449 = vld [vmem:[%s1 + $0x2e4] sm:$0xf]
  %v450 = vld [vmem:[%s1 + $0x2e8] sm:$0xf]
  %v451 = vld [vmem:[%s1 + $0x2ec] sm:$0xf]
  %v452 = vld [vmem:[%s1 + $0x2f0] sm:$0xf]
  %v453 = vld [vmem:[%s1 + $0x2f4] sm:$0xf]
  %v454 = vld [vmem:[%s1 + $0x2f8] sm:$0xf]
  %v455 = vld [vmem:[%s1 + $0x2fc] sm:$0xf]
  %v456 = vld [vmem:[%s1 + $0x300] sm:$0xf]
  %v457 = vld [vmem:[%s1 + $0x304] sm:$0xf]
  %v458 = vld [vmem:[%s1 + $0x308] sm:$0xf]
  %v459 = vld [vmem:[%s1 + $0x30c] sm:$0xf]
  %v460 = vld [vmem:[%s1 + $0x310] sm:$0xf]
  %v461 = vld [vmem:[%s1 + $0x314] sm:$0xf]
  %v462 = vld [vmem:[%s1 + $0x318] sm:$0xf]
  %v463 = vld [vmem:[%s1 + $0x31c] sm:$0xf]
  %v464 = vld [vmem:[%s1 + $0x320] sm:$0xf]
  %v465 = vld [vmem:[%s1 + $0x324] sm:$0xf]
  %v466 = vld [vmem:[%s1 + $0x328] sm:$0xf]
  %v467 = vld [vmem:[%s1 + $0x32c] sm:$0xf]
  %v468 = vld [vmem:[%s1 + $0x330] sm:$0xf]
  %v469 = vld [vmem:[%s1 + $0x334] sm:$0xf]
  %v470 = vld [vmem:[%s1 + $0x338] sm:$0xf]
  %v471 = vld [vmem:[%s1 + $0x33c] sm:$0xf]
  %v472 = vld [vmem:[%s1 + $0x340] sm:$0xf]
  %v473 = vld [vmem:[%s1 + $0x344] sm:$0xf]
  %v474 = vld [vmem:[%s1 + $0x348] sm:$0xf]
  %v475 = vld [vmem:[%s1 + $0x34c] sm:$0xf]
  %v476 = vld [vmem:[%s1 + $0x350] sm:$0xf]
  %v477 = vld [vmem:[%s1 + $0x354] sm:$0xf]
  %v478 = vld [vmem:[%s1 + $0x358] sm:$0xf]
  %v479 = vld [vmem:[%s1 + $0x35c] sm:$0xf]
  %v480 = vld [vmem:[%s1 + $0x360] sm:$0xf]
  %v481 = vld [vmem:[%s1 + $0x364] sm:$0xf]
  %v482 = vld [vmem:[%s1 + $0x368] sm:$0xf]
  %v483 = vld [vmem:[%s1 + $0x36c] sm:$0xf]
  %v484 = vld [vmem:[%s1 + $0x370] sm:$0xf]
  %v485 = vld [vmem:[%s1 + $0x374] sm:$0xf]
  %v486 = vld [vmem:[%s1 + $0x378] sm:$0xf]
  %v487 = vld [vmem:[%s1 + $0x37c] sm:$0xf]
  %v488 = vld [vmem:[%s1 + $0x380] sm:$0xf]
  %v489 = vld [vmem:[%s1 + $0x384] sm:$0xf]
  %v490 = vld [vmem:[%s1 + $0x388] sm:$0xf]
  %v491 = vld [vmem:[%s1 + $0x38c] sm:$0xf]
  %v492 = vld [vmem:[%s1 + $0x390] sm:$0xf]
  %v493 = vld [vmem:[%s1 + $0x394] sm:$0xf]
  %v494 = vld [vmem:[%s1 + $0x398] sm:$0xf]
  %v495 = vld [vmem:[%s1 + $0x39c] sm:$0xf]
  %v496 = vld [vmem:[%s1 + $0x3a0] sm:$0xf]
  %v497 = vld [vmem:[%s1 + $0x3a4] sm:$0xf]
  %v498 = vld [vmem:[%s1 + $0x3a8] sm:$0xf]
  %v499 = vld [vmem:[%s1 + $0x3ac] sm:$0xf]
  %v500 = vld [vmem:[%s1 + $0x3b0] sm:$0xf]
  %v501 = vld [vmem:[%s1 + $0x3b4] sm:$0xf]
  %v502 = vld [vmem:[%s1 + $0x3b8] sm:$0xf]
  %v503 = vld [vmem:[%s1 + $0x3bc] sm:$0xf]
  %v504 = vld [vmem:[%s1 + $0x3c0] sm:$0xf]
  %v505 = vld [vmem:[%s1 + $0x3c4] sm:$0xf]
  %v506 = vld [vmem:[%s1 + $0x3c8] sm:$0xf]
  %v507 = vld [vmem:[%s1 + $0x3cc] sm:$0xf]
  %v508 = vld [vmem:[%s1 + $0x3d0] sm:$0xf]
  %v509 = vld [vmem:[%s1 + $0x3d4] sm:$0xf]
  %v510 = vld [vmem:[%s1 + $0x3d8] sm:$0xf]
  %v511 = vld [vmem:[%s1 + $0x3dc] sm:$0xf]
  %v512 = vld [vmem:[%s1 + $0x3e0] sm:$0xf]
  %v513 = vld [vmem:[%s1 + $0x3e4] sm:$0xf]
  %v514 = vld [vmem:[%s1 + $0x3e8] sm:$0xf]
  %v515 = vld [vmem:[%s1 + $0x3ec] sm:$0xf]
  %v516 = vld [vmem:[%s1 + $0x3f0] sm:$0xf]
  %v517 = vld [vmem:[%s1 + $0x3f4] sm:$0xf]
  %v518 = vld [vmem:[%s1 + $0x3f8] sm:$0xf]
  %v519 = vld [vmem:[%s1 + $0x3fc] sm:$0xf]
  %v520 = vld [vmem:[%s1 + $0x400] sm:$0xf]
  %v521 = vld [vmem:[%s1 + $0x404] sm:$0xf]
  %v522 = vld [vmem:[%s1 + $0x408] sm:$0xf]
  %v523 = vld [vmem:[%s1 + $0x40c] sm:$0xf]
  %v524 = vld [vmem:[%s1 + $0x410] sm:$0xf]
  %v525 = vld [vmem:[%s1 + $0x414] sm:$0xf]
  %v526 = vld [vmem:[%s1 + $0x418] sm:$0xf]
  %v527 = vld [vmem:[%s1 + $0x41c] sm:$0xf]
  %v528 = vld [vmem:[%s1 + $0x420] sm:$0xf]
  %v529 = vld [vmem:[%s1 + $0x424] sm:$0xf]
  %v530 = vld [vmem:[%s1 + $0x428] sm:$0xf]
  %v531 = vld [vmem:[%s1 + $0x42c] sm:$0xf]
  %v532 = vld [vmem:[%s1 + $0x430] sm:$0xf]
  %v533 = vld [vmem:[%s1 + $0x434] sm:$0xf]
  %v534 = vld [vmem:[%s1 + $0x438] sm:$0xf]
  %v535 = vld [vmem:[%s1 + $0x43c] sm:$0xf]
  %v536 = vld [vmem:[%s1 + $0x440] sm:$0xf]
  %v537 = vld [vmem:[%s1 + $0x444] sm:$0xf]
  %v538 = vld [vmem:[%s1 + $0x448] sm:$0xf]
  %v539 = vld [vmem:[%s1 + $0x44c] sm:$0xf]
  %v540 = vld [vmem:[%s1 + $0x450] sm:$0xf]
  %v541 = vld [vmem:[%s1 + $0x454] sm:$0xf]
  %v542 = vld [vmem:[%s1 + $0x458] sm:$0xf]
  %v543 = vld [vmem:[%s1 + $0x45c] sm:$0xf]
  %v544 = vld [vmem:[%s1 + $0x460] sm:$0xf]
  %v545 = vld [vmem:[%s1 + $0x464] sm:$0xf]
  %v546 = vld [vmem:[%s1 + $0x468] sm:$0xf]
  %v547 = vld [vmem:[%s1 + $0x46c] sm:$0xf]
  %v548 = vld [vmem:[%s1 + $0x470] sm:$0xf]
  %v549 = vld [vmem:[%s1 + $0x474] sm:$0xf]
  %v550 = vld [vmem:[%s1 + $0x478] sm:$0xf]
  %v551 = vld [vmem:[%s1 + $0x47c] sm:$0xf]
  %v552 = vld [vmem:[%s1 + $0x480] sm:$0xf]
  %v553 = vld [vmem:[%s1 + $0x484] sm:$0xf]
  %v554 = vld [vmem:[%s1 + $0x488] sm:$0xf]
  %v555 = vld [vmem:[%s1 + $0x48c] sm:$0xf]
  %v556 = vld [vmem:[%s1 + $0x490] sm:$0xf]
  %v557 = vld [vmem:[%s1 + $0x494] sm:$0xf]
  %v558 = vld [vmem:[%s1 + $0x498] sm:$0xf]
  %v559 = vld [vmem:[%s1 + $0x49c] sm:$0xf]
  %v560 = vld [vmem:[%s1 + $0x4a0] sm:$0xf]
  %v561 = vld [vmem:[%s1 + $0x4a4] sm:$0xf]
  %v562 = vld [vmem:[%s1 + $0x4a8] sm:$0xf]
  %v563 = vld [vmem:[%s1 + $0x4ac] sm:$0xf]
  %v564 = vld [vmem:[%s1 + $0x4b0] sm:$0xf]
  %v565 = vld [vmem:[%s1 + $0x4b4] sm:$0xf]
  %v566 = vld [vmem:[%s1 + $0x4b8] sm:$0xf]
  %v567 = vld [vmem:[%s1 + $0x4bc] sm:$0xf]
  %v568 = vld [vmem:[%s1 + $0x4c0] sm:$0xf]
  %v569 = vld [vmem:[%s1 + $0x4c4] sm:$0xf]
  %v570 = vld [vmem:[%s1 + $0x4c8] sm:$0xf]
  %v571 = vld [vmem:[%s1 + $0x4cc] sm:$0xf]
  %v572 = vld [vmem:[%s1 + $0x4d0] sm:$0xf]
  %v573 = vld [vmem:[%s1 + $0x4d4] sm:$0xf]
  %v574 = vld [vmem:[%s1 + $0x4d8] sm:$0xf]
  %v575 = vld [vmem:[%s1 + $0x4dc] sm:$0xf]
  %v576 = vld [vmem:[%s1 + $0x4e0] sm:$0xf]
  %v577 = vld [vmem:[%s1 + $0x4e4] sm:$0xf]
  %v578 = vld [vmem:[%s1 + $0x4e8] sm:$0xf]
  %v579 = vld [vmem:[%s1 + $0x4ec] sm:$0xf]
  %v580 = vld [vmem:[%s1 + $0x4f0] sm:$0xf]
  %v581 = vld [vmem:[%s1 + $0x4f4] sm:$0xf]
  %v582 = vld [vmem:[%s1 + $0x4f8] sm:$0xf]
  %v583 = vld [vmem:[%s1 + $0x4fc] sm:$0xf]
  %v584 = vld [vmem:[%s2] sm:$0x1]
  %v586 = vperm.slane %v584, 0
  %v828 = vunpack.c.l.b16 %v24
  %v829 = vunpack.c.h.b16 %v24
  %v830 = vunpack.c.l.b16 %v25
  %v831 = vunpack.c.h.b16 %v25
  %v832 = vunpack.c.l.b16 %v26
  %v833 = vunpack.c.h.b16 %v26
  %v834 = vunpack.c.l.b16 %v27
  %v835 = vunpack.c.h.b16 %v27
  %v836 = vunpack.c.l.b16 %v28
  %v837 = vunpack.c.h.b16 %v28
  %v838 = vunpack.c.l.b16 %v29
  %v839 = vunpack.c.h.b16 %v29
  %v840 = vunpack.c.l.b16 %v30
  %v841 = vunpack.c.h.b16 %v30
  %v842 = vunpack.c.l.b16 %v31
  %v843 = vunpack.c.h.b16 %v31
  %v844 = vunpack.c.l.b16 %v32
  %v845 = vunpack.c.h.b16 %v32
  %v846 = vunpack.c.l.b16 %v33
  %v847 = vunpack.c.h.b16 %v33
  %v848 = vunpack.c.l.b16 %v34
  %v849 = vunpack.c.h.b16 %v34
  %v850 = vunpack.c.l.b16 %v35
  %v851 = vunpack.c.h.b16 %v35
  %v852 = vunpack.c.l.b16 %v36
  %v853 = vunpack.c.h.b16 %v36
  %v854 = vunpack.c.l.b16 %v37
  %v855 = vunpack.c.h.b16 %v37
  %v856 = vunpack.c.l.b16 %v38
  %v857 = vunpack.c.h.b16 %v38
  %v858 = vunpack.c.l.b16 %v39
  %v859 = vunpack.c.h.b16 %v39
  %v860 = vunpack.c.l.b16 %v40
  %v861 = vunpack.c.h.b16 %v40
  %v862 = vunpack.c.l.b16 %v41
  %v863 = vunpack.c.h.b16 %v41
  %v864 = vunpack.c.l.b16 %v42
  %v865 = vunpack.c.h.b16 %v42
  %v866 = vunpack.c.l.b16 %v43
  %v867 = vunpack.c.h.b16 %v43
  %v868 = vunpack.c.l.b16 %v44
  %v869 = vunpack.c.h.b16 %v44
  %v870 = vunpack.c.l.b16 %v45
  %v871 = vunpack.c.h.b16 %v45
  %v872 = vunpack.c.l.b16 %v46
  %v873 = vunpack.c.h.b16 %v46
  %v874 = vunpack.c.l.b16 %v47
  %v875 = vunpack.c.h.b16 %v47
  %v876 = vunpack.c.l.b16 %v48
  %v877 = vunpack.c.h.b16 %v48
  %v878 = vunpack.c.l.b16 %v49
  %v879 = vunpack.c.h.b16 %v49
  %v880 = vunpack.c.l.b16 %v50
  %v881 = vunpack.c.h.b16 %v50
  %v882 = vunpack.c.l.b16 %v51
  %v883 = vunpack.c.h.b16 %v51
  %v884 = vunpack.c.l.b16 %v52
  %v885 = vunpack.c.h.b16 %v52
  %v886 = vunpack.c.l.b16 %v53
  %v887 = vunpack.c.h.b16 %v53
  %v888 = vunpack.c.l.b16 %v54
  %v889 = vunpack.c.h.b16 %v54
  %v890 = vunpack.c.l.b16 %v55
  %v891 = vunpack.c.h.b16 %v55
  %v892 = vunpack.c.l.b16 %v56
  %v893 = vunpack.c.h.b16 %v56
  %v894 = vunpack.c.l.b16 %v57
  %v895 = vunpack.c.h.b16 %v57
  %v896 = vunpack.c.l.b16 %v58
  %v897 = vunpack.c.h.b16 %v58
  %v898 = vunpack.c.l.b16 %v59
  %v899 = vunpack.c.h.b16 %v59
  %v900 = vunpack.c.l.b16 %v60
  %v901 = vunpack.c.h.b16 %v60
  %v902 = vunpack.c.l.b16 %v61
  %v903 = vunpack.c.h.b16 %v61
  %v904 = vunpack.c.l.b16 %v62
  %v905 = vunpack.c.h.b16 %v62
  %v906 = vunpack.c.l.b16 %v63
  %v907 = vunpack.c.h.b16 %v63
  %v908 = vunpack.c.l.b16 %v64
  %v909 = vunpack.c.h.b16 %v64
  %v910 = vunpack.c.l.b16 %v65
  %v911 = vunpack.c.h.b16 %v65
  %v912 = vunpack.c.l.b16 %v66
  %v913 = vunpack.c.h.b16 %v66
  %v914 = vunpack.c.l.b16 %v67
  %v915 = vunpack.c.h.b16 %v67
  %v916 = vunpack.c.l.b16 %v68
  %v917 = vunpack.c.h.b16 %v68
  %v918 = vunpack.c.l.b16 %v69
  %v919 = vunpack.c.h.b16 %v69
  %v920 = vunpack.c.l.b16 %v70
  %v921 = vunpack.c.h.b16 %v70
  %v922 = vunpack.c.l.b16 %v71
  %v923 = vunpack.c.h.b16 %v71
  %v924 = vunpack.c.l.b16 %v72
  %v925 = vunpack.c.h.b16 %v72
  %v926 = vunpack.c.l.b16 %v73
  %v927 = vunpack.c.h.b16 %v73
  %v928 = vunpack.c.l.b16 %v74
  %v929 = vunpack.c.h.b16 %v74
  %v930 = vunpack.c.l.b16 %v75
  %v931 = vunpack.c.h.b16 %v75
  %v932 = vunpack.c.l.b16 %v76
  %v933 = vunpack.c.h.b16 %v76
  %v934 = vunpack.c.l.b16 %v77
  %v935 = vunpack.c.h.b16 %v77
  %v936 = vunpack.c.l.b16 %v78
  %v937 = vunpack.c.h.b16 %v78
  %v938 = vunpack.c.l.b16 %v79
  %v939 = vunpack.c.h.b16 %v79
  %v940 = vunpack.c.l.b16 %v80
  %v941 = vunpack.c.h.b16 %v80
  %v942 = vunpack.c.l.b16 %v81
  %v943 = vunpack.c.h.b16 %v81
  %v944 = vunpack.c.l.b16 %v82
  %v945 = vunpack.c.h.b16 %v82
  %v946 = vunpack.c.l.b16 %v83
  %v947 = vunpack.c.h.b16 %v83
  %v948 = vunpack.c.l.b16 %v84
  %v949 = vunpack.c.h.b16 %v84
  %v950 = vunpack.c.l.b16 %v85
  %v951 = vunpack.c.h.b16 %v85
  %v952 = vunpack.c.l.b16 %v86
  %v953 = vunpack.c.h.b16 %v86
  %v954 = vunpack.c.l.b16 %v87
  %v955 = vunpack.c.h.b16 %v87
  %v956 = vunpack.c.l.b16 %v88
  %v957 = vunpack.c.h.b16 %v88
  %v958 = vunpack.c.l.b16 %v89
  %v959 = vunpack.c.h.b16 %v89
  %v960 = vunpack.c.l.b16 %v90
  %v961 = vunpack.c.h.b16 %v90
  %v962 = vunpack.c.l.b16 %v91
  %v963 = vunpack.c.h.b16 %v91
  %v964 = vunpack.c.l.b16 %v92
  %v965 = vunpack.c.h.b16 %v92
  %v966 = vunpack.c.l.b16 %v93
  %v967 = vunpack.c.h.b16 %v93
  %v968 = vunpack.c.l.b16 %v94
  %v969 = vunpack.c.h.b16 %v94
  %v970 = vunpack.c.l.b16 %v95
  %v971 = vunpack.c.h.b16 %v95
  %v972 = vunpack.c.l.b16 %v96
  %v973 = vunpack.c.h.b16 %v96
  %v974 = vunpack.c.l.b16 %v97
  %v975 = vunpack.c.h.b16 %v97
  %v976 = vunpack.c.l.b16 %v98
  %v977 = vunpack.c.h.b16 %v98
  %v978 = vunpack.c.l.b16 %v99
  %v979 = vunpack.c.h.b16 %v99
  %v980 = vunpack.c.l.b16 %v100
  %v981 = vunpack.c.h.b16 %v100
  %v982 = vunpack.c.l.b16 %v101
  %v983 = vunpack.c.h.b16 %v101
  %v984 = vunpack.c.l.b16 %v102
  %v985 = vunpack.c.h.b16 %v102
  %v986 = vunpack.c.l.b16 %v103
  %v987 = vunpack.c.h.b16 %v103
  %v988 = vunpack.c.l.b16 %v104
  %v989 = vunpack.c.h.b16 %v104
  %v990 = vunpack.c.l.b16 %v105
  %v991 = vunpack.c.h.b16 %v105
  %v992 = vunpack.c.l.b16 %v106
  %v993 = vunpack.c.h.b16 %v106
  %v994 = vunpack.c.l.b16 %v107
  %v995 = vunpack.c.h.b16 %v107
  %v996 = vunpack.c.l.b16 %v108
  %v997 = vunpack.c.h.b16 %v108
  %v998 = vunpack.c.l.b16 %v109
  %v999 = vunpack.c.h.b16 %v109
  %v1000 = vunpack.c.l.b16 %v110
  %v1001 = vunpack.c.h.b16 %v110
  %v1002 = vunpack.c.l.b16 %v111
  %v1003 = vunpack.c.h.b16 %v111
  %v1004 = vunpack.c.l.b16 %v112
  %v1005 = vunpack.c.h.b16 %v112
  %v1006 = vunpack.c.l.b16 %v113
  %v1007 = vunpack.c.h.b16 %v113
  %v1008 = vunpack.c.l.b16 %v114
  %v1009 = vunpack.c.h.b16 %v114
  %v1010 = vunpack.c.l.b16 %v115
  %v1011 = vunpack.c.h.b16 %v115
  %v1012 = vunpack.c.l.b16 %v116
  %v1013 = vunpack.c.h.b16 %v116
  %v1014 = vunpack.c.l.b16 %v117
  %v1015 = vunpack.c.h.b16 %v117
  %v1016 = vunpack.c.l.b16 %v118
  %v1017 = vunpack.c.h.b16 %v118
  %v1018 = vunpack.c.l.b16 %v119
  %v1019 = vunpack.c.h.b16 %v119
  %v1020 = vunpack.c.l.b16 %v120
  %v1021 = vunpack.c.h.b16 %v120
  %v1022 = vunpack.c.l.b16 %v121
  %v1023 = vunpack.c.h.b16 %v121
  %v1024 = vunpack.c.l.b16 %v122
  %v1025 = vunpack.c.h.b16 %v122
  %v1026 = vunpack.c.l.b16 %v123
  %v1027 = vunpack.c.h.b16 %v123
  %v1028 = vunpack.c.l.b16 %v124
  %v1029 = vunpack.c.h.b16 %v124
  %v1030 = vunpack.c.l.b16 %v125
  %v1031 = vunpack.c.h.b16 %v125
  %v1032 = vunpack.c.l.b16 %v126
  %v1033 = vunpack.c.h.b16 %v126
  %v1034 = vunpack.c.l.b16 %v127
  %v1035 = vunpack.c.h.b16 %v127
  %v1036 = vunpack.c.l.b16 %v128
  %v1037 = vunpack.c.h.b16 %v128
  %v1038 = vunpack.c.l.b16 %v129
  %v1039 = vunpack.c.h.b16 %v129
  %v1040 = vunpack.c.l.b16 %v130
  %v1041 = vunpack.c.h.b16 %v130
  %v1042 = vunpack.c.l.b16 %v131
  %v1043 = vunpack.c.h.b16 %v131
  %v1044 = vunpack.c.l.b16 %v132
  %v1045 = vunpack.c.h.b16 %v132
  %v1046 = vunpack.c.l.b16 %v133
  %v1047 = vunpack.c.h.b16 %v133
  %v1048 = vunpack.c.l.b16 %v134
  %v1049 = vunpack.c.h.b16 %v134
  %v1050 = vunpack.c.l.b16 %v135
  %v1051 = vunpack.c.h.b16 %v135
  %v1052 = vunpack.c.l.b16 %v136
  %v1053 = vunpack.c.h.b16 %v136
  %v1054 = vunpack.c.l.b16 %v137
  %v1055 = vunpack.c.h.b16 %v137
  %v1056 = vunpack.c.l.b16 %v138
  %v1057 = vunpack.c.h.b16 %v138
  %v1058 = vunpack.c.l.b16 %v139
  %v1059 = vunpack.c.h.b16 %v139
  %v1060 = vunpack.c.l.b16 %v140
  %v1061 = vunpack.c.h.b16 %v140
  %v1062 = vunpack.c.l.b16 %v141
  %v1063 = vunpack.c.h.b16 %v141
  %v1064 = vunpack.c.l.b16 %v142
  %v1065 = vunpack.c.h.b16 %v142
  %v1066 = vunpack.c.l.b16 %v143
  %v1067 = vunpack.c.h.b16 %v143
  %v1068 = vunpack.c.l.b16 %v144
  %v1069 = vunpack.c.h.b16 %v144
  %v1070 = vunpack.c.l.b16 %v145
  %v1071 = vunpack.c.h.b16 %v145
  %v1072 = vunpack.c.l.b16 %v146
  %v1073 = vunpack.c.h.b16 %v146
  %v1074 = vunpack.c.l.b16 %v147
  %v1075 = vunpack.c.h.b16 %v147
  %v1076 = vunpack.c.l.b16 %v148
  %v1077 = vunpack.c.h.b16 %v148
  %v1078 = vunpack.c.l.b16 %v149
  %v1079 = vunpack.c.h.b16 %v149
  %v1080 = vunpack.c.l.b16 %v150
  %v1081 = vunpack.c.h.b16 %v150
  %v1082 = vunpack.c.l.b16 %v151
  %v1083 = vunpack.c.h.b16 %v151
  %v1084 = vunpack.c.l.b16 %v152
  %v1085 = vunpack.c.h.b16 %v152
  %v1086 = vunpack.c.l.b16 %v153
  %v1087 = vunpack.c.h.b16 %v153
  %v1088 = vunpack.c.l.b16 %v154
  %v1089 = vunpack.c.h.b16 %v154
  %v1090 = vunpack.c.l.b16 %v155
  %v1091 = vunpack.c.h.b16 %v155
  %v1092 = vunpack.c.l.b16 %v156
  %v1093 = vunpack.c.h.b16 %v156
  %v1094 = vunpack.c.l.b16 %v157
  %v1095 = vunpack.c.h.b16 %v157
  %v1096 = vunpack.c.l.b16 %v158
  %v1097 = vunpack.c.h.b16 %v158
  %v1098 = vunpack.c.l.b16 %v159
  %v1099 = vunpack.c.h.b16 %v159
  %v1100 = vunpack.c.l.b16 %v160
  %v1101 = vunpack.c.h.b16 %v160
  %v1102 = vunpack.c.l.b16 %v161
  %v1103 = vunpack.c.h.b16 %v161
  %v1104 = vunpack.c.l.b16 %v162
  %v1105 = vunpack.c.h.b16 %v162
  %v1106 = vunpack.c.l.b16 %v163
  %v1107 = vunpack.c.h.b16 %v163
  %v1108 = vunpack.c.l.b16 %v164
  %v1109 = vunpack.c.h.b16 %v164
  %v1110 = vunpack.c.l.b16 %v165
  %v1111 = vunpack.c.h.b16 %v165
  %v1112 = vunpack.c.l.b16 %v166
  %v1113 = vunpack.c.h.b16 %v166
  %v1114 = vunpack.c.l.b16 %v167
  %v1115 = vunpack.c.h.b16 %v167
  %v1116 = vunpack.c.l.b16 %v168
  %v1117 = vunpack.c.h.b16 %v168
  %v1118 = vunpack.c.l.b16 %v169
  %v1119 = vunpack.c.h.b16 %v169
  %v1120 = vunpack.c.l.b16 %v170
  %v1121 = vunpack.c.h.b16 %v170
  %v1122 = vunpack.c.l.b16 %v171
  %v1123 = vunpack.c.h.b16 %v171
  %v1124 = vunpack.c.l.b16 %v172
  %v1125 = vunpack.c.h.b16 %v172
  %v1126 = vunpack.c.l.b16 %v173
  %v1127 = vunpack.c.h.b16 %v173
  %v1128 = vunpack.c.l.b16 %v174
  %v1129 = vunpack.c.h.b16 %v174
  %v1130 = vunpack.c.l.b16 %v175
  %v1131 = vunpack.c.h.b16 %v175
  %v1132 = vunpack.c.l.b16 %v176
  %v1133 = vunpack.c.h.b16 %v176
  %v1134 = vunpack.c.l.b16 %v177
  %v1135 = vunpack.c.h.b16 %v177
  %v1136 = vunpack.c.l.b16 %v178
  %v1137 = vunpack.c.h.b16 %v178
  %v1138 = vunpack.c.l.b16 %v179
  %v1139 = vunpack.c.h.b16 %v179
  %v1140 = vunpack.c.l.b16 %v180
  %v1141 = vunpack.c.h.b16 %v180
  %v1142 = vunpack.c.l.b16 %v181
  %v1143 = vunpack.c.h.b16 %v181
  %v1144 = vunpack.c.l.b16 %v182
  %v1145 = vunpack.c.h.b16 %v182
  %v1146 = vunpack.c.l.b16 %v183
  %v1147 = vunpack.c.h.b16 %v183
  %v1148 = vunpack.c.l.b16 %v184
  %v1149 = vunpack.c.h.b16 %v184
  %v1150 = vunpack.c.l.b16 %v185
  %v1151 = vunpack.c.h.b16 %v185
  %v1152 = vunpack.c.l.b16 %v186
  %v1153 = vunpack.c.h.b16 %v186
  %v1154 = vunpack.c.l.b16 %v187
  %v1155 = vunpack.c.h.b16 %v187
  %v1156 = vunpack.c.l.b16 %v188
  %v1157 = vunpack.c.h.b16 %v188
  %v1158 = vunpack.c.l.b16 %v189
  %v1159 = vunpack.c.h.b16 %v189
  %v1160 = vunpack.c.l.b16 %v190
  %v1161 = vunpack.c.h.b16 %v190
  %v1162 = vunpack.c.l.b16 %v191
  %v1163 = vunpack.c.h.b16 %v191
  %v1164 = vunpack.c.l.b16 %v192
  %v1165 = vunpack.c.h.b16 %v192
  %v1166 = vunpack.c.l.b16 %v193
  %v1167 = vunpack.c.h.b16 %v193
  %v1168 = vunpack.c.l.b16 %v194
  %v1169 = vunpack.c.h.b16 %v194
  %v1170 = vunpack.c.l.b16 %v195
  %v1171 = vunpack.c.h.b16 %v195
  %v1172 = vunpack.c.l.b16 %v196
  %v1173 = vunpack.c.h.b16 %v196
  %v1174 = vunpack.c.l.b16 %v197
  %v1175 = vunpack.c.h.b16 %v197
  %v1176 = vunpack.c.l.b16 %v198
  %v1177 = vunpack.c.h.b16 %v198
  %v1178 = vunpack.c.l.b16 %v199
  %v1179 = vunpack.c.h.b16 %v199
  %v1180 = vunpack.c.l.b16 %v200
  %v1181 = vunpack.c.h.b16 %v200
  %v1182 = vunpack.c.l.b16 %v201
  %v1183 = vunpack.c.h.b16 %v201
  %v1184 = vunpack.c.l.b16 %v202
  %v1185 = vunpack.c.h.b16 %v202
  %v1186 = vunpack.c.l.b16 %v203
  %v1187 = vunpack.c.h.b16 %v203
  %v1188 = vunpack.c.l.b16 %v204
  %v1189 = vunpack.c.h.b16 %v204
  %v1190 = vunpack.c.l.b16 %v205
  %v1191 = vunpack.c.h.b16 %v205
  %v1192 = vunpack.c.l.b16 %v206
  %v1193 = vunpack.c.h.b16 %v206
  %v1194 = vunpack.c.l.b16 %v207
  %v1195 = vunpack.c.h.b16 %v207
  %v1196 = vunpack.c.l.b16 %v208
  %v1197 = vunpack.c.h.b16 %v208
  %v1198 = vunpack.c.l.b16 %v209
  %v1199 = vunpack.c.h.b16 %v209
  %v1200 = vunpack.c.l.b16 %v210
  %v1201 = vunpack.c.h.b16 %v210
  %v1202 = vunpack.c.l.b16 %v211
  %v1203 = vunpack.c.h.b16 %v211
  %v1204 = vunpack.c.l.b16 %v212
  %v1205 = vunpack.c.h.b16 %v212
  %v1206 = vunpack.c.l.b16 %v213
  %v1207 = vunpack.c.h.b16 %v213
  %v1208 = vunpack.c.l.b16 %v214
  %v1209 = vunpack.c.h.b16 %v214
  %v1210 = vunpack.c.l.b16 %v215
  %v1211 = vunpack.c.h.b16 %v215
  %v1212 = vunpack.c.l.b16 %v216
  %v1213 = vunpack.c.h.b16 %v216
  %v1214 = vunpack.c.l.b16 %v217
  %v1215 = vunpack.c.h.b16 %v217
  %v1216 = vunpack.c.l.b16 %v218
  %v1217 = vunpack.c.h.b16 %v218
  %v1218 = vunpack.c.l.b16 %v219
  %v1219 = vunpack.c.h.b16 %v219
  %v1220 = vunpack.c.l.b16 %v220
  %v1221 = vunpack.c.h.b16 %v220
  %v1222 = vunpack.c.l.b16 %v221
  %v1223 = vunpack.c.h.b16 %v221
  %v1224 = vunpack.c.l.b16 %v222
  %v1225 = vunpack.c.h.b16 %v222
  %v1226 = vunpack.c.l.b16 %v223
  %v1227 = vunpack.c.h.b16 %v223
  %v1228 = vunpack.c.l.b16 %v224
  %v1229 = vunpack.c.h.b16 %v224
  %v1230 = vunpack.c.l.b16 %v225
  %v1231 = vunpack.c.h.b16 %v225
  %v1232 = vunpack.c.l.b16 %v226
  %v1233 = vunpack.c.h.b16 %v226
  %v1234 = vunpack.c.l.b16 %v227
  %v1235 = vunpack.c.h.b16 %v227
  %v1236 = vunpack.c.l.b16 %v228
  %v1237 = vunpack.c.h.b16 %v228
  %v1238 = vunpack.c.l.b16 %v229
  %v1239 = vunpack.c.h.b16 %v229
  %v1240 = vunpack.c.l.b16 %v230
  %v1241 = vunpack.c.h.b16 %v230
  %v1242 = vunpack.c.l.b16 %v231
  %v1243 = vunpack.c.h.b16 %v231
  %v1244 = vunpack.c.l.b16 %v232
  %v1245 = vunpack.c.h.b16 %v232
  %v1246 = vunpack.c.l.b16 %v233
  %v1247 = vunpack.c.h.b16 %v233
  %v1248 = vunpack.c.l.b16 %v234
  %v1249 = vunpack.c.h.b16 %v234
  %v1250 = vunpack.c.l.b16 %v235
  %v1251 = vunpack.c.h.b16 %v235
  %v1252 = vunpack.c.l.b16 %v236
  %v1253 = vunpack.c.h.b16 %v236
  %v1254 = vunpack.c.l.b16 %v237
  %v1255 = vunpack.c.h.b16 %v237
  %v1256 = vunpack.c.l.b16 %v238
  %v1257 = vunpack.c.h.b16 %v238
  %v1258 = vunpack.c.l.b16 %v239
  %v1259 = vunpack.c.h.b16 %v239
  %v1260 = vunpack.c.l.b16 %v240
  %v1261 = vunpack.c.h.b16 %v240
  %v1262 = vunpack.c.l.b16 %v241
  %v1263 = vunpack.c.h.b16 %v241
  %v1264 = vunpack.c.l.b16 %v242
  %v1265 = vunpack.c.h.b16 %v242
  %v1266 = vunpack.c.l.b16 %v243
  %v1267 = vunpack.c.h.b16 %v243
  %v1268 = vunpack.c.l.b16 %v244
  %v1269 = vunpack.c.h.b16 %v244
  %v1270 = vunpack.c.l.b16 %v245
  %v1271 = vunpack.c.h.b16 %v245
  %v1272 = vunpack.c.l.b16 %v246
  %v1273 = vunpack.c.h.b16 %v246
  %v1274 = vunpack.c.l.b16 %v247
  %v1275 = vunpack.c.h.b16 %v247
  %v1276 = vunpack.c.l.b16 %v248
  %v1277 = vunpack.c.h.b16 %v248
  %v1278 = vunpack.c.l.b16 %v249
  %v1279 = vunpack.c.h.b16 %v249
  %v1280 = vunpack.c.l.b16 %v250
  %v1281 = vunpack.c.h.b16 %v250
  %v1282 = vunpack.c.l.b16 %v251
  %v1283 = vunpack.c.h.b16 %v251
  %v1284 = vunpack.c.l.b16 %v252
  %v1285 = vunpack.c.h.b16 %v252
  %v1286 = vunpack.c.l.b16 %v253
  %v1287 = vunpack.c.h.b16 %v253
  %v1288 = vunpack.c.l.b16 %v254
  %v1289 = vunpack.c.h.b16 %v254
  %v1290 = vunpack.c.l.b16 %v255
  %v1291 = vunpack.c.h.b16 %v255
  %v1292 = vunpack.c.l.b16 %v256
  %v1293 = vunpack.c.h.b16 %v256
  %v1294 = vunpack.c.l.b16 %v257
  %v1295 = vunpack.c.h.b16 %v257
  %v1296 = vunpack.c.l.b16 %v258
  %v1297 = vunpack.c.h.b16 %v258
  %v1298 = vunpack.c.l.b16 %v259
  %v1299 = vunpack.c.h.b16 %v259
  %v1300 = vunpack.c.l.b16 %v260
  %v1301 = vunpack.c.h.b16 %v260
  %v1302 = vunpack.c.l.b16 %v261
  %v1303 = vunpack.c.h.b16 %v261
  %v1304 = vunpack.c.l.b16 %v262
  %v1305 = vunpack.c.h.b16 %v262
  %v1306 = vunpack.c.l.b16 %v263
  %v1307 = vunpack.c.h.b16 %v263
  %v1308 = vpack.c.b16 %v848, %v828
  %v1309 = vpack.c.b16 %v849, %v829
  %v1310 = vpack.c.b16 %v850, %v830
  %v1311 = vpack.c.b16 %v851, %v831
  %v1312 = vpack.c.b16 %v852, %v832
  %v1313 = vpack.c.b16 %v853, %v833
  %v1314 = vpack.c.b16 %v854, %v834
  %v1315 = vpack.c.b16 %v855, %v835
  %v1316 = vpack.c.b16 %v856, %v836
  %v1317 = vpack.c.b16 %v857, %v837
  %v1318 = vpack.c.b16 %v858, %v838
  %v1319 = vpack.c.b16 %v859, %v839
  %v1320 = vpack.c.b16 %v860, %v840
  %v1321 = vpack.c.b16 %v861, %v841
  %v1322 = vpack.c.b16 %v862, %v842
  %v1323 = vpack.c.b16 %v863, %v843
  %v1324 = vpack.c.b16 %v864, %v844
  %v1325 = vpack.c.b16 %v865, %v845
  %v1326 = vpack.c.b16 %v866, %v846
  %v1327 = vpack.c.b16 %v867, %v847
  %v1328 = vpack.c.b16 %v888, %v868
  %v1329 = vpack.c.b16 %v889, %v869
  %v1330 = vpack.c.b16 %v890, %v870
  %v1331 = vpack.c.b16 %v891, %v871
  %v1332 = vpack.c.b16 %v892, %v872
  %v1333 = vpack.c.b16 %v893, %v873
  %v1334 = vpack.c.b16 %v894, %v874
  %v1335 = vpack.c.b16 %v895, %v875
  %v1336 = vpack.c.b16 %v896, %v876
  %v1337 = vpack.c.b16 %v897, %v877
  %v1338 = vpack.c.b16 %v898, %v878
  %v1339 = vpack.c.b16 %v899, %v879
  %v1340 = vpack.c.b16 %v900, %v880
  %v1341 = vpack.c.b16 %v901, %v881
  %v1342 = vpack.c.b16 %v902, %v882
  %v1343 = vpack.c.b16 %v903, %v883
  %v1344 = vpack.c.b16 %v904, %v884
  %v1345 = vpack.c.b16 %v905, %v885
  %v1346 = vpack.c.b16 %v906, %v886
  %v1347 = vpack.c.b16 %v907, %v887
  %v1348 = vpack.c.b16 %v928, %v908
  %v1349 = vpack.c.b16 %v929, %v909
  %v1350 = vpack.c.b16 %v930, %v910
  %v1351 = vpack.c.b16 %v931, %v911
  %v1352 = vpack.c.b16 %v932, %v912
  %v1353 = vpack.c.b16 %v933, %v913
  %v1354 = vpack.c.b16 %v934, %v914
  %v1355 = vpack.c.b16 %v935, %v915
  %v1356 = vpack.c.b16 %v936, %v916
  %v1357 = vpack.c.b16 %v937, %v917
  %v1358 = vpack.c.b16 %v938, %v918
  %v1359 = vpack.c.b16 %v939, %v919
  %v1360 = vpack.c.b16 %v940, %v920
  %v1361 = vpack.c.b16 %v941, %v921
  %v1362 = vpack.c.b16 %v942, %v922
  %v1363 = vpack.c.b16 %v943, %v923
  %v1364 = vpack.c.b16 %v944, %v924
  %v1365 = vpack.c.b16 %v945, %v925
  %v1366 = vpack.c.b16 %v946, %v926
  %v1367 = vpack.c.b16 %v947, %v927
  %v1368 = vpack.c.b16 %v968, %v948
  %v1369 = vpack.c.b16 %v969, %v949
  %v1370 = vpack.c.b16 %v970, %v950
  %v1371 = vpack.c.b16 %v971, %v951
  %v1372 = vpack.c.b16 %v972, %v952
  %v1373 = vpack.c.b16 %v973, %v953
  %v1374 = vpack.c.b16 %v974, %v954
  %v1375 = vpack.c.b16 %v975, %v955
  %v1376 = vpack.c.b16 %v976, %v956
  %v1377 = vpack.c.b16 %v977, %v957
  %v1378 = vpack.c.b16 %v978, %v958
  %v1379 = vpack.c.b16 %v979, %v959
  %v1380 = vpack.c.b16 %v980, %v960
  %v1381 = vpack.c.b16 %v981, %v961
  %v1382 = vpack.c.b16 %v982, %v962
  %v1383 = vpack.c.b16 %v983, %v963
  %v1384 = vpack.c.b16 %v984, %v964
  %v1385 = vpack.c.b16 %v985, %v965
  %v1386 = vpack.c.b16 %v986, %v966
  %v1387 = vpack.c.b16 %v987, %v967
  %v1388 = vpack.c.b16 %v1008, %v988
  %v1389 = vpack.c.b16 %v1009, %v989
  %v1390 = vpack.c.b16 %v1010, %v990
  %v1391 = vpack.c.b16 %v1011, %v991
  %v1392 = vpack.c.b16 %v1012, %v992
  %v1393 = vpack.c.b16 %v1013, %v993
  %v1394 = vpack.c.b16 %v1014, %v994
  %v1395 = vpack.c.b16 %v1015, %v995
  %v1396 = vpack.c.b16 %v1016, %v996
  %v1397 = vpack.c.b16 %v1017, %v997
  %v1398 = vpack.c.b16 %v1018, %v998
  %v1399 = vpack.c.b16 %v1019, %v999
  %v1400 = vpack.c.b16 %v1020, %v1000
  %v1401 = vpack.c.b16 %v1021, %v1001
  %v1402 = vpack.c.b16 %v1022, %v1002
  %v1403 = vpack.c.b16 %v1023, %v1003
  %v1404 = vpack.c.b16 %v1024, %v1004
  %v1405 = vpack.c.b16 %v1025, %v1005
  %v1406 = vpack.c.b16 %v1026, %v1006
  %v1407 = vpack.c.b16 %v1027, %v1007
  %v1408 = vpack.c.b16 %v1048, %v1028
  %v1409 = vpack.c.b16 %v1049, %v1029
  %v1410 = vpack.c.b16 %v1050, %v1030
  %v1411 = vpack.c.b16 %v1051, %v1031
  %v1412 = vpack.c.b16 %v1052, %v1032
  %v1413 = vpack.c.b16 %v1053, %v1033
  %v1414 = vpack.c.b16 %v1054, %v1034
  %v1415 = vpack.c.b16 %v1055, %v1035
  %v1416 = vpack.c.b16 %v1056, %v1036
  %v1417 = vpack.c.b16 %v1057, %v1037
  %v1418 = vpack.c.b16 %v1058, %v1038
  %v1419 = vpack.c.b16 %v1059, %v1039
  %v1420 = vpack.c.b16 %v1060, %v1040
  %v1421 = vpack.c.b16 %v1061, %v1041
  %v1422 = vpack.c.b16 %v1062, %v1042
  %v1423 = vpack.c.b16 %v1063, %v1043
  %v1424 = vpack.c.b16 %v1064, %v1044
  %v1425 = vpack.c.b16 %v1065, %v1045
  %v1426 = vpack.c.b16 %v1066, %v1046
  %v1427 = vpack.c.b16 %v1067, %v1047
  %v1428 = vpack.c.b16 %v1088, %v1068
  %v1429 = vpack.c.b16 %v1089, %v1069
  %v1430 = vpack.c.b16 %v1090, %v1070
  %v1431 = vpack.c.b16 %v1091, %v1071
  %v1432 = vpack.c.b16 %v1092, %v1072
  %v1433 = vpack.c.b16 %v1093, %v1073
  %v1434 = vpack.c.b16 %v1094, %v1074
  %v1435 = vpack.c.b16 %v1095, %v1075
  %v1436 = vpack.c.b16 %v1096, %v1076
  %v1437 = vpack.c.b16 %v1097, %v1077
  %v1438 = vpack.c.b16 %v1098, %v1078
  %v1439 = vpack.c.b16 %v1099, %v1079
  %v1440 = vpack.c.b16 %v1100, %v1080
  %v1441 = vpack.c.b16 %v1101, %v1081
  %v1442 = vpack.c.b16 %v1102, %v1082
  %v1443 = vpack.c.b16 %v1103, %v1083
  %v1444 = vpack.c.b16 %v1104, %v1084
  %v1445 = vpack.c.b16 %v1105, %v1085
  %v1446 = vpack.c.b16 %v1106, %v1086
  %v1447 = vpack.c.b16 %v1107, %v1087
  %v1448 = vpack.c.b16 %v1128, %v1108
  %v1449 = vpack.c.b16 %v1129, %v1109
  %v1450 = vpack.c.b16 %v1130, %v1110
  %v1451 = vpack.c.b16 %v1131, %v1111
  %v1452 = vpack.c.b16 %v1132, %v1112
  %v1453 = vpack.c.b16 %v1133, %v1113
  %v1454 = vpack.c.b16 %v1134, %v1114
  %v1455 = vpack.c.b16 %v1135, %v1115
  %v1456 = vpack.c.b16 %v1136, %v1116
  %v1457 = vpack.c.b16 %v1137, %v1117
  %v1458 = vpack.c.b16 %v1138, %v1118
  %v1459 = vpack.c.b16 %v1139, %v1119
  %v1460 = vpack.c.b16 %v1140, %v1120
  %v1461 = vpack.c.b16 %v1141, %v1121
  %v1462 = vpack.c.b16 %v1142, %v1122
  %v1463 = vpack.c.b16 %v1143, %v1123
  %v1464 = vpack.c.b16 %v1144, %v1124
  %v1465 = vpack.c.b16 %v1145, %v1125
  %v1466 = vpack.c.b16 %v1146, %v1126
  %v1467 = vpack.c.b16 %v1147, %v1127
  %v1468 = vpack.c.b16 %v1168, %v1148
  %v1469 = vpack.c.b16 %v1169, %v1149
  %v1470 = vpack.c.b16 %v1170, %v1150
  %v1471 = vpack.c.b16 %v1171, %v1151
  %v1472 = vpack.c.b16 %v1172, %v1152
  %v1473 = vpack.c.b16 %v1173, %v1153
  %v1474 = vpack.c.b16 %v1174, %v1154
  %v1475 = vpack.c.b16 %v1175, %v1155
  %v1476 = vpack.c.b16 %v1176, %v1156
  %v1477 = vpack.c.b16 %v1177, %v1157
  %v1478 = vpack.c.b16 %v1178, %v1158
  %v1479 = vpack.c.b16 %v1179, %v1159
  %v1480 = vpack.c.b16 %v1180, %v1160
  %v1481 = vpack.c.b16 %v1181, %v1161
  %v1482 = vpack.c.b16 %v1182, %v1162
  %v1483 = vpack.c.b16 %v1183, %v1163
  %v1484 = vpack.c.b16 %v1184, %v1164
  %v1485 = vpack.c.b16 %v1185, %v1165
  %v1486 = vpack.c.b16 %v1186, %v1166
  %v1487 = vpack.c.b16 %v1187, %v1167
  %v1488 = vpack.c.b16 %v1208, %v1188
  %v1489 = vpack.c.b16 %v1209, %v1189
  %v1490 = vpack.c.b16 %v1210, %v1190
  %v1491 = vpack.c.b16 %v1211, %v1191
  %v1492 = vpack.c.b16 %v1212, %v1192
  %v1493 = vpack.c.b16 %v1213, %v1193
  %v1494 = vpack.c.b16 %v1214, %v1194
  %v1495 = vpack.c.b16 %v1215, %v1195
  %v1496 = vpack.c.b16 %v1216, %v1196
  %v1497 = vpack.c.b16 %v1217, %v1197
  %v1498 = vpack.c.b16 %v1218, %v1198
  %v1499 = vpack.c.b16 %v1219, %v1199
  %v1500 = vpack.c.b16 %v1220, %v1200
  %v1501 = vpack.c.b16 %v1221, %v1201
  %v1502 = vpack.c.b16 %v1222, %v1202
  %v1503 = vpack.c.b16 %v1223, %v1203
  %v1504 = vpack.c.b16 %v1224, %v1204
  %v1505 = vpack.c.b16 %v1225, %v1205
  %v1506 = vpack.c.b16 %v1226, %v1206
  %v1507 = vpack.c.b16 %v1227, %v1207
  %v1508 = vpack.c.b16 %v1248, %v1228
  %v1509 = vpack.c.b16 %v1249, %v1229
  %v1510 = vpack.c.b16 %v1250, %v1230
  %v1511 = vpack.c.b16 %v1251, %v1231
  %v1512 = vpack.c.b16 %v1252, %v1232
  %v1513 = vpack.c.b16 %v1253, %v1233
  %v1514 = vpack.c.b16 %v1254, %v1234
  %v1515 = vpack.c.b16 %v1255, %v1235
  %v1516 = vpack.c.b16 %v1256, %v1236
  %v1517 = vpack.c.b16 %v1257, %v1237
  %v1518 = vpack.c.b16 %v1258, %v1238
  %v1519 = vpack.c.b16 %v1259, %v1239
  %v1520 = vpack.c.b16 %v1260, %v1240
  %v1521 = vpack.c.b16 %v1261, %v1241
  %v1522 = vpack.c.b16 %v1262, %v1242
  %v1523 = vpack.c.b16 %v1263, %v1243
  %v1524 = vpack.c.b16 %v1264, %v1244
  %v1525 = vpack.c.b16 %v1265, %v1245
  %v1526 = vpack.c.b16 %v1266, %v1246
  %v1527 = vpack.c.b16 %v1267, %v1247
  %v1528 = vpack.c.b16 %v1288, %v1268
  %v1529 = vpack.c.b16 %v1289, %v1269
  %v1530 = vpack.c.b16 %v1290, %v1270
  %v1531 = vpack.c.b16 %v1291, %v1271
  %v1532 = vpack.c.b16 %v1292, %v1272
  %v1533 = vpack.c.b16 %v1293, %v1273
  %v1534 = vpack.c.b16 %v1294, %v1274
  %v1535 = vpack.c.b16 %v1295, %v1275
  %v1536 = vpack.c.b16 %v1296, %v1276
  %v1537 = vpack.c.b16 %v1297, %v1277
  %v1538 = vpack.c.b16 %v1298, %v1278
  %v1539 = vpack.c.b16 %v1299, %v1279
  %v1540 = vpack.c.b16 %v1300, %v1280
  %v1541 = vpack.c.b16 %v1301, %v1281
  %v1542 = vpack.c.b16 %v1302, %v1282
  %v1543 = vpack.c.b16 %v1303, %v1283
  %v1544 = vpack.c.b16 %v1304, %v1284
  %v1545 = vpack.c.b16 %v1305, %v1285
  %v1546 = vpack.c.b16 %v1306, %v1286
  %v1547 = vpack.c.b16 %v1307, %v1287
  %v2108 = vunpack.c.l.b16 %v264
  %v2109 = vunpack.c.l.b16 %v265
  %v2110 = vunpack.c.l.b16 %v266
  %v2111 = vunpack.c.l.b16 %v267
  %v2112 = vunpack.c.l.b16 %v268
  %v2113 = vunpack.c.l.b16 %v269
  %v2114 = vunpack.c.l.b16 %v270
  %v2115 = vunpack.c.l.b16 %v271
  %v2116 = vunpack.c.l.b16 %v272
  %v2117 = vunpack.c.l.b16 %v273
  %v2118 = vunpack.c.l.b16 %v274
  %v2119 = vunpack.c.l.b16 %v275
  %v2120 = vunpack.c.l.b16 %v276
  %v2121 = vunpack.c.l.b16 %v277
  %v2122 = vunpack.c.l.b16 %v278
  %v2123 = vunpack.c.l.b16 %v279
  %v2124 = vunpack.c.l.b16 %v280
  %v2125 = vunpack.c.l.b16 %v281
  %v2126 = vunpack.c.l.b16 %v282
  %v2127 = vunpack.c.l.b16 %v283
  %v2128 = vunpack.c.l.b16 %v284
  %v2129 = vunpack.c.l.b16 %v285
  %v2130 = vunpack.c.l.b16 %v286
  %v2131 = vunpack.c.l.b16 %v287
  %v2132 = vunpack.c.l.b16 %v288
  %v2133 = vunpack.c.l.b16 %v289
  %v2134 = vunpack.c.l.b16 %v290
  %v2135 = vunpack.c.l.b16 %v291
  %v2136 = vunpack.c.l.b16 %v292
  %v2137 = vunpack.c.l.b16 %v293
  %v2138 = vunpack.c.l.b16 %v294
  %v2139 = vunpack.c.l.b16 %v295
  %v2140 = vunpack.c.l.b16 %v296
  %v2141 = vunpack.c.l.b16 %v297
  %v2142 = vunpack.c.l.b16 %v298
  %v2143 = vunpack.c.l.b16 %v299
  %v2144 = vunpack.c.l.b16 %v300
  %v2145 = vunpack.c.l.b16 %v301
  %v2146 = vunpack.c.l.b16 %v302
  %v2147 = vunpack.c.l.b16 %v303
  %v2148 = vunpack.c.l.b16 %v304
  %v2149 = vunpack.c.l.b16 %v305
  %v2150 = vunpack.c.l.b16 %v306
  %v2151 = vunpack.c.l.b16 %v307
  %v2152 = vunpack.c.l.b16 %v308
  %v2153 = vunpack.c.l.b16 %v309
  %v2154 = vunpack.c.l.b16 %v310
  %v2155 = vunpack.c.l.b16 %v311
  %v2156 = vunpack.c.l.b16 %v312
  %v2157 = vunpack.c.l.b16 %v313
  %v2158 = vunpack.c.l.b16 %v314
  %v2159 = vunpack.c.l.b16 %v315
  %v2160 = vunpack.c.l.b16 %v316
  %v2161 = vunpack.c.l.b16 %v317
  %v2162 = vunpack.c.l.b16 %v318
  %v2163 = vunpack.c.l.b16 %v319
  %v2164 = vunpack.c.l.b16 %v320
  %v2165 = vunpack.c.l.b16 %v321
  %v2166 = vunpack.c.l.b16 %v322
  %v2167 = vunpack.c.l.b16 %v323
  %v2168 = vunpack.c.l.b16 %v324
  %v2169 = vunpack.c.l.b16 %v325
  %v2170 = vunpack.c.l.b16 %v326
  %v2171 = vunpack.c.l.b16 %v327
  %v2172 = vunpack.c.l.b16 %v328
  %v2173 = vunpack.c.l.b16 %v329
  %v2174 = vunpack.c.l.b16 %v330
  %v2175 = vunpack.c.l.b16 %v331
  %v2176 = vunpack.c.l.b16 %v332
  %v2177 = vunpack.c.l.b16 %v333
  %v2178 = vunpack.c.l.b16 %v334
  %v2179 = vunpack.c.l.b16 %v335
  %v2180 = vunpack.c.l.b16 %v336
  %v2181 = vunpack.c.l.b16 %v337
  %v2182 = vunpack.c.l.b16 %v338
  %v2183 = vunpack.c.l.b16 %v339
  %v2184 = vunpack.c.l.b16 %v340
  %v2185 = vunpack.c.l.b16 %v341
  %v2186 = vunpack.c.l.b16 %v342
  %v2187 = vunpack.c.l.b16 %v343
  %v2188 = vunpack.c.l.b16 %v344
  %v2189 = vunpack.c.l.b16 %v345
  %v2190 = vunpack.c.l.b16 %v346
  %v2191 = vunpack.c.l.b16 %v347
  %v2192 = vunpack.c.l.b16 %v348
  %v2193 = vunpack.c.l.b16 %v349
  %v2194 = vunpack.c.l.b16 %v350
  %v2195 = vunpack.c.l.b16 %v351
  %v2196 = vunpack.c.l.b16 %v352
  %v2197 = vunpack.c.l.b16 %v353
  %v2198 = vunpack.c.l.b16 %v354
  %v2199 = vunpack.c.l.b16 %v355
  %v2200 = vunpack.c.l.b16 %v356
  %v2201 = vunpack.c.l.b16 %v357
  %v2202 = vunpack.c.l.b16 %v358
  %v2203 = vunpack.c.l.b16 %v359
  %v2204 = vunpack.c.l.b16 %v360
  %v2205 = vunpack.c.l.b16 %v361
  %v2206 = vunpack.c.l.b16 %v362
  %v2207 = vunpack.c.l.b16 %v363
  %v2208 = vunpack.c.l.b16 %v364
  %v2209 = vunpack.c.l.b16 %v365
  %v2210 = vunpack.c.l.b16 %v366
  %v2211 = vunpack.c.l.b16 %v367
  %v2212 = vunpack.c.l.b16 %v368
  %v2213 = vunpack.c.l.b16 %v369
  %v2214 = vunpack.c.l.b16 %v370
  %v2215 = vunpack.c.l.b16 %v371
  %v2216 = vunpack.c.l.b16 %v372
  %v2217 = vunpack.c.l.b16 %v373
  %v2218 = vunpack.c.l.b16 %v374
  %v2219 = vunpack.c.l.b16 %v375
  %v2220 = vunpack.c.l.b16 %v376
  %v2221 = vunpack.c.l.b16 %v377
  %v2222 = vunpack.c.l.b16 %v378
  %v2223 = vunpack.c.l.b16 %v379
  %v2224 = vunpack.c.l.b16 %v380
  %v2225 = vunpack.c.l.b16 %v381
  %v2226 = vunpack.c.l.b16 %v382
  %v2227 = vunpack.c.l.b16 %v383
  %v2228 = vunpack.c.l.b16 %v384
  %v2229 = vunpack.c.l.b16 %v385
  %v2230 = vunpack.c.l.b16 %v386
  %v2231 = vunpack.c.l.b16 %v387
  %v2232 = vunpack.c.l.b16 %v388
  %v2233 = vunpack.c.l.b16 %v389
  %v2234 = vunpack.c.l.b16 %v390
  %v2235 = vunpack.c.l.b16 %v391
  %v2236 = vunpack.c.l.b16 %v392
  %v2237 = vunpack.c.l.b16 %v393
  %v2238 = vunpack.c.l.b16 %v394
  %v2239 = vunpack.c.l.b16 %v395
  %v2240 = vunpack.c.l.b16 %v396
  %v2241 = vunpack.c.l.b16 %v397
  %v2242 = vunpack.c.l.b16 %v398
  %v2243 = vunpack.c.l.b16 %v399
  %v2244 = vunpack.c.l.b16 %v400
  %v2245 = vunpack.c.l.b16 %v401
  %v2246 = vunpack.c.l.b16 %v402
  %v2247 = vunpack.c.l.b16 %v403
  %v2248 = vunpack.c.l.b16 %v404
  %v2249 = vunpack.c.l.b16 %v405
  %v2250 = vunpack.c.l.b16 %v406
  %v2251 = vunpack.c.l.b16 %v407
  %v2252 = vunpack.c.l.b16 %v408
  %v2253 = vunpack.c.l.b16 %v409
  %v2254 = vunpack.c.l.b16 %v410
  %v2255 = vunpack.c.l.b16 %v411
  %v2256 = vunpack.c.l.b16 %v412
  %v2257 = vunpack.c.l.b16 %v413
  %v2258 = vunpack.c.l.b16 %v414
  %v2259 = vunpack.c.l.b16 %v415
  %v2260 = vunpack.c.l.b16 %v416
  %v2261 = vunpack.c.l.b16 %v417
  %v2262 = vunpack.c.l.b16 %v418
  %v2263 = vunpack.c.l.b16 %v419
  %v2264 = vunpack.c.l.b16 %v420
  %v2265 = vunpack.c.l.b16 %v421
  %v2266 = vunpack.c.l.b16 %v422
  %v2267 = vunpack.c.l.b16 %v423
  %v2268 = vunpack.c.l.b16 %v424
  %v2269 = vunpack.c.l.b16 %v425
  %v2270 = vunpack.c.l.b16 %v426
  %v2271 = vunpack.c.l.b16 %v427
  %v2272 = vunpack.c.l.b16 %v428
  %v2273 = vunpack.c.l.b16 %v429
  %v2274 = vunpack.c.l.b16 %v430
  %v2275 = vunpack.c.l.b16 %v431
  %v2276 = vunpack.c.l.b16 %v432
  %v2277 = vunpack.c.l.b16 %v433
  %v2278 = vunpack.c.l.b16 %v434
  %v2279 = vunpack.c.l.b16 %v435
  %v2280 = vunpack.c.l.b16 %v436
  %v2281 = vunpack.c.l.b16 %v437
  %v2282 = vunpack.c.l.b16 %v438
  %v2283 = vunpack.c.l.b16 %v439
  %v2284 = vunpack.c.l.b16 %v440
  %v2285 = vunpack.c.l.b16 %v441
  %v2286 = vunpack.c.l.b16 %v442
  %v2287 = vunpack.c.l.b16 %v443
  %v2288 = vunpack.c.l.b16 %v444
  %v2289 = vunpack.c.l.b16 %v445
  %v2290 = vunpack.c.l.b16 %v446
  %v2291 = vunpack.c.l.b16 %v447
  %v2292 = vunpack.c.l.b16 %v448
  %v2293 = vunpack.c.l.b16 %v449
  %v2294 = vunpack.c.l.b16 %v450
  %v2295 = vunpack.c.l.b16 %v451
  %v2296 = vunpack.c.l.b16 %v452
  %v2297 = vunpack.c.l.b16 %v453
  %v2298 = vunpack.c.l.b16 %v454
  %v2299 = vunpack.c.l.b16 %v455
  %v2300 = vunpack.c.l.b16 %v456
  %v2301 = vunpack.c.l.b16 %v457
  %v2302 = vunpack.c.l.b16 %v458
  %v2303 = vunpack.c.l.b16 %v459
  %v2304 = vunpack.c.l.b16 %v460
  %v2305 = vunpack.c.l.b16 %v461
  %v2306 = vunpack.c.l.b16 %v462
  %v2307 = vunpack.c.l.b16 %v463
  %v2308 = vunpack.c.l.b16 %v464
  %v2309 = vunpack.c.l.b16 %v465
  %v2310 = vunpack.c.l.b16 %v466
  %v2311 = vunpack.c.l.b16 %v467
  %v2312 = vunpack.c.l.b16 %v468
  %v2313 = vunpack.c.l.b16 %v469
  %v2314 = vunpack.c.l.b16 %v470
  %v2315 = vunpack.c.l.b16 %v471
  %v2316 = vunpack.c.l.b16 %v472
  %v2317 = vunpack.c.l.b16 %v473
  %v2318 = vunpack.c.l.b16 %v474
  %v2319 = vunpack.c.l.b16 %v475
  %v2320 = vunpack.c.l.b16 %v476
  %v2321 = vunpack.c.l.b16 %v477
  %v2322 = vunpack.c.l.b16 %v478
  %v2323 = vunpack.c.l.b16 %v479
  %v2324 = vunpack.c.l.b16 %v480
  %v2325 = vunpack.c.l.b16 %v481
  %v2326 = vunpack.c.l.b16 %v482
  %v2327 = vunpack.c.l.b16 %v483
  %v2328 = vunpack.c.l.b16 %v484
  %v2329 = vunpack.c.l.b16 %v485
  %v2330 = vunpack.c.l.b16 %v486
  %v2331 = vunpack.c.l.b16 %v487
  %v2332 = vunpack.c.l.b16 %v488
  %v2333 = vunpack.c.l.b16 %v489
  %v2334 = vunpack.c.l.b16 %v490
  %v2335 = vunpack.c.l.b16 %v491
  %v2336 = vunpack.c.l.b16 %v492
  %v2337 = vunpack.c.l.b16 %v493
  %v2338 = vunpack.c.l.b16 %v494
  %v2339 = vunpack.c.l.b16 %v495
  %v2340 = vunpack.c.l.b16 %v496
  %v2341 = vunpack.c.l.b16 %v497
  %v2342 = vunpack.c.l.b16 %v498
  %v2343 = vunpack.c.l.b16 %v499
  %v2344 = vunpack.c.l.b16 %v500
  %v2345 = vunpack.c.l.b16 %v501
  %v2346 = vunpack.c.l.b16 %v502
  %v2347 = vunpack.c.l.b16 %v503
  %v2348 = vunpack.c.l.b16 %v504
  %v2349 = vunpack.c.l.b16 %v505
  %v2350 = vunpack.c.l.b16 %v506
  %v2351 = vunpack.c.l.b16 %v507
  %v2352 = vunpack.c.l.b16 %v508
  %v2353 = vunpack.c.l.b16 %v509
  %v2354 = vunpack.c.l.b16 %v510
  %v2355 = vunpack.c.l.b16 %v511
  %v2356 = vunpack.c.l.b16 %v512
  %v2357 = vunpack.c.l.b16 %v513
  %v2358 = vunpack.c.l.b16 %v514
  %v2359 = vunpack.c.l.b16 %v515
  %v2360 = vunpack.c.l.b16 %v516
  %v2361 = vunpack.c.l.b16 %v517
  %v2362 = vunpack.c.l.b16 %v518
  %v2363 = vunpack.c.l.b16 %v519
  %v2364 = vunpack.c.l.b16 %v520
  %v2365 = vunpack.c.l.b16 %v521
  %v2366 = vunpack.c.l.b16 %v522
  %v2367 = vunpack.c.l.b16 %v523
  %v2368 = vunpack.c.l.b16 %v524
  %v2369 = vunpack.c.l.b16 %v525
  %v2370 = vunpack.c.l.b16 %v526
  %v2371 = vunpack.c.l.b16 %v527
  %v2372 = vunpack.c.l.b16 %v528
  %v2373 = vunpack.c.l.b16 %v529
  %v2374 = vunpack.c.l.b16 %v530
  %v2375 = vunpack.c.l.b16 %v531
  %v2376 = vunpack.c.l.b16 %v532
  %v2377 = vunpack.c.l.b16 %v533
  %v2378 = vunpack.c.l.b16 %v534
  %v2379 = vunpack.c.l.b16 %v535
  %v2380 = vunpack.c.l.b16 %v536
  %v2381 = vunpack.c.l.b16 %v537
  %v2382 = vunpack.c.l.b16 %v538
  %v2383 = vunpack.c.l.b16 %v539
  %v2384 = vunpack.c.l.b16 %v540
  %v2385 = vunpack.c.l.b16 %v541
  %v2386 = vunpack.c.l.b16 %v542
  %v2387 = vunpack.c.l.b16 %v543
  %v2388 = vunpack.c.l.b16 %v544
  %v2389 = vunpack.c.l.b16 %v545
  %v2390 = vunpack.c.l.b16 %v546
  %v2391 = vunpack.c.l.b16 %v547
  %v2392 = vunpack.c.l.b16 %v548
  %v2393 = vunpack.c.l.b16 %v549
  %v2394 = vunpack.c.l.b16 %v550
  %v2395 = vunpack.c.l.b16 %v551
  %v2396 = vunpack.c.l.b16 %v552
  %v2397 = vunpack.c.l.b16 %v553
  %v2398 = vunpack.c.l.b16 %v554
  %v2399 = vunpack.c.l.b16 %v555
  %v2400 = vunpack.c.l.b16 %v556
  %v2401 = vunpack.c.l.b16 %v557
  %v2402 = vunpack.c.l.b16 %v558
  %v2403 = vunpack.c.l.b16 %v559
  %v2404 = vunpack.c.l.b16 %v560
  %v2405 = vunpack.c.l.b16 %v561
  %v2406 = vunpack.c.l.b16 %v562
  %v2407 = vunpack.c.l.b16 %v563
  %v2408 = vunpack.c.l.b16 %v564
  %v2409 = vunpack.c.l.b16 %v565
  %v2410 = vunpack.c.l.b16 %v566
  %v2411 = vunpack.c.l.b16 %v567
  %v2412 = vunpack.c.l.b16 %v568
  %v2413 = vunpack.c.l.b16 %v569
  %v2414 = vunpack.c.l.b16 %v570
  %v2415 = vunpack.c.l.b16 %v571
  %v2416 = vunpack.c.l.b16 %v572
  %v2417 = vunpack.c.l.b16 %v573
  %v2418 = vunpack.c.l.b16 %v574
  %v2419 = vunpack.c.l.b16 %v575
  %v2420 = vunpack.c.l.b16 %v576
  %v2421 = vunpack.c.l.b16 %v577
  %v2422 = vunpack.c.l.b16 %v578
  %v2423 = vunpack.c.l.b16 %v579
  %v2424 = vunpack.c.l.b16 %v580
  %v2425 = vunpack.c.l.b16 %v581
  %v2426 = vunpack.c.l.b16 %v582
  %v2427 = vunpack.c.l.b16 %v583
  %v2428 = vpack.c.b16 %v2109, %v2108
  %v2429 = vpack.c.b16 %v2111, %v2110
  %v2430 = vpack.c.b16 %v2113, %v2112
  %v2431 = vpack.c.b16 %v2115, %v2114
  %v2432 = vpack.c.b16 %v2117, %v2116
  %v2433 = vpack.c.b16 %v2119, %v2118
  %v2434 = vpack.c.b16 %v2121, %v2120
  %v2435 = vpack.c.b16 %v2123, %v2122
  %v2436 = vpack.c.b16 %v2125, %v2124
  %v2437 = vpack.c.b16 %v2127, %v2126
  %v2438 = vpack.c.b16 %v2129, %v2128
  %v2439 = vpack.c.b16 %v2131, %v2130
  %v2440 = vpack.c.b16 %v2133, %v2132
  %v2441 = vpack.c.b16 %v2135, %v2134
  %v2442 = vpack.c.b16 %v2137, %v2136
  %v2443 = vpack.c.b16 %v2139, %v2138
  %v2444 = vpack.c.b16 %v2141, %v2140
  %v2445 = vpack.c.b16 %v2143, %v2142
  %v2446 = vpack.c.b16 %v2145, %v2144
  %v2447 = vpack.c.b16 %v2147, %v2146
  %v2448 = vpack.c.b16 %v2149, %v2148
  %v2449 = vpack.c.b16 %v2151, %v2150
  %v2450 = vpack.c.b16 %v2153, %v2152
  %v2451 = vpack.c.b16 %v2155, %v2154
  %v2452 = vpack.c.b16 %v2157, %v2156
  %v2453 = vpack.c.b16 %v2159, %v2158
  %v2454 = vpack.c.b16 %v2161, %v2160
  %v2455 = vpack.c.b16 %v2163, %v2162
  %v2456 = vpack.c.b16 %v2165, %v2164
  %v2457 = vpack.c.b16 %v2167, %v2166
  %v2458 = vpack.c.b16 %v2169, %v2168
  %v2459 = vpack.c.b16 %v2171, %v2170
  %v2460 = vpack.c.b16 %v2173, %v2172
  %v2461 = vpack.c.b16 %v2175, %v2174
  %v2462 = vpack.c.b16 %v2177, %v2176
  %v2463 = vpack.c.b16 %v2179, %v2178
  %v2464 = vpack.c.b16 %v2181, %v2180
  %v2465 = vpack.c.b16 %v2183, %v2182
  %v2466 = vpack.c.b16 %v2185, %v2184
  %v2467 = vpack.c.b16 %v2187, %v2186
  %v2468 = vpack.c.b16 %v2189, %v2188
  %v2469 = vpack.c.b16 %v2191, %v2190
  %v2470 = vpack.c.b16 %v2193, %v2192
  %v2471 = vpack.c.b16 %v2195, %v2194
  %v2472 = vpack.c.b16 %v2197, %v2196
  %v2473 = vpack.c.b16 %v2199, %v2198
  %v2474 = vpack.c.b16 %v2201, %v2200
  %v2475 = vpack.c.b16 %v2203, %v2202
  %v2476 = vpack.c.b16 %v2205, %v2204
  %v2477 = vpack.c.b16 %v2207, %v2206
  %v2478 = vpack.c.b16 %v2209, %v2208
  %v2479 = vpack.c.b16 %v2211, %v2210
  %v2480 = vpack.c.b16 %v2213, %v2212
  %v2481 = vpack.c.b16 %v2215, %v2214
  %v2482 = vpack.c.b16 %v2217, %v2216
  %v2483 = vpack.c.b16 %v2219, %v2218
  %v2484 = vpack.c.b16 %v2221, %v2220
  %v2485 = vpack.c.b16 %v2223, %v2222
  %v2486 = vpack.c.b16 %v2225, %v2224
  %v2487 = vpack.c.b16 %v2227, %v2226
  %v2488 = vpack.c.b16 %v2229, %v2228
  %v2489 = vpack.c.b16 %v2231, %v2230
  %v2490 = vpack.c.b16 %v2233, %v2232
  %v2491 = vpack.c.b16 %v2235, %v2234
  %v2492 = vpack.c.b16 %v2237, %v2236
  %v2493 = vpack.c.b16 %v2239, %v2238
  %v2494 = vpack.c.b16 %v2241, %v2240
  %v2495 = vpack.c.b16 %v2243, %v2242
  %v2496 = vpack.c.b16 %v2245, %v2244
  %v2497 = vpack.c.b16 %v2247, %v2246
  %v2498 = vpack.c.b16 %v2249, %v2248
  %v2499 = vpack.c.b16 %v2251, %v2250
  %v2500 = vpack.c.b16 %v2253, %v2252
  %v2501 = vpack.c.b16 %v2255, %v2254
  %v2502 = vpack.c.b16 %v2257, %v2256
  %v2503 = vpack.c.b16 %v2259, %v2258
  %v2504 = vpack.c.b16 %v2261, %v2260
  %v2505 = vpack.c.b16 %v2263, %v2262
  %v2506 = vpack.c.b16 %v2265, %v2264
  %v2507 = vpack.c.b16 %v2267, %v2266
  %v2508 = vpack.c.b16 %v2269, %v2268
  %v2509 = vpack.c.b16 %v2271, %v2270
  %v2510 = vpack.c.b16 %v2273, %v2272
  %v2511 = vpack.c.b16 %v2275, %v2274
  %v2512 = vpack.c.b16 %v2277, %v2276
  %v2513 = vpack.c.b16 %v2279, %v2278
  %v2514 = vpack.c.b16 %v2281, %v2280
  %v2515 = vpack.c.b16 %v2283, %v2282
  %v2516 = vpack.c.b16 %v2285, %v2284
  %v2517 = vpack.c.b16 %v2287, %v2286
  %v2518 = vpack.c.b16 %v2289, %v2288
  %v2519 = vpack.c.b16 %v2291, %v2290
  %v2520 = vpack.c.b16 %v2293, %v2292
  %v2521 = vpack.c.b16 %v2295, %v2294
  %v2522 = vpack.c.b16 %v2297, %v2296
  %v2523 = vpack.c.b16 %v2299, %v2298
  %v2524 = vpack.c.b16 %v2301, %v2300
  %v2525 = vpack.c.b16 %v2303, %v2302
  %v2526 = vpack.c.b16 %v2305, %v2304
  %v2527 = vpack.c.b16 %v2307, %v2306
  %v2528 = vpack.c.b16 %v2309, %v2308
  %v2529 = vpack.c.b16 %v2311, %v2310
  %v2530 = vpack.c.b16 %v2313, %v2312
  %v2531 = vpack.c.b16 %v2315, %v2314
  %v2532 = vpack.c.b16 %v2317, %v2316
  %v2533 = vpack.c.b16 %v2319, %v2318
  %v2534 = vpack.c.b16 %v2321, %v2320
  %v2535 = vpack.c.b16 %v2323, %v2322
  %v2536 = vpack.c.b16 %v2325, %v2324
  %v2537 = vpack.c.b16 %v2327, %v2326
  %v2538 = vpack.c.b16 %v2329, %v2328
  %v2539 = vpack.c.b16 %v2331, %v2330
  %v2540 = vpack.c.b16 %v2333, %v2332
  %v2541 = vpack.c.b16 %v2335, %v2334
  %v2542 = vpack.c.b16 %v2337, %v2336
  %v2543 = vpack.c.b16 %v2339, %v2338
  %v2544 = vpack.c.b16 %v2341, %v2340
  %v2545 = vpack.c.b16 %v2343, %v2342
  %v2546 = vpack.c.b16 %v2345, %v2344
  %v2547 = vpack.c.b16 %v2347, %v2346
  %v2548 = vpack.c.b16 %v2349, %v2348
  %v2549 = vpack.c.b16 %v2351, %v2350
  %v2550 = vpack.c.b16 %v2353, %v2352
  %v2551 = vpack.c.b16 %v2355, %v2354
  %v2552 = vpack.c.b16 %v2357, %v2356
  %v2553 = vpack.c.b16 %v2359, %v2358
  %v2554 = vpack.c.b16 %v2361, %v2360
  %v2555 = vpack.c.b16 %v2363, %v2362
  %v2556 = vpack.c.b16 %v2365, %v2364
  %v2557 = vpack.c.b16 %v2367, %v2366
  %v2558 = vpack.c.b16 %v2369, %v2368
  %v2559 = vpack.c.b16 %v2371, %v2370
  %v2560 = vpack.c.b16 %v2373, %v2372
  %v2561 = vpack.c.b16 %v2375, %v2374
  %v2562 = vpack.c.b16 %v2377, %v2376
  %v2563 = vpack.c.b16 %v2379, %v2378
  %v2564 = vpack.c.b16 %v2381, %v2380
  %v2565 = vpack.c.b16 %v2383, %v2382
  %v2566 = vpack.c.b16 %v2385, %v2384
  %v2567 = vpack.c.b16 %v2387, %v2386
  %v2568 = vpack.c.b16 %v2389, %v2388
  %v2569 = vpack.c.b16 %v2391, %v2390
  %v2570 = vpack.c.b16 %v2393, %v2392
  %v2571 = vpack.c.b16 %v2395, %v2394
  %v2572 = vpack.c.b16 %v2397, %v2396
  %v2573 = vpack.c.b16 %v2399, %v2398
  %v2574 = vpack.c.b16 %v2401, %v2400
  %v2575 = vpack.c.b16 %v2403, %v2402
  %v2576 = vpack.c.b16 %v2405, %v2404
  %v2577 = vpack.c.b16 %v2407, %v2406
  %v2578 = vpack.c.b16 %v2409, %v2408
  %v2579 = vpack.c.b16 %v2411, %v2410
  %v2580 = vpack.c.b16 %v2413, %v2412
  %v2581 = vpack.c.b16 %v2415, %v2414
  %v2582 = vpack.c.b16 %v2417, %v2416
  %v2583 = vpack.c.b16 %v2419, %v2418
  %v2584 = vpack.c.b16 %v2421, %v2420
  %v2585 = vpack.c.b16 %v2423, %v2422
  %v2586 = vpack.c.b16 %v2425, %v2424
  %v2587 = vpack.c.b16 %v2427, %v2426
  %2748 = vmatpush.bf16.msra.mxu0 %v2435
  %2749 = vmatpush.bf16.msra.mxu0 %v2434
  %2750 = vmatpush.bf16.msra.mxu0 %v2433
  %2751 = vmatpush.bf16.msra.mxu0 %v2432
  %2752 = vmatpush.bf16.msra.mxu0 %v2431
  %2753 = vmatpush.bf16.msra.mxu0 %v2430
  %2754 = vmatpush.bf16.msra.mxu0 %v2429
  %2755 = vmatpush.bf16.msra.mxu0 %v2428
  %2756 = vmatmul.bf16.gmra.mxu0 %v1308
  %v2757 = vpop.f32.mrf.mxu0
  %v2758 = vadd.f32 %v586, %v2757
  %v2759 = vpop.f32.mrf.mxu0
  %v2760 = vadd.f32 %v586, %v2759
  %2761 = vmatmul.bf16.gmra.mxu0 %v1328
  %v2762 = vpop.f32.mrf.mxu0
  %v2763 = vadd.f32 %v586, %v2762
  %v2764 = vpop.f32.mrf.mxu0
  %v2765 = vadd.f32 %v586, %v2764
  %2766 = vmatmul.bf16.gmra.mxu0 %v1348
  %v2767 = vpop.f32.mrf.mxu0
  %v2768 = vadd.f32 %v586, %v2767
  %v2769 = vpop.f32.mrf.mxu0
  %v2770 = vadd.f32 %v586, %v2769
  %2771 = vmatmul.bf16.gmra.mxu0 %v1368
  %v2772 = vpop.f32.mrf.mxu0
  %v2773 = vadd.f32 %v586, %v2772
  %v2774 = vpop.f32.mrf.mxu0
  %v2775 = vadd.f32 %v586, %v2774
  %2776 = vmatmul.bf16.gmra.mxu0 %v1388
  %v2777 = vpop.f32.mrf.mxu0
  %v2778 = vadd.f32 %v586, %v2777
  %v2779 = vpop.f32.mrf.mxu0
  %v2780 = vadd.f32 %v586, %v2779
  %2781 = vmatmul.bf16.gmra.mxu0 %v1408
  %v2782 = vpop.f32.mrf.mxu0
  %v2783 = vadd.f32 %v586, %v2782
  %v2784 = vpop.f32.mrf.mxu0
  %v2785 = vadd.f32 %v586, %v2784
  %2786 = vmatmul.bf16.gmra.mxu0 %v1428
  %v2787 = vpop.f32.mrf.mxu0
  %v2788 = vadd.f32 %v586, %v2787
  %v2789 = vpop.f32.mrf.mxu0
  %v2790 = vadd.f32 %v586, %v2789
  %2791 = vmatmul.bf16.gmra.mxu0 %v1448
  %v2792 = vpop.f32.mrf.mxu0
  %v2793 = vadd.f32 %v586, %v2792
  %v2794 = vpop.f32.mrf.mxu0
  %v2795 = vadd.f32 %v586, %v2794
  %2796 = vmatmul.bf16.gmra.mxu0 %v1468
  %v2797 = vpop.f32.mrf.mxu0
  %v2798 = vadd.f32 %v586, %v2797
  %v2799 = vpop.f32.mrf.mxu0
  %v2800 = vadd.f32 %v586, %v2799
  %2801 = vmatmul.bf16.gmra.mxu0 %v1488
  %v2802 = vpop.f32.mrf.mxu0
  %v2803 = vadd.f32 %v586, %v2802
  %v2804 = vpop.f32.mrf.mxu0
  %v2805 = vadd.f32 %v586, %v2804
  %2806 = vmatmul.bf16.gmra.mxu0 %v1508
  %v2807 = vpop.f32.mrf.mxu0
  %v2808 = vadd.f32 %v586, %v2807
  %v2809 = vpop.f32.mrf.mxu0
  %v2810 = vadd.f32 %v586, %v2809
  %2811 = vmatmul.bf16.gmra.mxu0 %v1528
  %v2812 = vpop.f32.mrf.mxu0
  %v2813 = vadd.f32 %v586, %v2812
  %v2814 = vpop.f32.mrf.mxu0
  %v2815 = vadd.f32 %v586, %v2814
  %2816 = vdwg.mxu0
  %2817 = vmatpush.bf16.msra.mxu0 %v2443
  %2818 = vmatpush.bf16.msra.mxu0 %v2442
  %2819 = vmatpush.bf16.msra.mxu0 %v2441
  %2820 = vmatpush.bf16.msra.mxu0 %v2440
  %2821 = vmatpush.bf16.msra.mxu0 %v2439
  %2822 = vmatpush.bf16.msra.mxu0 %v2438
  %2823 = vmatpush.bf16.msra.mxu0 %v2437
  %2824 = vmatpush.bf16.msra.mxu0 %v2436
  %2825 = vmatmul.bf16.gmra.mxu0 %v1309
  %v2826 = vpop.f32.mrf.mxu0
  %v2827 = vadd.f32 %v2758, %v2826
  %v2828 = vpop.f32.mrf.mxu0
  %v2829 = vadd.f32 %v2760, %v2828
  %2830 = vmatmul.bf16.gmra.mxu0 %v1329
  %v2831 = vpop.f32.mrf.mxu0
  %v2832 = vadd.f32 %v2763, %v2831
  %v2833 = vpop.f32.mrf.mxu0
  %v2834 = vadd.f32 %v2765, %v2833
  %2835 = vmatmul.bf16.gmra.mxu0 %v1349
  %v2836 = vpop.f32.mrf.mxu0
  %v2837 = vadd.f32 %v2768, %v2836
  %v2838 = vpop.f32.mrf.mxu0
  %v2839 = vadd.f32 %v2770, %v2838
  %2840 = vmatmul.bf16.gmra.mxu0 %v1369
  %v2841 = vpop.f32.mrf.mxu0
  %v2842 = vadd.f32 %v2773, %v2841
  %v2843 = vpop.f32.mrf.mxu0
  %v2844 = vadd.f32 %v2775, %v2843
  %2845 = vmatmul.bf16.gmra.mxu0 %v1389
  %v2846 = vpop.f32.mrf.mxu0
  %v2847 = vadd.f32 %v2778, %v2846
  %v2848 = vpop.f32.mrf.mxu0
  %v2849 = vadd.f32 %v2780, %v2848
  %2850 = vmatmul.bf16.gmra.mxu0 %v1409
  %v2851 = vpop.f32.mrf.mxu0
  %v2852 = vadd.f32 %v2783, %v2851
  %v2853 = vpop.f32.mrf.mxu0
  %v2854 = vadd.f32 %v2785, %v2853
  %2855 = vmatmul.bf16.gmra.mxu0 %v1429
  %v2856 = vpop.f32.mrf.mxu0
  %v2857 = vadd.f32 %v2788, %v2856
  %v2858 = vpop.f32.mrf.mxu0
  %v2859 = vadd.f32 %v2790, %v2858
  %2860 = vmatmul.bf16.gmra.mxu0 %v1449
  %v2861 = vpop.f32.mrf.mxu0
  %v2862 = vadd.f32 %v2793, %v2861
  %v2863 = vpop.f32.mrf.mxu0
  %v2864 = vadd.f32 %v2795, %v2863
  %2865 = vmatmul.bf16.gmra.mxu0 %v1469
  %v2866 = vpop.f32.mrf.mxu0
  %v2867 = vadd.f32 %v2798, %v2866
  %v2868 = vpop.f32.mrf.mxu0
  %v2869 = vadd.f32 %v2800, %v2868
  %2870 = vmatmul.bf16.gmra.mxu0 %v1489
  %v2871 = vpop.f32.mrf.mxu0
  %v2872 = vadd.f32 %v2803, %v2871
  %v2873 = vpop.f32.mrf.mxu0
  %v2874 = vadd.f32 %v2805, %v2873
  %2875 = vmatmul.bf16.gmra.mxu0 %v1509
  %v2876 = vpop.f32.mrf.mxu0
  %v2877 = vadd.f32 %v2808, %v2876
  %v2878 = vpop.f32.mrf.mxu0
  %v2879 = vadd.f32 %v2810, %v2878
  %2880 = vmatmul.bf16.gmra.mxu0 %v1529
  %v2881 = vpop.f32.mrf.mxu0
  %v2882 = vadd.f32 %v2813, %v2881
  %v2883 = vpop.f32.mrf.mxu0
  %v2884 = vadd.f32 %v2815, %v2883
  %2885 = vdwg.mxu0
  %2886 = vmatpush.bf16.msra.mxu0 %v2451
  %2887 = vmatpush.bf16.msra.mxu0 %v2450
  %2888 = vmatpush.bf16.msra.mxu0 %v2449
  %2889 = vmatpush.bf16.msra.mxu0 %v2448
  %2890 = vmatpush.bf16.msra.mxu0 %v2447
  %2891 = vmatpush.bf16.msra.mxu0 %v2446
  %2892 = vmatpush.bf16.msra.mxu0 %v2445
  %2893 = vmatpush.bf16.msra.mxu0 %v2444
  %2894 = vmatmul.bf16.gmra.mxu0 %v1310
  %v2895 = vpop.f32.mrf.mxu0
  %v2896 = vadd.f32 %v2827, %v2895
  %v2897 = vpop.f32.mrf.mxu0
  %v2898 = vadd.f32 %v2829, %v2897
  %2899 = vmatmul.bf16.gmra.mxu0 %v1330
  %v2900 = vpop.f32.mrf.mxu0
  %v2901 = vadd.f32 %v2832, %v2900
  %v2902 = vpop.f32.mrf.mxu0
  %v2903 = vadd.f32 %v2834, %v2902
  %2904 = vmatmul.bf16.gmra.mxu0 %v1350
  %v2905 = vpop.f32.mrf.mxu0
  %v2906 = vadd.f32 %v2837, %v2905
  %v2907 = vpop.f32.mrf.mxu0
  %v2908 = vadd.f32 %v2839, %v2907
  %2909 = vmatmul.bf16.gmra.mxu0 %v1370
  %v2910 = vpop.f32.mrf.mxu0
  %v2911 = vadd.f32 %v2842, %v2910
  %v2912 = vpop.f32.mrf.mxu0
  %v2913 = vadd.f32 %v2844, %v2912
  %2914 = vmatmul.bf16.gmra.mxu0 %v1390
  %v2915 = vpop.f32.mrf.mxu0
  %v2916 = vadd.f32 %v2847, %v2915
  %v2917 = vpop.f32.mrf.mxu0
  %v2918 = vadd.f32 %v2849, %v2917
  %2919 = vmatmul.bf16.gmra.mxu0 %v1410
  %v2920 = vpop.f32.mrf.mxu0
  %v2921 = vadd.f32 %v2852, %v2920
  %v2922 = vpop.f32.mrf.mxu0
  %v2923 = vadd.f32 %v2854, %v2922
  %2924 = vmatmul.bf16.gmra.mxu0 %v1430
  %v2925 = vpop.f32.mrf.mxu0
  %v2926 = vadd.f32 %v2857, %v2925
  %v2927 = vpop.f32.mrf.mxu0
  %v2928 = vadd.f32 %v2859, %v2927
  %2929 = vmatmul.bf16.gmra.mxu0 %v1450
  %v2930 = vpop.f32.mrf.mxu0
  %v2931 = vadd.f32 %v2862, %v2930
  %v2932 = vpop.f32.mrf.mxu0
  %v2933 = vadd.f32 %v2864, %v2932
  %2934 = vmatmul.bf16.gmra.mxu0 %v1470
  %v2935 = vpop.f32.mrf.mxu0
  %v2936 = vadd.f32 %v2867, %v2935
  %v2937 = vpop.f32.mrf.mxu0
  %v2938 = vadd.f32 %v2869, %v2937
  %2939 = vmatmul.bf16.gmra.mxu0 %v1490
  %v2940 = vpop.f32.mrf.mxu0
  %v2941 = vadd.f32 %v2872, %v2940
  %v2942 = vpop.f32.mrf.mxu0
  %v2943 = vadd.f32 %v2874, %v2942
  %2944 = vmatmul.bf16.gmra.mxu0 %v1510
  %v2945 = vpop.f32.mrf.mxu0
  %v2946 = vadd.f32 %v2877, %v2945
  %v2947 = vpop.f32.mrf.mxu0
  %v2948 = vadd.f32 %v2879, %v2947
  %2949 = vmatmul.bf16.gmra.mxu0 %v1530
  %v2950 = vpop.f32.mrf.mxu0
  %v2951 = vadd.f32 %v2882, %v2950
  %v2952 = vpop.f32.mrf.mxu0
  %v2953 = vadd.f32 %v2884, %v2952
  %2954 = vdwg.mxu0
  %2955 = vmatpush.bf16.msra.mxu0 %v2459
  %2956 = vmatpush.bf16.msra.mxu0 %v2458
  %2957 = vmatpush.bf16.msra.mxu0 %v2457
  %2958 = vmatpush.bf16.msra.mxu0 %v2456
  %2959 = vmatpush.bf16.msra.mxu0 %v2455
  %2960 = vmatpush.bf16.msra.mxu0 %v2454
  %2961 = vmatpush.bf16.msra.mxu0 %v2453
  %2962 = vmatpush.bf16.msra.mxu0 %v2452
  %2963 = vmatmul.bf16.gmra.mxu0 %v1311
  %v2964 = vpop.f32.mrf.mxu0
  %v2965 = vadd.f32 %v2896, %v2964
  %v2966 = vpop.f32.mrf.mxu0
  %v2967 = vadd.f32 %v2898, %v2966
  %2968 = vmatmul.bf16.gmra.mxu0 %v1331
  %v2969 = vpop.f32.mrf.mxu0
  %v2970 = vadd.f32 %v2901, %v2969
  %v2971 = vpop.f32.mrf.mxu0
  %v2972 = vadd.f32 %v2903, %v2971
  %2973 = vmatmul.bf16.gmra.mxu0 %v1351
  %v2974 = vpop.f32.mrf.mxu0
  %v2975 = vadd.f32 %v2906, %v2974
  %v2976 = vpop.f32.mrf.mxu0
  %v2977 = vadd.f32 %v2908, %v2976
  %2978 = vmatmul.bf16.gmra.mxu0 %v1371
  %v2979 = vpop.f32.mrf.mxu0
  %v2980 = vadd.f32 %v2911, %v2979
  %v2981 = vpop.f32.mrf.mxu0
  %v2982 = vadd.f32 %v2913, %v2981
  %2983 = vmatmul.bf16.gmra.mxu0 %v1391
  %v2984 = vpop.f32.mrf.mxu0
  %v2985 = vadd.f32 %v2916, %v2984
  %v2986 = vpop.f32.mrf.mxu0
  %v2987 = vadd.f32 %v2918, %v2986
  %2988 = vmatmul.bf16.gmra.mxu0 %v1411
  %v2989 = vpop.f32.mrf.mxu0
  %v2990 = vadd.f32 %v2921, %v2989
  %v2991 = vpop.f32.mrf.mxu0
  %v2992 = vadd.f32 %v2923, %v2991
  %2993 = vmatmul.bf16.gmra.mxu0 %v1431
  %v2994 = vpop.f32.mrf.mxu0
  %v2995 = vadd.f32 %v2926, %v2994
  %v2996 = vpop.f32.mrf.mxu0
  %v2997 = vadd.f32 %v2928, %v2996
  %2998 = vmatmul.bf16.gmra.mxu0 %v1451
  %v2999 = vpop.f32.mrf.mxu0
  %v3000 = vadd.f32 %v2931, %v2999
  %v3001 = vpop.f32.mrf.mxu0
  %v3002 = vadd.f32 %v2933, %v3001
  %3003 = vmatmul.bf16.gmra.mxu0 %v1471
  %v3004 = vpop.f32.mrf.mxu0
  %v3005 = vadd.f32 %v2936, %v3004
  %v3006 = vpop.f32.mrf.mxu0
  %v3007 = vadd.f32 %v2938, %v3006
  %3008 = vmatmul.bf16.gmra.mxu0 %v1491
  %v3009 = vpop.f32.mrf.mxu0
  %v3010 = vadd.f32 %v2941, %v3009
  %v3011 = vpop.f32.mrf.mxu0
  %v3012 = vadd.f32 %v2943, %v3011
  %3013 = vmatmul.bf16.gmra.mxu0 %v1511
  %v3014 = vpop.f32.mrf.mxu0
  %v3015 = vadd.f32 %v2946, %v3014
  %v3016 = vpop.f32.mrf.mxu0
  %v3017 = vadd.f32 %v2948, %v3016
  %3018 = vmatmul.bf16.gmra.mxu0 %v1531
  %v3019 = vpop.f32.mrf.mxu0
  %v3020 = vadd.f32 %v2951, %v3019
  %v3021 = vpop.f32.mrf.mxu0
  %v3022 = vadd.f32 %v2953, %v3021
  %3023 = vdwg.mxu0
  %3024 = vmatpush.bf16.msra.mxu0 %v2467
  %3025 = vmatpush.bf16.msra.mxu0 %v2466
  %3026 = vmatpush.bf16.msra.mxu0 %v2465
  %3027 = vmatpush.bf16.msra.mxu0 %v2464
  %3028 = vmatpush.bf16.msra.mxu0 %v2463
  %3029 = vmatpush.bf16.msra.mxu0 %v2462
  %3030 = vmatpush.bf16.msra.mxu0 %v2461
  %3031 = vmatpush.bf16.msra.mxu0 %v2460
  %3032 = vmatmul.bf16.gmra.mxu0 %v1312
  %v3033 = vpop.f32.mrf.mxu0
  %v3034 = vadd.f32 %v2965, %v3033
  %v3035 = vpop.f32.mrf.mxu0
  %v3036 = vadd.f32 %v2967, %v3035
  %3037 = vmatmul.bf16.gmra.mxu0 %v1332
  %v3038 = vpop.f32.mrf.mxu0
  %v3039 = vadd.f32 %v2970, %v3038
  %v3040 = vpop.f32.mrf.mxu0
  %v3041 = vadd.f32 %v2972, %v3040
  %3042 = vmatmul.bf16.gmra.mxu0 %v1352
  %v3043 = vpop.f32.mrf.mxu0
  %v3044 = vadd.f32 %v2975, %v3043
  %v3045 = vpop.f32.mrf.mxu0
  %v3046 = vadd.f32 %v2977, %v3045
  %3047 = vmatmul.bf16.gmra.mxu0 %v1372
  %v3048 = vpop.f32.mrf.mxu0
  %v3049 = vadd.f32 %v2980, %v3048
  %v3050 = vpop.f32.mrf.mxu0
  %v3051 = vadd.f32 %v2982, %v3050
  %3052 = vmatmul.bf16.gmra.mxu0 %v1392
  %v3053 = vpop.f32.mrf.mxu0
  %v3054 = vadd.f32 %v2985, %v3053
  %v3055 = vpop.f32.mrf.mxu0
  %v3056 = vadd.f32 %v2987, %v3055
  %3057 = vmatmul.bf16.gmra.mxu0 %v1412
  %v3058 = vpop.f32.mrf.mxu0
  %v3059 = vadd.f32 %v2990, %v3058
  %v3060 = vpop.f32.mrf.mxu0
  %v3061 = vadd.f32 %v2992, %v3060
  %3062 = vmatmul.bf16.gmra.mxu0 %v1432
  %v3063 = vpop.f32.mrf.mxu0
  %v3064 = vadd.f32 %v2995, %v3063
  %v3065 = vpop.f32.mrf.mxu0
  %v3066 = vadd.f32 %v2997, %v3065
  %3067 = vmatmul.bf16.gmra.mxu0 %v1452
  %v3068 = vpop.f32.mrf.mxu0
  %v3069 = vadd.f32 %v3000, %v3068
  %v3070 = vpop.f32.mrf.mxu0
  %v3071 = vadd.f32 %v3002, %v3070
  %3072 = vmatmul.bf16.gmra.mxu0 %v1472
  %v3073 = vpop.f32.mrf.mxu0
  %v3074 = vadd.f32 %v3005, %v3073
  %v3075 = vpop.f32.mrf.mxu0
  %v3076 = vadd.f32 %v3007, %v3075
  %3077 = vmatmul.bf16.gmra.mxu0 %v1492
  %v3078 = vpop.f32.mrf.mxu0
  %v3079 = vadd.f32 %v3010, %v3078
  %v3080 = vpop.f32.mrf.mxu0
  %v3081 = vadd.f32 %v3012, %v3080
  %3082 = vmatmul.bf16.gmra.mxu0 %v1512
  %v3083 = vpop.f32.mrf.mxu0
  %v3084 = vadd.f32 %v3015, %v3083
  %v3085 = vpop.f32.mrf.mxu0
  %v3086 = vadd.f32 %v3017, %v3085
  %3087 = vmatmul.bf16.gmra.mxu0 %v1532
  %v3088 = vpop.f32.mrf.mxu0
  %v3089 = vadd.f32 %v3020, %v3088
  %v3090 = vpop.f32.mrf.mxu0
  %v3091 = vadd.f32 %v3022, %v3090
  %3092 = vdwg.mxu0
  %3093 = vmatpush.bf16.msra.mxu0 %v2475
  %3094 = vmatpush.bf16.msra.mxu0 %v2474
  %3095 = vmatpush.bf16.msra.mxu0 %v2473
  %3096 = vmatpush.bf16.msra.mxu0 %v2472
  %3097 = vmatpush.bf16.msra.mxu0 %v2471
  %3098 = vmatpush.bf16.msra.mxu0 %v2470
  %3099 = vmatpush.bf16.msra.mxu0 %v2469
  %3100 = vmatpush.bf16.msra.mxu0 %v2468
  %3101 = vmatmul.bf16.gmra.mxu0 %v1313
  %v3102 = vpop.f32.mrf.mxu0
  %v3103 = vadd.f32 %v3034, %v3102
  %v3104 = vpop.f32.mrf.mxu0
  %v3105 = vadd.f32 %v3036, %v3104
  %3106 = vmatmul.bf16.gmra.mxu0 %v1333
  %v3107 = vpop.f32.mrf.mxu0
  %v3108 = vadd.f32 %v3039, %v3107
  %v3109 = vpop.f32.mrf.mxu0
  %v3110 = vadd.f32 %v3041, %v3109
  %3111 = vmatmul.bf16.gmra.mxu0 %v1353
  %v3112 = vpop.f32.mrf.mxu0
  %v3113 = vadd.f32 %v3044, %v3112
  %v3114 = vpop.f32.mrf.mxu0
  %v3115 = vadd.f32 %v3046, %v3114
  %3116 = vmatmul.bf16.gmra.mxu0 %v1373
  %v3117 = vpop.f32.mrf.mxu0
  %v3118 = vadd.f32 %v3049, %v3117
  %v3119 = vpop.f32.mrf.mxu0
  %v3120 = vadd.f32 %v3051, %v3119
  %3121 = vmatmul.bf16.gmra.mxu0 %v1393
  %v3122 = vpop.f32.mrf.mxu0
  %v3123 = vadd.f32 %v3054, %v3122
  %v3124 = vpop.f32.mrf.mxu0
  %v3125 = vadd.f32 %v3056, %v3124
  %3126 = vmatmul.bf16.gmra.mxu0 %v1413
  %v3127 = vpop.f32.mrf.mxu0
  %v3128 = vadd.f32 %v3059, %v3127
  %v3129 = vpop.f32.mrf.mxu0
  %v3130 = vadd.f32 %v3061, %v3129
  %3131 = vmatmul.bf16.gmra.mxu0 %v1433
  %v3132 = vpop.f32.mrf.mxu0
  %v3133 = vadd.f32 %v3064, %v3132
  %v3134 = vpop.f32.mrf.mxu0
  %v3135 = vadd.f32 %v3066, %v3134
  %3136 = vmatmul.bf16.gmra.mxu0 %v1453
  %v3137 = vpop.f32.mrf.mxu0
  %v3138 = vadd.f32 %v3069, %v3137
  %v3139 = vpop.f32.mrf.mxu0
  %v3140 = vadd.f32 %v3071, %v3139
  %3141 = vmatmul.bf16.gmra.mxu0 %v1473
  %v3142 = vpop.f32.mrf.mxu0
  %v3143 = vadd.f32 %v3074, %v3142
  %v3144 = vpop.f32.mrf.mxu0
  %v3145 = vadd.f32 %v3076, %v3144
  %3146 = vmatmul.bf16.gmra.mxu0 %v1493
  %v3147 = vpop.f32.mrf.mxu0
  %v3148 = vadd.f32 %v3079, %v3147
  %v3149 = vpop.f32.mrf.mxu0
  %v3150 = vadd.f32 %v3081, %v3149
  %3151 = vmatmul.bf16.gmra.mxu0 %v1513
  %v3152 = vpop.f32.mrf.mxu0
  %v3153 = vadd.f32 %v3084, %v3152
  %v3154 = vpop.f32.mrf.mxu0
  %v3155 = vadd.f32 %v3086, %v3154
  %3156 = vmatmul.bf16.gmra.mxu0 %v1533
  %v3157 = vpop.f32.mrf.mxu0
  %v3158 = vadd.f32 %v3089, %v3157
  %v3159 = vpop.f32.mrf.mxu0
  %v3160 = vadd.f32 %v3091, %v3159
  %3161 = vdwg.mxu0
  %3162 = vmatpush.bf16.msra.mxu0 %v2483
  %3163 = vmatpush.bf16.msra.mxu0 %v2482
  %3164 = vmatpush.bf16.msra.mxu0 %v2481
  %3165 = vmatpush.bf16.msra.mxu0 %v2480
  %3166 = vmatpush.bf16.msra.mxu0 %v2479
  %3167 = vmatpush.bf16.msra.mxu0 %v2478
  %3168 = vmatpush.bf16.msra.mxu0 %v2477
  %3169 = vmatpush.bf16.msra.mxu0 %v2476
  %3170 = vmatmul.bf16.gmra.mxu0 %v1314
  %v3171 = vpop.f32.mrf.mxu0
  %v3172 = vadd.f32 %v3103, %v3171
  %v3173 = vpop.f32.mrf.mxu0
  %v3174 = vadd.f32 %v3105, %v3173
  %3175 = vmatmul.bf16.gmra.mxu0 %v1334
  %v3176 = vpop.f32.mrf.mxu0
  %v3177 = vadd.f32 %v3108, %v3176
  %v3178 = vpop.f32.mrf.mxu0
  %v3179 = vadd.f32 %v3110, %v3178
  %3180 = vmatmul.bf16.gmra.mxu0 %v1354
  %v3181 = vpop.f32.mrf.mxu0
  %v3182 = vadd.f32 %v3113, %v3181
  %v3183 = vpop.f32.mrf.mxu0
  %v3184 = vadd.f32 %v3115, %v3183
  %3185 = vmatmul.bf16.gmra.mxu0 %v1374
  %v3186 = vpop.f32.mrf.mxu0
  %v3187 = vadd.f32 %v3118, %v3186
  %v3188 = vpop.f32.mrf.mxu0
  %v3189 = vadd.f32 %v3120, %v3188
  %3190 = vmatmul.bf16.gmra.mxu0 %v1394
  %v3191 = vpop.f32.mrf.mxu0
  %v3192 = vadd.f32 %v3123, %v3191
  %v3193 = vpop.f32.mrf.mxu0
  %v3194 = vadd.f32 %v3125, %v3193
  %3195 = vmatmul.bf16.gmra.mxu0 %v1414
  %v3196 = vpop.f32.mrf.mxu0
  %v3197 = vadd.f32 %v3128, %v3196
  %v3198 = vpop.f32.mrf.mxu0
  %v3199 = vadd.f32 %v3130, %v3198
  %3200 = vmatmul.bf16.gmra.mxu0 %v1434
  %v3201 = vpop.f32.mrf.mxu0
  %v3202 = vadd.f32 %v3133, %v3201
  %v3203 = vpop.f32.mrf.mxu0
  %v3204 = vadd.f32 %v3135, %v3203
  %3205 = vmatmul.bf16.gmra.mxu0 %v1454
  %v3206 = vpop.f32.mrf.mxu0
  %v3207 = vadd.f32 %v3138, %v3206
  %v3208 = vpop.f32.mrf.mxu0
  %v3209 = vadd.f32 %v3140, %v3208
  %3210 = vmatmul.bf16.gmra.mxu0 %v1474
  %v3211 = vpop.f32.mrf.mxu0
  %v3212 = vadd.f32 %v3143, %v3211
  %v3213 = vpop.f32.mrf.mxu0
  %v3214 = vadd.f32 %v3145, %v3213
  %3215 = vmatmul.bf16.gmra.mxu0 %v1494
  %v3216 = vpop.f32.mrf.mxu0
  %v3217 = vadd.f32 %v3148, %v3216
  %v3218 = vpop.f32.mrf.mxu0
  %v3219 = vadd.f32 %v3150, %v3218
  %3220 = vmatmul.bf16.gmra.mxu0 %v1514
  %v3221 = vpop.f32.mrf.mxu0
  %v3222 = vadd.f32 %v3153, %v3221
  %v3223 = vpop.f32.mrf.mxu0
  %v3224 = vadd.f32 %v3155, %v3223
  %3225 = vmatmul.bf16.gmra.mxu0 %v1534
  %v3226 = vpop.f32.mrf.mxu0
  %v3227 = vadd.f32 %v3158, %v3226
  %v3228 = vpop.f32.mrf.mxu0
  %v3229 = vadd.f32 %v3160, %v3228
  %3230 = vdwg.mxu0
  %3231 = vmatpush.bf16.msra.mxu0 %v2491
  %3232 = vmatpush.bf16.msra.mxu0 %v2490
  %3233 = vmatpush.bf16.msra.mxu0 %v2489
  %3234 = vmatpush.bf16.msra.mxu0 %v2488
  %3235 = vmatpush.bf16.msra.mxu0 %v2487
  %3236 = vmatpush.bf16.msra.mxu0 %v2486
  %3237 = vmatpush.bf16.msra.mxu0 %v2485
  %3238 = vmatpush.bf16.msra.mxu0 %v2484
  %3239 = vmatmul.bf16.gmra.mxu0 %v1315
  %v3240 = vpop.f32.mrf.mxu0
  %v3241 = vadd.f32 %v3172, %v3240
  %v3242 = vpop.f32.mrf.mxu0
  %v3243 = vadd.f32 %v3174, %v3242
  %3244 = vmatmul.bf16.gmra.mxu0 %v1335
  %v3245 = vpop.f32.mrf.mxu0
  %v3246 = vadd.f32 %v3177, %v3245
  %v3247 = vpop.f32.mrf.mxu0
  %v3248 = vadd.f32 %v3179, %v3247
  %3249 = vmatmul.bf16.gmra.mxu0 %v1355
  %v3250 = vpop.f32.mrf.mxu0
  %v3251 = vadd.f32 %v3182, %v3250
  %v3252 = vpop.f32.mrf.mxu0
  %v3253 = vadd.f32 %v3184, %v3252
  %3254 = vmatmul.bf16.gmra.mxu0 %v1375
  %v3255 = vpop.f32.mrf.mxu0
  %v3256 = vadd.f32 %v3187, %v3255
  %v3257 = vpop.f32.mrf.mxu0
  %v3258 = vadd.f32 %v3189, %v3257
  %3259 = vmatmul.bf16.gmra.mxu0 %v1395
  %v3260 = vpop.f32.mrf.mxu0
  %v3261 = vadd.f32 %v3192, %v3260
  %v3262 = vpop.f32.mrf.mxu0
  %v3263 = vadd.f32 %v3194, %v3262
  %3264 = vmatmul.bf16.gmra.mxu0 %v1415
  %v3265 = vpop.f32.mrf.mxu0
  %v3266 = vadd.f32 %v3197, %v3265
  %v3267 = vpop.f32.mrf.mxu0
  %v3268 = vadd.f32 %v3199, %v3267
  %3269 = vmatmul.bf16.gmra.mxu0 %v1435
  %v3270 = vpop.f32.mrf.mxu0
  %v3271 = vadd.f32 %v3202, %v3270
  %v3272 = vpop.f32.mrf.mxu0
  %v3273 = vadd.f32 %v3204, %v3272
  %3274 = vmatmul.bf16.gmra.mxu0 %v1455
  %v3275 = vpop.f32.mrf.mxu0
  %v3276 = vadd.f32 %v3207, %v3275
  %v3277 = vpop.f32.mrf.mxu0
  %v3278 = vadd.f32 %v3209, %v3277
  %3279 = vmatmul.bf16.gmra.mxu0 %v1475
  %v3280 = vpop.f32.mrf.mxu0
  %v3281 = vadd.f32 %v3212, %v3280
  %v3282 = vpop.f32.mrf.mxu0
  %v3283 = vadd.f32 %v3214, %v3282
  %3284 = vmatmul.bf16.gmra.mxu0 %v1495
  %v3285 = vpop.f32.mrf.mxu0
  %v3286 = vadd.f32 %v3217, %v3285
  %v3287 = vpop.f32.mrf.mxu0
  %v3288 = vadd.f32 %v3219, %v3287
  %3289 = vmatmul.bf16.gmra.mxu0 %v1515
  %v3290 = vpop.f32.mrf.mxu0
  %v3291 = vadd.f32 %v3222, %v3290
  %v3292 = vpop.f32.mrf.mxu0
  %v3293 = vadd.f32 %v3224, %v3292
  %3294 = vmatmul.bf16.gmra.mxu0 %v1535
  %v3295 = vpop.f32.mrf.mxu0
  %v3296 = vadd.f32 %v3227, %v3295
  %v3297 = vpop.f32.mrf.mxu0
  %v3298 = vadd.f32 %v3229, %v3297
  %3299 = vdwg.mxu0
  %3300 = vmatpush.bf16.msra.mxu0 %v2499
  %3301 = vmatpush.bf16.msra.mxu0 %v2498
  %3302 = vmatpush.bf16.msra.mxu0 %v2497
  %3303 = vmatpush.bf16.msra.mxu0 %v2496
  %3304 = vmatpush.bf16.msra.mxu0 %v2495
  %3305 = vmatpush.bf16.msra.mxu0 %v2494
  %3306 = vmatpush.bf16.msra.mxu0 %v2493
  %3307 = vmatpush.bf16.msra.mxu0 %v2492
  %3308 = vmatmul.bf16.gmra.mxu0 %v1316
  %v3309 = vpop.f32.mrf.mxu0
  %v3310 = vadd.f32 %v3241, %v3309
  %v3311 = vpop.f32.mrf.mxu0
  %v3312 = vadd.f32 %v3243, %v3311
  %3313 = vmatmul.bf16.gmra.mxu0 %v1336
  %v3314 = vpop.f32.mrf.mxu0
  %v3315 = vadd.f32 %v3246, %v3314
  %v3316 = vpop.f32.mrf.mxu0
  %v3317 = vadd.f32 %v3248, %v3316
  %3318 = vmatmul.bf16.gmra.mxu0 %v1356
  %v3319 = vpop.f32.mrf.mxu0
  %v3320 = vadd.f32 %v3251, %v3319
  %v3321 = vpop.f32.mrf.mxu0
  %v3322 = vadd.f32 %v3253, %v3321
  %3323 = vmatmul.bf16.gmra.mxu0 %v1376
  %v3324 = vpop.f32.mrf.mxu0
  %v3325 = vadd.f32 %v3256, %v3324
  %v3326 = vpop.f32.mrf.mxu0
  %v3327 = vadd.f32 %v3258, %v3326
  %3328 = vmatmul.bf16.gmra.mxu0 %v1396
  %v3329 = vpop.f32.mrf.mxu0
  %v3330 = vadd.f32 %v3261, %v3329
  %v3331 = vpop.f32.mrf.mxu0
  %v3332 = vadd.f32 %v3263, %v3331
  %3333 = vmatmul.bf16.gmra.mxu0 %v1416
  %v3334 = vpop.f32.mrf.mxu0
  %v3335 = vadd.f32 %v3266, %v3334
  %v3336 = vpop.f32.mrf.mxu0
  %v3337 = vadd.f32 %v3268, %v3336
  %3338 = vmatmul.bf16.gmra.mxu0 %v1436
  %v3339 = vpop.f32.mrf.mxu0
  %v3340 = vadd.f32 %v3271, %v3339
  %v3341 = vpop.f32.mrf.mxu0
  %v3342 = vadd.f32 %v3273, %v3341
  %3343 = vmatmul.bf16.gmra.mxu0 %v1456
  %v3344 = vpop.f32.mrf.mxu0
  %v3345 = vadd.f32 %v3276, %v3344
  %v3346 = vpop.f32.mrf.mxu0
  %v3347 = vadd.f32 %v3278, %v3346
  %3348 = vmatmul.bf16.gmra.mxu0 %v1476
  %v3349 = vpop.f32.mrf.mxu0
  %v3350 = vadd.f32 %v3281, %v3349
  %v3351 = vpop.f32.mrf.mxu0
  %v3352 = vadd.f32 %v3283, %v3351
  %3353 = vmatmul.bf16.gmra.mxu0 %v1496
  %v3354 = vpop.f32.mrf.mxu0
  %v3355 = vadd.f32 %v3286, %v3354
  %v3356 = vpop.f32.mrf.mxu0
  %v3357 = vadd.f32 %v3288, %v3356
  %3358 = vmatmul.bf16.gmra.mxu0 %v1516
  %v3359 = vpop.f32.mrf.mxu0
  %v3360 = vadd.f32 %v3291, %v3359
  %v3361 = vpop.f32.mrf.mxu0
  %v3362 = vadd.f32 %v3293, %v3361
  %3363 = vmatmul.bf16.gmra.mxu0 %v1536
  %v3364 = vpop.f32.mrf.mxu0
  %v3365 = vadd.f32 %v3296, %v3364
  %v3366 = vpop.f32.mrf.mxu0
  %v3367 = vadd.f32 %v3298, %v3366
  %3368 = vdwg.mxu0
  %3369 = vmatpush.bf16.msra.mxu0 %v2507
  %3370 = vmatpush.bf16.msra.mxu0 %v2506
  %3371 = vmatpush.bf16.msra.mxu0 %v2505
  %3372 = vmatpush.bf16.msra.mxu0 %v2504
  %3373 = vmatpush.bf16.msra.mxu0 %v2503
  %3374 = vmatpush.bf16.msra.mxu0 %v2502
  %3375 = vmatpush.bf16.msra.mxu0 %v2501
  %3376 = vmatpush.bf16.msra.mxu0 %v2500
  %3377 = vmatmul.bf16.gmra.mxu0 %v1317
  %v3378 = vpop.f32.mrf.mxu0
  %v3379 = vadd.f32 %v3310, %v3378
  %v3380 = vpop.f32.mrf.mxu0
  %v3381 = vadd.f32 %v3312, %v3380
  %3382 = vmatmul.bf16.gmra.mxu0 %v1337
  %v3383 = vpop.f32.mrf.mxu0
  %v3384 = vadd.f32 %v3315, %v3383
  %v3385 = vpop.f32.mrf.mxu0
  %v3386 = vadd.f32 %v3317, %v3385
  %3387 = vmatmul.bf16.gmra.mxu0 %v1357
  %v3388 = vpop.f32.mrf.mxu0
  %v3389 = vadd.f32 %v3320, %v3388
  %v3390 = vpop.f32.mrf.mxu0
  %v3391 = vadd.f32 %v3322, %v3390
  %3392 = vmatmul.bf16.gmra.mxu0 %v1377
  %v3393 = vpop.f32.mrf.mxu0
  %v3394 = vadd.f32 %v3325, %v3393
  %v3395 = vpop.f32.mrf.mxu0
  %v3396 = vadd.f32 %v3327, %v3395
  %3397 = vmatmul.bf16.gmra.mxu0 %v1397
  %v3398 = vpop.f32.mrf.mxu0
  %v3399 = vadd.f32 %v3330, %v3398
  %v3400 = vpop.f32.mrf.mxu0
  %v3401 = vadd.f32 %v3332, %v3400
  %3402 = vmatmul.bf16.gmra.mxu0 %v1417
  %v3403 = vpop.f32.mrf.mxu0
  %v3404 = vadd.f32 %v3335, %v3403
  %v3405 = vpop.f32.mrf.mxu0
  %v3406 = vadd.f32 %v3337, %v3405
  %3407 = vmatmul.bf16.gmra.mxu0 %v1437
  %v3408 = vpop.f32.mrf.mxu0
  %v3409 = vadd.f32 %v3340, %v3408
  %v3410 = vpop.f32.mrf.mxu0
  %v3411 = vadd.f32 %v3342, %v3410
  %3412 = vmatmul.bf16.gmra.mxu0 %v1457
  %v3413 = vpop.f32.mrf.mxu0
  %v3414 = vadd.f32 %v3345, %v3413
  %v3415 = vpop.f32.mrf.mxu0
  %v3416 = vadd.f32 %v3347, %v3415
  %3417 = vmatmul.bf16.gmra.mxu0 %v1477
  %v3418 = vpop.f32.mrf.mxu0
  %v3419 = vadd.f32 %v3350, %v3418
  %v3420 = vpop.f32.mrf.mxu0
  %v3421 = vadd.f32 %v3352, %v3420
  %3422 = vmatmul.bf16.gmra.mxu0 %v1497
  %v3423 = vpop.f32.mrf.mxu0
  %v3424 = vadd.f32 %v3355, %v3423
  %v3425 = vpop.f32.mrf.mxu0
  %v3426 = vadd.f32 %v3357, %v3425
  %3427 = vmatmul.bf16.gmra.mxu0 %v1517
  %v3428 = vpop.f32.mrf.mxu0
  %v3429 = vadd.f32 %v3360, %v3428
  %v3430 = vpop.f32.mrf.mxu0
  %v3431 = vadd.f32 %v3362, %v3430
  %3432 = vmatmul.bf16.gmra.mxu0 %v1537
  %v3433 = vpop.f32.mrf.mxu0
  %v3434 = vadd.f32 %v3365, %v3433
  %v3435 = vpop.f32.mrf.mxu0
  %v3436 = vadd.f32 %v3367, %v3435
  %3437 = vdwg.mxu0
  %3438 = vmatpush.bf16.msra.mxu0 %v2515
  %3439 = vmatpush.bf16.msra.mxu0 %v2514
  %3440 = vmatpush.bf16.msra.mxu0 %v2513
  %3441 = vmatpush.bf16.msra.mxu0 %v2512
  %3442 = vmatpush.bf16.msra.mxu0 %v2511
  %3443 = vmatpush.bf16.msra.mxu0 %v2510
  %3444 = vmatpush.bf16.msra.mxu0 %v2509
  %3445 = vmatpush.bf16.msra.mxu0 %v2508
  %3446 = vmatmul.bf16.gmra.mxu0 %v1318
  %v3447 = vpop.f32.mrf.mxu0
  %v3448 = vadd.f32 %v3379, %v3447
  %v3449 = vpop.f32.mrf.mxu0
  %v3450 = vadd.f32 %v3381, %v3449
  %3451 = vmatmul.bf16.gmra.mxu0 %v1338
  %v3452 = vpop.f32.mrf.mxu0
  %v3453 = vadd.f32 %v3384, %v3452
  %v3454 = vpop.f32.mrf.mxu0
  %v3455 = vadd.f32 %v3386, %v3454
  %3456 = vmatmul.bf16.gmra.mxu0 %v1358
  %v3457 = vpop.f32.mrf.mxu0
  %v3458 = vadd.f32 %v3389, %v3457
  %v3459 = vpop.f32.mrf.mxu0
  %v3460 = vadd.f32 %v3391, %v3459
  %3461 = vmatmul.bf16.gmra.mxu0 %v1378
  %v3462 = vpop.f32.mrf.mxu0
  %v3463 = vadd.f32 %v3394, %v3462
  %v3464 = vpop.f32.mrf.mxu0
  %v3465 = vadd.f32 %v3396, %v3464
  %3466 = vmatmul.bf16.gmra.mxu0 %v1398
  %v3467 = vpop.f32.mrf.mxu0
  %v3468 = vadd.f32 %v3399, %v3467
  %v3469 = vpop.f32.mrf.mxu0
  %v3470 = vadd.f32 %v3401, %v3469
  %3471 = vmatmul.bf16.gmra.mxu0 %v1418
  %v3472 = vpop.f32.mrf.mxu0
  %v3473 = vadd.f32 %v3404, %v3472
  %v3474 = vpop.f32.mrf.mxu0
  %v3475 = vadd.f32 %v3406, %v3474
  %3476 = vmatmul.bf16.gmra.mxu0 %v1438
  %v3477 = vpop.f32.mrf.mxu0
  %v3478 = vadd.f32 %v3409, %v3477
  %v3479 = vpop.f32.mrf.mxu0
  %v3480 = vadd.f32 %v3411, %v3479
  %3481 = vmatmul.bf16.gmra.mxu0 %v1458
  %v3482 = vpop.f32.mrf.mxu0
  %v3483 = vadd.f32 %v3414, %v3482
  %v3484 = vpop.f32.mrf.mxu0
  %v3485 = vadd.f32 %v3416, %v3484
  %3486 = vmatmul.bf16.gmra.mxu0 %v1478
  %v3487 = vpop.f32.mrf.mxu0
  %v3488 = vadd.f32 %v3419, %v3487
  %v3489 = vpop.f32.mrf.mxu0
  %v3490 = vadd.f32 %v3421, %v3489
  %3491 = vmatmul.bf16.gmra.mxu0 %v1498
  %v3492 = vpop.f32.mrf.mxu0
  %v3493 = vadd.f32 %v3424, %v3492
  %v3494 = vpop.f32.mrf.mxu0
  %v3495 = vadd.f32 %v3426, %v3494
  %3496 = vmatmul.bf16.gmra.mxu0 %v1518
  %v3497 = vpop.f32.mrf.mxu0
  %v3498 = vadd.f32 %v3429, %v3497
  %v3499 = vpop.f32.mrf.mxu0
  %v3500 = vadd.f32 %v3431, %v3499
  %3501 = vmatmul.bf16.gmra.mxu0 %v1538
  %v3502 = vpop.f32.mrf.mxu0
  %v3503 = vadd.f32 %v3434, %v3502
  %v3504 = vpop.f32.mrf.mxu0
  %v3505 = vadd.f32 %v3436, %v3504
  %3506 = vdwg.mxu0
  %3507 = vmatpush.bf16.msra.mxu0 %v2523
  %3508 = vmatpush.bf16.msra.mxu0 %v2522
  %3509 = vmatpush.bf16.msra.mxu0 %v2521
  %3510 = vmatpush.bf16.msra.mxu0 %v2520
  %3511 = vmatpush.bf16.msra.mxu0 %v2519
  %3512 = vmatpush.bf16.msra.mxu0 %v2518
  %3513 = vmatpush.bf16.msra.mxu0 %v2517
  %3514 = vmatpush.bf16.msra.mxu0 %v2516
  %3515 = vmatmul.bf16.gmra.mxu0 %v1319
  %v3516 = vpop.f32.mrf.mxu0
  %v3517 = vadd.f32 %v3448, %v3516
  %v3518 = vpop.f32.mrf.mxu0
  %v3519 = vadd.f32 %v3450, %v3518
  %3520 = vmatmul.bf16.gmra.mxu0 %v1339
  %v3521 = vpop.f32.mrf.mxu0
  %v3522 = vadd.f32 %v3453, %v3521
  %v3523 = vpop.f32.mrf.mxu0
  %v3524 = vadd.f32 %v3455, %v3523
  %3525 = vmatmul.bf16.gmra.mxu0 %v1359
  %v3526 = vpop.f32.mrf.mxu0
  %v3527 = vadd.f32 %v3458, %v3526
  %v3528 = vpop.f32.mrf.mxu0
  %v3529 = vadd.f32 %v3460, %v3528
  %3530 = vmatmul.bf16.gmra.mxu0 %v1379
  %v3531 = vpop.f32.mrf.mxu0
  %v3532 = vadd.f32 %v3463, %v3531
  %v3533 = vpop.f32.mrf.mxu0
  %v3534 = vadd.f32 %v3465, %v3533
  %3535 = vmatmul.bf16.gmra.mxu0 %v1399
  %v3536 = vpop.f32.mrf.mxu0
  %v3537 = vadd.f32 %v3468, %v3536
  %v3538 = vpop.f32.mrf.mxu0
  %v3539 = vadd.f32 %v3470, %v3538
  %3540 = vmatmul.bf16.gmra.mxu0 %v1419
  %v3541 = vpop.f32.mrf.mxu0
  %v3542 = vadd.f32 %v3473, %v3541
  %v3543 = vpop.f32.mrf.mxu0
  %v3544 = vadd.f32 %v3475, %v3543
  %3545 = vmatmul.bf16.gmra.mxu0 %v1439
  %v3546 = vpop.f32.mrf.mxu0
  %v3547 = vadd.f32 %v3478, %v3546
  %v3548 = vpop.f32.mrf.mxu0
  %v3549 = vadd.f32 %v3480, %v3548
  %3550 = vmatmul.bf16.gmra.mxu0 %v1459
  %v3551 = vpop.f32.mrf.mxu0
  %v3552 = vadd.f32 %v3483, %v3551
  %v3553 = vpop.f32.mrf.mxu0
  %v3554 = vadd.f32 %v3485, %v3553
  %3555 = vmatmul.bf16.gmra.mxu0 %v1479
  %v3556 = vpop.f32.mrf.mxu0
  %v3557 = vadd.f32 %v3488, %v3556
  %v3558 = vpop.f32.mrf.mxu0
  %v3559 = vadd.f32 %v3490, %v3558
  %3560 = vmatmul.bf16.gmra.mxu0 %v1499
  %v3561 = vpop.f32.mrf.mxu0
  %v3562 = vadd.f32 %v3493, %v3561
  %v3563 = vpop.f32.mrf.mxu0
  %v3564 = vadd.f32 %v3495, %v3563
  %3565 = vmatmul.bf16.gmra.mxu0 %v1519
  %v3566 = vpop.f32.mrf.mxu0
  %v3567 = vadd.f32 %v3498, %v3566
  %v3568 = vpop.f32.mrf.mxu0
  %v3569 = vadd.f32 %v3500, %v3568
  %3570 = vmatmul.bf16.gmra.mxu0 %v1539
  %v3571 = vpop.f32.mrf.mxu0
  %v3572 = vadd.f32 %v3503, %v3571
  %v3573 = vpop.f32.mrf.mxu0
  %v3574 = vadd.f32 %v3505, %v3573
  %3575 = vdwg.mxu0
  %3576 = vmatpush.bf16.msra.mxu0 %v2531
  %3577 = vmatpush.bf16.msra.mxu0 %v2530
  %3578 = vmatpush.bf16.msra.mxu0 %v2529
  %3579 = vmatpush.bf16.msra.mxu0 %v2528
  %3580 = vmatpush.bf16.msra.mxu0 %v2527
  %3581 = vmatpush.bf16.msra.mxu0 %v2526
  %3582 = vmatpush.bf16.msra.mxu0 %v2525
  %3583 = vmatpush.bf16.msra.mxu0 %v2524
  %3584 = vmatmul.bf16.gmra.mxu0 %v1320
  %v3585 = vpop.f32.mrf.mxu0
  %v3586 = vadd.f32 %v3517, %v3585
  %v3587 = vpop.f32.mrf.mxu0
  %v3588 = vadd.f32 %v3519, %v3587
  %3589 = vmatmul.bf16.gmra.mxu0 %v1340
  %v3590 = vpop.f32.mrf.mxu0
  %v3591 = vadd.f32 %v3522, %v3590
  %v3592 = vpop.f32.mrf.mxu0
  %v3593 = vadd.f32 %v3524, %v3592
  %3594 = vmatmul.bf16.gmra.mxu0 %v1360
  %v3595 = vpop.f32.mrf.mxu0
  %v3596 = vadd.f32 %v3527, %v3595
  %v3597 = vpop.f32.mrf.mxu0
  %v3598 = vadd.f32 %v3529, %v3597
  %3599 = vmatmul.bf16.gmra.mxu0 %v1380
  %v3600 = vpop.f32.mrf.mxu0
  %v3601 = vadd.f32 %v3532, %v3600
  %v3602 = vpop.f32.mrf.mxu0
  %v3603 = vadd.f32 %v3534, %v3602
  %3604 = vmatmul.bf16.gmra.mxu0 %v1400
  %v3605 = vpop.f32.mrf.mxu0
  %v3606 = vadd.f32 %v3537, %v3605
  %v3607 = vpop.f32.mrf.mxu0
  %v3608 = vadd.f32 %v3539, %v3607
  %3609 = vmatmul.bf16.gmra.mxu0 %v1420
  %v3610 = vpop.f32.mrf.mxu0
  %v3611 = vadd.f32 %v3542, %v3610
  %v3612 = vpop.f32.mrf.mxu0
  %v3613 = vadd.f32 %v3544, %v3612
  %3614 = vmatmul.bf16.gmra.mxu0 %v1440
  %v3615 = vpop.f32.mrf.mxu0
  %v3616 = vadd.f32 %v3547, %v3615
  %v3617 = vpop.f32.mrf.mxu0
  %v3618 = vadd.f32 %v3549, %v3617
  %3619 = vmatmul.bf16.gmra.mxu0 %v1460
  %v3620 = vpop.f32.mrf.mxu0
  %v3621 = vadd.f32 %v3552, %v3620
  %v3622 = vpop.f32.mrf.mxu0
  %v3623 = vadd.f32 %v3554, %v3622
  %3624 = vmatmul.bf16.gmra.mxu0 %v1480
  %v3625 = vpop.f32.mrf.mxu0
  %v3626 = vadd.f32 %v3557, %v3625
  %v3627 = vpop.f32.mrf.mxu0
  %v3628 = vadd.f32 %v3559, %v3627
  %3629 = vmatmul.bf16.gmra.mxu0 %v1500
  %v3630 = vpop.f32.mrf.mxu0
  %v3631 = vadd.f32 %v3562, %v3630
  %v3632 = vpop.f32.mrf.mxu0
  %v3633 = vadd.f32 %v3564, %v3632
  %3634 = vmatmul.bf16.gmra.mxu0 %v1520
  %v3635 = vpop.f32.mrf.mxu0
  %v3636 = vadd.f32 %v3567, %v3635
  %v3637 = vpop.f32.mrf.mxu0
  %v3638 = vadd.f32 %v3569, %v3637
  %3639 = vmatmul.bf16.gmra.mxu0 %v1540
  %v3640 = vpop.f32.mrf.mxu0
  %v3641 = vadd.f32 %v3572, %v3640
  %v3642 = vpop.f32.mrf.mxu0
  %v3643 = vadd.f32 %v3574, %v3642
  %3644 = vdwg.mxu0
  %3645 = vmatpush.bf16.msra.mxu0 %v2539
  %3646 = vmatpush.bf16.msra.mxu0 %v2538
  %3647 = vmatpush.bf16.msra.mxu0 %v2537
  %3648 = vmatpush.bf16.msra.mxu0 %v2536
  %3649 = vmatpush.bf16.msra.mxu0 %v2535
  %3650 = vmatpush.bf16.msra.mxu0 %v2534
  %3651 = vmatpush.bf16.msra.mxu0 %v2533
  %3652 = vmatpush.bf16.msra.mxu0 %v2532
  %3653 = vmatmul.bf16.gmra.mxu0 %v1321
  %v3654 = vpop.f32.mrf.mxu0
  %v3655 = vadd.f32 %v3586, %v3654
  %v3656 = vpop.f32.mrf.mxu0
  %v3657 = vadd.f32 %v3588, %v3656
  %3658 = vmatmul.bf16.gmra.mxu0 %v1341
  %v3659 = vpop.f32.mrf.mxu0
  %v3660 = vadd.f32 %v3591, %v3659
  %v3661 = vpop.f32.mrf.mxu0
  %v3662 = vadd.f32 %v3593, %v3661
  %3663 = vmatmul.bf16.gmra.mxu0 %v1361
  %v3664 = vpop.f32.mrf.mxu0
  %v3665 = vadd.f32 %v3596, %v3664
  %v3666 = vpop.f32.mrf.mxu0
  %v3667 = vadd.f32 %v3598, %v3666
  %3668 = vmatmul.bf16.gmra.mxu0 %v1381
  %v3669 = vpop.f32.mrf.mxu0
  %v3670 = vadd.f32 %v3601, %v3669
  %v3671 = vpop.f32.mrf.mxu0
  %v3672 = vadd.f32 %v3603, %v3671
  %3673 = vmatmul.bf16.gmra.mxu0 %v1401
  %v3674 = vpop.f32.mrf.mxu0
  %v3675 = vadd.f32 %v3606, %v3674
  %v3676 = vpop.f32.mrf.mxu0
  %v3677 = vadd.f32 %v3608, %v3676
  %3678 = vmatmul.bf16.gmra.mxu0 %v1421
  %v3679 = vpop.f32.mrf.mxu0
  %v3680 = vadd.f32 %v3611, %v3679
  %v3681 = vpop.f32.mrf.mxu0
  %v3682 = vadd.f32 %v3613, %v3681
  %3683 = vmatmul.bf16.gmra.mxu0 %v1441
  %v3684 = vpop.f32.mrf.mxu0
  %v3685 = vadd.f32 %v3616, %v3684
  %v3686 = vpop.f32.mrf.mxu0
  %v3687 = vadd.f32 %v3618, %v3686
  %3688 = vmatmul.bf16.gmra.mxu0 %v1461
  %v3689 = vpop.f32.mrf.mxu0
  %v3690 = vadd.f32 %v3621, %v3689
  %v3691 = vpop.f32.mrf.mxu0
  %v3692 = vadd.f32 %v3623, %v3691
  %3693 = vmatmul.bf16.gmra.mxu0 %v1481
  %v3694 = vpop.f32.mrf.mxu0
  %v3695 = vadd.f32 %v3626, %v3694
  %v3696 = vpop.f32.mrf.mxu0
  %v3697 = vadd.f32 %v3628, %v3696
  %3698 = vmatmul.bf16.gmra.mxu0 %v1501
  %v3699 = vpop.f32.mrf.mxu0
  %v3700 = vadd.f32 %v3631, %v3699
  %v3701 = vpop.f32.mrf.mxu0
  %v3702 = vadd.f32 %v3633, %v3701
  %3703 = vmatmul.bf16.gmra.mxu0 %v1521
  %v3704 = vpop.f32.mrf.mxu0
  %v3705 = vadd.f32 %v3636, %v3704
  %v3706 = vpop.f32.mrf.mxu0
  %v3707 = vadd.f32 %v3638, %v3706
  %3708 = vmatmul.bf16.gmra.mxu0 %v1541
  %v3709 = vpop.f32.mrf.mxu0
  %v3710 = vadd.f32 %v3641, %v3709
  %v3711 = vpop.f32.mrf.mxu0
  %v3712 = vadd.f32 %v3643, %v3711
  %3713 = vdwg.mxu0
  %3714 = vmatpush.bf16.msra.mxu0 %v2547
  %3715 = vmatpush.bf16.msra.mxu0 %v2546
  %3716 = vmatpush.bf16.msra.mxu0 %v2545
  %3717 = vmatpush.bf16.msra.mxu0 %v2544
  %3718 = vmatpush.bf16.msra.mxu0 %v2543
  %3719 = vmatpush.bf16.msra.mxu0 %v2542
  %3720 = vmatpush.bf16.msra.mxu0 %v2541
  %3721 = vmatpush.bf16.msra.mxu0 %v2540
  %3722 = vmatmul.bf16.gmra.mxu0 %v1322
  %v3723 = vpop.f32.mrf.mxu0
  %v3724 = vadd.f32 %v3655, %v3723
  %v3725 = vpop.f32.mrf.mxu0
  %v3726 = vadd.f32 %v3657, %v3725
  %3727 = vmatmul.bf16.gmra.mxu0 %v1342
  %v3728 = vpop.f32.mrf.mxu0
  %v3729 = vadd.f32 %v3660, %v3728
  %v3730 = vpop.f32.mrf.mxu0
  %v3731 = vadd.f32 %v3662, %v3730
  %3732 = vmatmul.bf16.gmra.mxu0 %v1362
  %v3733 = vpop.f32.mrf.mxu0
  %v3734 = vadd.f32 %v3665, %v3733
  %v3735 = vpop.f32.mrf.mxu0
  %v3736 = vadd.f32 %v3667, %v3735
  %3737 = vmatmul.bf16.gmra.mxu0 %v1382
  %v3738 = vpop.f32.mrf.mxu0
  %v3739 = vadd.f32 %v3670, %v3738
  %v3740 = vpop.f32.mrf.mxu0
  %v3741 = vadd.f32 %v3672, %v3740
  %3742 = vmatmul.bf16.gmra.mxu0 %v1402
  %v3743 = vpop.f32.mrf.mxu0
  %v3744 = vadd.f32 %v3675, %v3743
  %v3745 = vpop.f32.mrf.mxu0
  %v3746 = vadd.f32 %v3677, %v3745
  %3747 = vmatmul.bf16.gmra.mxu0 %v1422
  %v3748 = vpop.f32.mrf.mxu0
  %v3749 = vadd.f32 %v3680, %v3748
  %v3750 = vpop.f32.mrf.mxu0
  %v3751 = vadd.f32 %v3682, %v3750
  %3752 = vmatmul.bf16.gmra.mxu0 %v1442
  %v3753 = vpop.f32.mrf.mxu0
  %v3754 = vadd.f32 %v3685, %v3753
  %v3755 = vpop.f32.mrf.mxu0
  %v3756 = vadd.f32 %v3687, %v3755
  %3757 = vmatmul.bf16.gmra.mxu0 %v1462
  %v3758 = vpop.f32.mrf.mxu0
  %v3759 = vadd.f32 %v3690, %v3758
  %v3760 = vpop.f32.mrf.mxu0
  %v3761 = vadd.f32 %v3692, %v3760
  %3762 = vmatmul.bf16.gmra.mxu0 %v1482
  %v3763 = vpop.f32.mrf.mxu0
  %v3764 = vadd.f32 %v3695, %v3763
  %v3765 = vpop.f32.mrf.mxu0
  %v3766 = vadd.f32 %v3697, %v3765
  %3767 = vmatmul.bf16.gmra.mxu0 %v1502
  %v3768 = vpop.f32.mrf.mxu0
  %v3769 = vadd.f32 %v3700, %v3768
  %v3770 = vpop.f32.mrf.mxu0
  %v3771 = vadd.f32 %v3702, %v3770
  %3772 = vmatmul.bf16.gmra.mxu0 %v1522
  %v3773 = vpop.f32.mrf.mxu0
  %v3774 = vadd.f32 %v3705, %v3773
  %v3775 = vpop.f32.mrf.mxu0
  %v3776 = vadd.f32 %v3707, %v3775
  %3777 = vmatmul.bf16.gmra.mxu0 %v1542
  %v3778 = vpop.f32.mrf.mxu0
  %v3779 = vadd.f32 %v3710, %v3778
  %v3780 = vpop.f32.mrf.mxu0
  %v3781 = vadd.f32 %v3712, %v3780
  %3782 = vdwg.mxu0
  %3783 = vmatpush.bf16.msra.mxu0 %v2555
  %3784 = vmatpush.bf16.msra.mxu0 %v2554
  %3785 = vmatpush.bf16.msra.mxu0 %v2553
  %3786 = vmatpush.bf16.msra.mxu0 %v2552
  %3787 = vmatpush.bf16.msra.mxu0 %v2551
  %3788 = vmatpush.bf16.msra.mxu0 %v2550
  %3789 = vmatpush.bf16.msra.mxu0 %v2549
  %3790 = vmatpush.bf16.msra.mxu0 %v2548
  %3791 = vmatmul.bf16.gmra.mxu0 %v1323
  %v3792 = vpop.f32.mrf.mxu0
  %v3793 = vadd.f32 %v3724, %v3792
  %v3794 = vpop.f32.mrf.mxu0
  %v3795 = vadd.f32 %v3726, %v3794
  %3796 = vmatmul.bf16.gmra.mxu0 %v1343
  %v3797 = vpop.f32.mrf.mxu0
  %v3798 = vadd.f32 %v3729, %v3797
  %v3799 = vpop.f32.mrf.mxu0
  %v3800 = vadd.f32 %v3731, %v3799
  %3801 = vmatmul.bf16.gmra.mxu0 %v1363
  %v3802 = vpop.f32.mrf.mxu0
  %v3803 = vadd.f32 %v3734, %v3802
  %v3804 = vpop.f32.mrf.mxu0
  %v3805 = vadd.f32 %v3736, %v3804
  %3806 = vmatmul.bf16.gmra.mxu0 %v1383
  %v3807 = vpop.f32.mrf.mxu0
  %v3808 = vadd.f32 %v3739, %v3807
  %v3809 = vpop.f32.mrf.mxu0
  %v3810 = vadd.f32 %v3741, %v3809
  %3811 = vmatmul.bf16.gmra.mxu0 %v1403
  %v3812 = vpop.f32.mrf.mxu0
  %v3813 = vadd.f32 %v3744, %v3812
  %v3814 = vpop.f32.mrf.mxu0
  %v3815 = vadd.f32 %v3746, %v3814
  %3816 = vmatmul.bf16.gmra.mxu0 %v1423
  %v3817 = vpop.f32.mrf.mxu0
  %v3818 = vadd.f32 %v3749, %v3817
  %v3819 = vpop.f32.mrf.mxu0
  %v3820 = vadd.f32 %v3751, %v3819
  %3821 = vmatmul.bf16.gmra.mxu0 %v1443
  %v3822 = vpop.f32.mrf.mxu0
  %v3823 = vadd.f32 %v3754, %v3822
  %v3824 = vpop.f32.mrf.mxu0
  %v3825 = vadd.f32 %v3756, %v3824
  %3826 = vmatmul.bf16.gmra.mxu0 %v1463
  %v3827 = vpop.f32.mrf.mxu0
  %v3828 = vadd.f32 %v3759, %v3827
  %v3829 = vpop.f32.mrf.mxu0
  %v3830 = vadd.f32 %v3761, %v3829
  %3831 = vmatmul.bf16.gmra.mxu0 %v1483
  %v3832 = vpop.f32.mrf.mxu0
  %v3833 = vadd.f32 %v3764, %v3832
  %v3834 = vpop.f32.mrf.mxu0
  %v3835 = vadd.f32 %v3766, %v3834
  %3836 = vmatmul.bf16.gmra.mxu0 %v1503
  %v3837 = vpop.f32.mrf.mxu0
  %v3838 = vadd.f32 %v3769, %v3837
  %v3839 = vpop.f32.mrf.mxu0
  %v3840 = vadd.f32 %v3771, %v3839
  %3841 = vmatmul.bf16.gmra.mxu0 %v1523
  %v3842 = vpop.f32.mrf.mxu0
  %v3843 = vadd.f32 %v3774, %v3842
  %v3844 = vpop.f32.mrf.mxu0
  %v3845 = vadd.f32 %v3776, %v3844
  %3846 = vmatmul.bf16.gmra.mxu0 %v1543
  %v3847 = vpop.f32.mrf.mxu0
  %v3848 = vadd.f32 %v3779, %v3847
  %v3849 = vpop.f32.mrf.mxu0
  %v3850 = vadd.f32 %v3781, %v3849
  %3851 = vdwg.mxu0
  %3852 = vmatpush.bf16.msra.mxu0 %v2563
  %3853 = vmatpush.bf16.msra.mxu0 %v2562
  %3854 = vmatpush.bf16.msra.mxu0 %v2561
  %3855 = vmatpush.bf16.msra.mxu0 %v2560
  %3856 = vmatpush.bf16.msra.mxu0 %v2559
  %3857 = vmatpush.bf16.msra.mxu0 %v2558
  %3858 = vmatpush.bf16.msra.mxu0 %v2557
  %3859 = vmatpush.bf16.msra.mxu0 %v2556
  %3860 = vmatmul.bf16.gmra.mxu0 %v1324
  %v3861 = vpop.f32.mrf.mxu0
  %v3862 = vadd.f32 %v3793, %v3861
  %v3863 = vpop.f32.mrf.mxu0
  %v3864 = vadd.f32 %v3795, %v3863
  %3865 = vmatmul.bf16.gmra.mxu0 %v1344
  %v3866 = vpop.f32.mrf.mxu0
  %v3867 = vadd.f32 %v3798, %v3866
  %v3868 = vpop.f32.mrf.mxu0
  %v3869 = vadd.f32 %v3800, %v3868
  %3870 = vmatmul.bf16.gmra.mxu0 %v1364
  %v3871 = vpop.f32.mrf.mxu0
  %v3872 = vadd.f32 %v3803, %v3871
  %v3873 = vpop.f32.mrf.mxu0
  %v3874 = vadd.f32 %v3805, %v3873
  %3875 = vmatmul.bf16.gmra.mxu0 %v1384
  %v3876 = vpop.f32.mrf.mxu0
  %v3877 = vadd.f32 %v3808, %v3876
  %v3878 = vpop.f32.mrf.mxu0
  %v3879 = vadd.f32 %v3810, %v3878
  %3880 = vmatmul.bf16.gmra.mxu0 %v1404
  %v3881 = vpop.f32.mrf.mxu0
  %v3882 = vadd.f32 %v3813, %v3881
  %v3883 = vpop.f32.mrf.mxu0
  %v3884 = vadd.f32 %v3815, %v3883
  %3885 = vmatmul.bf16.gmra.mxu0 %v1424
  %v3886 = vpop.f32.mrf.mxu0
  %v3887 = vadd.f32 %v3818, %v3886
  %v3888 = vpop.f32.mrf.mxu0
  %v3889 = vadd.f32 %v3820, %v3888
  %3890 = vmatmul.bf16.gmra.mxu0 %v1444
  %v3891 = vpop.f32.mrf.mxu0
  %v3892 = vadd.f32 %v3823, %v3891
  %v3893 = vpop.f32.mrf.mxu0
  %v3894 = vadd.f32 %v3825, %v3893
  %3895 = vmatmul.bf16.gmra.mxu0 %v1464
  %v3896 = vpop.f32.mrf.mxu0
  %v3897 = vadd.f32 %v3828, %v3896
  %v3898 = vpop.f32.mrf.mxu0
  %v3899 = vadd.f32 %v3830, %v3898
  %3900 = vmatmul.bf16.gmra.mxu0 %v1484
  %v3901 = vpop.f32.mrf.mxu0
  %v3902 = vadd.f32 %v3833, %v3901
  %v3903 = vpop.f32.mrf.mxu0
  %v3904 = vadd.f32 %v3835, %v3903
  %3905 = vmatmul.bf16.gmra.mxu0 %v1504
  %v3906 = vpop.f32.mrf.mxu0
  %v3907 = vadd.f32 %v3838, %v3906
  %v3908 = vpop.f32.mrf.mxu0
  %v3909 = vadd.f32 %v3840, %v3908
  %3910 = vmatmul.bf16.gmra.mxu0 %v1524
  %v3911 = vpop.f32.mrf.mxu0
  %v3912 = vadd.f32 %v3843, %v3911
  %v3913 = vpop.f32.mrf.mxu0
  %v3914 = vadd.f32 %v3845, %v3913
  %3915 = vmatmul.bf16.gmra.mxu0 %v1544
  %v3916 = vpop.f32.mrf.mxu0
  %v3917 = vadd.f32 %v3848, %v3916
  %v3918 = vpop.f32.mrf.mxu0
  %v3919 = vadd.f32 %v3850, %v3918
  %3920 = vdwg.mxu0
  %3921 = vmatpush.bf16.msra.mxu0 %v2571
  %3922 = vmatpush.bf16.msra.mxu0 %v2570
  %3923 = vmatpush.bf16.msra.mxu0 %v2569
  %3924 = vmatpush.bf16.msra.mxu0 %v2568
  %3925 = vmatpush.bf16.msra.mxu0 %v2567
  %3926 = vmatpush.bf16.msra.mxu0 %v2566
  %3927 = vmatpush.bf16.msra.mxu0 %v2565
  %3928 = vmatpush.bf16.msra.mxu0 %v2564
  %3929 = vmatmul.bf16.gmra.mxu0 %v1325
  %v3930 = vpop.f32.mrf.mxu0
  %v3931 = vadd.f32 %v3862, %v3930
  %v3932 = vpop.f32.mrf.mxu0
  %v3933 = vadd.f32 %v3864, %v3932
  %3934 = vmatmul.bf16.gmra.mxu0 %v1345
  %v3935 = vpop.f32.mrf.mxu0
  %v3936 = vadd.f32 %v3867, %v3935
  %v3937 = vpop.f32.mrf.mxu0
  %v3938 = vadd.f32 %v3869, %v3937
  %3939 = vmatmul.bf16.gmra.mxu0 %v1365
  %v3940 = vpop.f32.mrf.mxu0
  %v3941 = vadd.f32 %v3872, %v3940
  %v3942 = vpop.f32.mrf.mxu0
  %v3943 = vadd.f32 %v3874, %v3942
  %3944 = vmatmul.bf16.gmra.mxu0 %v1385
  %v3945 = vpop.f32.mrf.mxu0
  %v3946 = vadd.f32 %v3877, %v3945
  %v3947 = vpop.f32.mrf.mxu0
  %v3948 = vadd.f32 %v3879, %v3947
  %3949 = vmatmul.bf16.gmra.mxu0 %v1405
  %v3950 = vpop.f32.mrf.mxu0
  %v3951 = vadd.f32 %v3882, %v3950
  %v3952 = vpop.f32.mrf.mxu0
  %v3953 = vadd.f32 %v3884, %v3952
  %3954 = vmatmul.bf16.gmra.mxu0 %v1425
  %v3955 = vpop.f32.mrf.mxu0
  %v3956 = vadd.f32 %v3887, %v3955
  %v3957 = vpop.f32.mrf.mxu0
  %v3958 = vadd.f32 %v3889, %v3957
  %3959 = vmatmul.bf16.gmra.mxu0 %v1445
  %v3960 = vpop.f32.mrf.mxu0
  %v3961 = vadd.f32 %v3892, %v3960
  %v3962 = vpop.f32.mrf.mxu0
  %v3963 = vadd.f32 %v3894, %v3962
  %3964 = vmatmul.bf16.gmra.mxu0 %v1465
  %v3965 = vpop.f32.mrf.mxu0
  %v3966 = vadd.f32 %v3897, %v3965
  %v3967 = vpop.f32.mrf.mxu0
  %v3968 = vadd.f32 %v3899, %v3967
  %3969 = vmatmul.bf16.gmra.mxu0 %v1485
  %v3970 = vpop.f32.mrf.mxu0
  %v3971 = vadd.f32 %v3902, %v3970
  %v3972 = vpop.f32.mrf.mxu0
  %v3973 = vadd.f32 %v3904, %v3972
  %3974 = vmatmul.bf16.gmra.mxu0 %v1505
  %v3975 = vpop.f32.mrf.mxu0
  %v3976 = vadd.f32 %v3907, %v3975
  %v3977 = vpop.f32.mrf.mxu0
  %v3978 = vadd.f32 %v3909, %v3977
  %3979 = vmatmul.bf16.gmra.mxu0 %v1525
  %v3980 = vpop.f32.mrf.mxu0
  %v3981 = vadd.f32 %v3912, %v3980
  %v3982 = vpop.f32.mrf.mxu0
  %v3983 = vadd.f32 %v3914, %v3982
  %3984 = vmatmul.bf16.gmra.mxu0 %v1545
  %v3985 = vpop.f32.mrf.mxu0
  %v3986 = vadd.f32 %v3917, %v3985
  %v3987 = vpop.f32.mrf.mxu0
  %v3988 = vadd.f32 %v3919, %v3987
  %3989 = vdwg.mxu0
  %3990 = vmatpush.bf16.msra.mxu0 %v2579
  %3991 = vmatpush.bf16.msra.mxu0 %v2578
  %3992 = vmatpush.bf16.msra.mxu0 %v2577
  %3993 = vmatpush.bf16.msra.mxu0 %v2576
  %3994 = vmatpush.bf16.msra.mxu0 %v2575
  %3995 = vmatpush.bf16.msra.mxu0 %v2574
  %3996 = vmatpush.bf16.msra.mxu0 %v2573
  %3997 = vmatpush.bf16.msra.mxu0 %v2572
  %3998 = vmatmul.bf16.gmra.mxu0 %v1326
  %v3999 = vpop.f32.mrf.mxu0
  %v4000 = vadd.f32 %v3931, %v3999
  %v4001 = vpop.f32.mrf.mxu0
  %v4002 = vadd.f32 %v3933, %v4001
  %4003 = vmatmul.bf16.gmra.mxu0 %v1346
  %v4004 = vpop.f32.mrf.mxu0
  %v4005 = vadd.f32 %v3936, %v4004
  %v4006 = vpop.f32.mrf.mxu0
  %v4007 = vadd.f32 %v3938, %v4006
  %4008 = vmatmul.bf16.gmra.mxu0 %v1366
  %v4009 = vpop.f32.mrf.mxu0
  %v4010 = vadd.f32 %v3941, %v4009
  %v4011 = vpop.f32.mrf.mxu0
  %v4012 = vadd.f32 %v3943, %v4011
  %4013 = vmatmul.bf16.gmra.mxu0 %v1386
  %v4014 = vpop.f32.mrf.mxu0
  %v4015 = vadd.f32 %v3946, %v4014
  %v4016 = vpop.f32.mrf.mxu0
  %v4017 = vadd.f32 %v3948, %v4016
  %4018 = vmatmul.bf16.gmra.mxu0 %v1406
  %v4019 = vpop.f32.mrf.mxu0
  %v4020 = vadd.f32 %v3951, %v4019
  %v4021 = vpop.f32.mrf.mxu0
  %v4022 = vadd.f32 %v3953, %v4021
  %4023 = vmatmul.bf16.gmra.mxu0 %v1426
  %v4024 = vpop.f32.mrf.mxu0
  %v4025 = vadd.f32 %v3956, %v4024
  %v4026 = vpop.f32.mrf.mxu0
  %v4027 = vadd.f32 %v3958, %v4026
  %4028 = vmatmul.bf16.gmra.mxu0 %v1446
  %v4029 = vpop.f32.mrf.mxu0
  %v4030 = vadd.f32 %v3961, %v4029
  %v4031 = vpop.f32.mrf.mxu0
  %v4032 = vadd.f32 %v3963, %v4031
  %4033 = vmatmul.bf16.gmra.mxu0 %v1466
  %v4034 = vpop.f32.mrf.mxu0
  %v4035 = vadd.f32 %v3966, %v4034
  %v4036 = vpop.f32.mrf.mxu0
  %v4037 = vadd.f32 %v3968, %v4036
  %4038 = vmatmul.bf16.gmra.mxu0 %v1486
  %v4039 = vpop.f32.mrf.mxu0
  %v4040 = vadd.f32 %v3971, %v4039
  %v4041 = vpop.f32.mrf.mxu0
  %v4042 = vadd.f32 %v3973, %v4041
  %4043 = vmatmul.bf16.gmra.mxu0 %v1506
  %v4044 = vpop.f32.mrf.mxu0
  %v4045 = vadd.f32 %v3976, %v4044
  %v4046 = vpop.f32.mrf.mxu0
  %v4047 = vadd.f32 %v3978, %v4046
  %4048 = vmatmul.bf16.gmra.mxu0 %v1526
  %v4049 = vpop.f32.mrf.mxu0
  %v4050 = vadd.f32 %v3981, %v4049
  %v4051 = vpop.f32.mrf.mxu0
  %v4052 = vadd.f32 %v3983, %v4051
  %4053 = vmatmul.bf16.gmra.mxu0 %v1546
  %v4054 = vpop.f32.mrf.mxu0
  %v4055 = vadd.f32 %v3986, %v4054
  %v4056 = vpop.f32.mrf.mxu0
  %v4057 = vadd.f32 %v3988, %v4056
  %4058 = vdwg.mxu0
  %4059 = vmatpush.bf16.msra.mxu0 %v2587
  %4060 = vmatpush.bf16.msra.mxu0 %v2586
  %4061 = vmatpush.bf16.msra.mxu0 %v2585
  %4062 = vmatpush.bf16.msra.mxu0 %v2584
  %4063 = vmatpush.bf16.msra.mxu0 %v2583
  %4064 = vmatpush.bf16.msra.mxu0 %v2582
  %4065 = vmatpush.bf16.msra.mxu0 %v2581
  %4066 = vmatpush.bf16.msra.mxu0 %v2580
  %4067 = vmatmul.bf16.gmra.mxu0 %v1327
  %v4068 = vpop.f32.mrf.mxu0
  %v4069 = vadd.f32 %v4000, %v4068
  %v4070 = vpop.f32.mrf.mxu0
  %v4071 = vadd.f32 %v4002, %v4070
  %4072 = vmatmul.bf16.gmra.mxu0 %v1347
  %v4073 = vpop.f32.mrf.mxu0
  %v4074 = vadd.f32 %v4005, %v4073
  %v4075 = vpop.f32.mrf.mxu0
  %v4076 = vadd.f32 %v4007, %v4075
  %4077 = vmatmul.bf16.gmra.mxu0 %v1367
  %v4078 = vpop.f32.mrf.mxu0
  %v4079 = vadd.f32 %v4010, %v4078
  %v4080 = vpop.f32.mrf.mxu0
  %v4081 = vadd.f32 %v4012, %v4080
  %4082 = vmatmul.bf16.gmra.mxu0 %v1387
  %v4083 = vpop.f32.mrf.mxu0
  %v4084 = vadd.f32 %v4015, %v4083
  %v4085 = vpop.f32.mrf.mxu0
  %v4086 = vadd.f32 %v4017, %v4085
  %4087 = vmatmul.bf16.gmra.mxu0 %v1407
  %v4088 = vpop.f32.mrf.mxu0
  %v4089 = vadd.f32 %v4020, %v4088
  %v4090 = vpop.f32.mrf.mxu0
  %v4091 = vadd.f32 %v4022, %v4090
  %4092 = vmatmul.bf16.gmra.mxu0 %v1427
  %v4093 = vpop.f32.mrf.mxu0
  %v4094 = vadd.f32 %v4025, %v4093
  %v4095 = vpop.f32.mrf.mxu0
  %v4096 = vadd.f32 %v4027, %v4095
  %4097 = vmatmul.bf16.gmra.mxu0 %v1447
  %v4098 = vpop.f32.mrf.mxu0
  %v4099 = vadd.f32 %v4030, %v4098
  %v4100 = vpop.f32.mrf.mxu0
  %v4101 = vadd.f32 %v4032, %v4100
  %4102 = vmatmul.bf16.gmra.mxu0 %v1467
  %v4103 = vpop.f32.mrf.mxu0
  %v4104 = vadd.f32 %v4035, %v4103
  %v4105 = vpop.f32.mrf.mxu0
  %v4106 = vadd.f32 %v4037, %v4105
  %4107 = vmatmul.bf16.gmra.mxu0 %v1487
  %v4108 = vpop.f32.mrf.mxu0
  %v4109 = vadd.f32 %v4040, %v4108
  %v4110 = vpop.f32.mrf.mxu0
  %v4111 = vadd.f32 %v4042, %v4110
  %4112 = vmatmul.bf16.gmra.mxu0 %v1507
  %v4113 = vpop.f32.mrf.mxu0
  %v4114 = vadd.f32 %v4045, %v4113
  %v4115 = vpop.f32.mrf.mxu0
  %v4116 = vadd.f32 %v4047, %v4115
  %4117 = vmatmul.bf16.gmra.mxu0 %v1527
  %v4118 = vpop.f32.mrf.mxu0
  %v4119 = vadd.f32 %v4050, %v4118
  %v4120 = vpop.f32.mrf.mxu0
  %v4121 = vadd.f32 %v4052, %v4120
  %4122 = vmatmul.bf16.gmra.mxu0 %v1547
  %v4123 = vpop.f32.mrf.mxu0
  %v4124 = vadd.f32 %v4055, %v4123
  %v4125 = vpop.f32.mrf.mxu0
  %v4126 = vadd.f32 %v4057, %v4125
  %4127 = vdwg.mxu0
  %vm4128 = vcmask 261120
  %4129 = vst.msk [vmem:[%s5] sm:$0xff] %vm4128, %v4069
  %4130 = vst.msk [vmem:[%s5 + $0x8] sm:$0xff] %vm4128, %v4071
  %4131 = vst.msk [vmem:[%s5 + $0x10] sm:$0xff] %vm4128, %v4074
  %4132 = vst.msk [vmem:[%s5 + $0x18] sm:$0xff] %vm4128, %v4076
  %4133 = vst.msk [vmem:[%s5 + $0x20] sm:$0xff] %vm4128, %v4079
  %4134 = vst.msk [vmem:[%s5 + $0x28] sm:$0xff] %vm4128, %v4081
  %4135 = vst.msk [vmem:[%s5 + $0x30] sm:$0xff] %vm4128, %v4084
  %4136 = vst.msk [vmem:[%s5 + $0x38] sm:$0xff] %vm4128, %v4086
  %4137 = vst.msk [vmem:[%s5 + $0x40] sm:$0xff] %vm4128, %v4089
  %4138 = vst.msk [vmem:[%s5 + $0x48] sm:$0xff] %vm4128, %v4091
  %4139 = vst.msk [vmem:[%s5 + $0x50] sm:$0xff] %vm4128, %v4094
  %4140 = vst.msk [vmem:[%s5 + $0x58] sm:$0xff] %vm4128, %v4096
  %4141 = vst.msk [vmem:[%s5 + $0x60] sm:$0xff] %vm4128, %v4099
  %4142 = vst.msk [vmem:[%s5 + $0x68] sm:$0xff] %vm4128, %v4101
  %4143 = vst.msk [vmem:[%s5 + $0x70] sm:$0xff] %vm4128, %v4104
  %4144 = vst.msk [vmem:[%s5 + $0x78] sm:$0xff] %vm4128, %v4106
  %4145 = vst.msk [vmem:[%s5 + $0x80] sm:$0xff] %vm4128, %v4109
  %4146 = vst.msk [vmem:[%s5 + $0x88] sm:$0xff] %vm4128, %v4111
  %4147 = vst.msk [vmem:[%s5 + $0x90] sm:$0xff] %vm4128, %v4114
  %4148 = vst.msk [vmem:[%s5 + $0x98] sm:$0xff] %vm4128, %v4116
  %4149 = vst.msk [vmem:[%s5 + $0xa0] sm:$0xff] %vm4128, %v4119
  %4150 = vst.msk [vmem:[%s5 + $0xa8] sm:$0xff] %vm4128, %v4121
  %4151 = vst.msk [vmem:[%s5 + $0xb0] sm:$0xff] %vm4128, %v4124
  %4152 = vst.msk [vmem:[%s5 + $0xb8] sm:$0xff] %vm4128, %v4126
  %vm4153 = vcmask 523264
  %v4155 = vsel %vm4153, 0.015625, 0
  %4157 = vmatpush.msra.mxu0 0.0
  %4158 = vmatpush.msra.mxu0 0.0
  %4159 = vmatpush.msra.mxu0 0.0
  %4160 = vmatpush.msra.mxu0 0.0
  %4161 = vmatpush.msra.mxu0 0.0
  %4162 = vmatpush.msra.mxu0 0.0
  %4163 = vmatpush.msra.mxu0 0.0
  %4164 = vmatpush.msra.mxu0 0.0
  %4165 = vmatpush.msra.mxu0 %v4086
  %4166 = vmatpush.msra.mxu0 %v4084
  %4167 = vmatpush.msra.mxu0 %v4081
  %4168 = vmatpush.msra.mxu0 %v4079
  %4169 = vmatpush.msra.mxu0 %v4076
  %4170 = vmatpush.msra.mxu0 %v4074
  %4171 = vmatpush.msra.mxu0 %v4071
  %4172 = vmatpush.msra.mxu0 %v4069
  %4173 = vmatmul.f32.gmra.mxu0 %v4155
  %v4174 = vpop.f32.mrf.mxu0
  %v4175 = vadd.f32 0.0, %v4174
  %4176 = vdwg.mxu0
  %v4177 = vxor.u32 %v4175, 2147483648
  %v4178 = vmul.f32 %v4177, 1.442695
  %v4179 = vpow.pop %v4178
  %v4180 = vadd.f32 %v4179, 1.0
  %v4181 = vrcp.pop %v4180
  %v4182 = vmul.f32 %v4180, %v4181
  %v4183 = vsub.f32 1.0, %v4182
  %v4184 = vmul.f32 %v4181, %v4183
  %v4185 = vadd.f32 %v4181, %v4184
  %vm4186 = vweird.f32 %v4180
  %vm4187 = vweird.f32 %v4181
  %vm4188 = vmor %vm4186, %vm4187
  %v4189 = vsel %vm4188, %v4181, %v4185
  %v4190 = vand.u32 2147483647, %v4180
  %vm4191 = vcmp.eq.f32.partialorder %v4190, 8.507059e+37
  %v4192 = vand.u32 %v4180, 2147483648
  %v4193 = vor.u32 1.1754944e-38, %v4192
  %v4194 = vsel %vm4191, %v4193, %v4189
  %v4195 = vmul.f32 1.0, %v4194
  %v4196 = vld [vmem:[%s3] sm:$0xff]
  %v4197 = vld [vmem:[%s3 + $0x8] sm:$0xff]
  %v4198 = vld [vmem:[%s3 + $0x10] sm:$0xff]
  %v4199 = vld [vmem:[%s3 + $0x18] sm:$0xff]
  %v4200 = vperm.slane %v4195, 0
  %v4201 = vmul.f32 %v4196, %v4200
  %v4202 = vmul.f32 %v4197, %v4200
  %v4203 = vmul.f32 %v4198, %v4200
  %v4204 = vmul.f32 %v4199, %v4200
  %v4205 = vsel %vm4128, %v4201, 0.0
  %4206 = vadd.xlane.f32.xlu0 %v4205
  %v4207 = vpop.xlane.xlu0 %4206
  %v4208 = vsel %vm4128, %v4202, 0.0
  %4209 = vadd.xlane.f32.xlu0 %v4208
  %v4210 = vpop.xlane.xlu0 %4209
  %v4211 = vsel %vm4128, %v4203, 0.0
  %4212 = vadd.xlane.f32.xlu0 %v4211
  %v4213 = vpop.xlane.xlu0 %4212
  %v4214 = vsel %vm4128, %v4204, 0.0
  %4215 = vadd.xlane.f32.xlu0 %v4214
  %v4216 = vpop.xlane.xlu0 %4215
  %v4217 = vld [vmem:[#allocation2] sm:$0x1]
  %s4218 = vtos %v4217
  %v4219 = vstv %s4218
  %v4221 = vsel %vm4128, %v4069, 0
  %v4224 = vsel %vm4128, %v4071, 0
  %v4227 = vsel %vm4128, %v4074, 0
  %v4230 = vsel %vm4128, %v4076, 0
  %v4233 = vsel %vm4128, %v4079, 0
  %v4236 = vsel %vm4128, %v4081, 0
  %v4239 = vsel %vm4128, %v4084, 0
  %v4242 = vsel %vm4128, %v4086, 0
  %v4245 = vsel %vm4128, %v4089, 0
  %v4248 = vsel %vm4128, %v4091, 0
  %v4251 = vsel %vm4128, %v4094, 0
  %v4254 = vsel %vm4128, %v4096, 0
  %v4257 = vsel %vm4128, %v4099, 0
  %v4260 = vsel %vm4128, %v4101, 0
  %v4263 = vsel %vm4128, %v4104, 0
  %v4266 = vsel %vm4128, %v4106, 0
  %v4269 = vsel %vm4128, %v4109, 0
  %v4272 = vsel %vm4128, %v4111, 0
  %v4275 = vsel %vm4128, %v4114, 0
  %v4278 = vsel %vm4128, %v4116, 0
  %v4281 = vsel %vm4128, %v4119, 0
  %v4284 = vsel %vm4128, %v4121, 0
  %v4287 = vsel %vm4128, %v4124, 0
  %v4290 = vsel %vm4128, %v4126, 0
  %4292 = vmatpush.msra.mxu0 0.0
  %4293 = vmatpush.msra.mxu0 0.0
  %4294 = vmatpush.msra.mxu0 0.0
  %4295 = vmatpush.msra.mxu0 0.0
  %4296 = vmatpush.msra.mxu0 0.0
  %4297 = vmatpush.msra.mxu0 0.0
  %4298 = vmatpush.msra.mxu0 0.0
  %4299 = vmatpush.msra.mxu0 0.0
  %4300 = vmatpush.msra.mxu0 0.0
  %4301 = vmatpush.msra.mxu0 0.0
  %4302 = vmatpush.msra.mxu0 0.0
  %4303 = vmatpush.msra.mxu0 0.0
  %4304 = vmatpush.msra.mxu0 %v4216
  %4305 = vmatpush.msra.mxu0 %v4213
  %4306 = vmatpush.msra.mxu0 %v4210
  %4307 = vmatpush.msra.mxu0 %v4207
  %4308 = vmatmul.f32.gmra.mxu0 %v4221
  %v4309 = vpop.f32.mrf.mxu0
  %v4310 = vadd.f32 %v4219, %v4309
  %4311 = vmatmul.f32.gmra.mxu0 %v4224
  %v4312 = vpop.f32.mrf.mxu0
  %v4313 = vadd.f32 %v4219, %v4312
  %4314 = vmatmul.f32.gmra.mxu0 %v4227
  %v4315 = vpop.f32.mrf.mxu0
  %v4316 = vadd.f32 %v4219, %v4315
  %4317 = vmatmul.f32.gmra.mxu0 %v4230
  %v4318 = vpop.f32.mrf.mxu0
  %v4319 = vadd.f32 %v4219, %v4318
  %4320 = vmatmul.f32.gmra.mxu0 %v4233
  %v4321 = vpop.f32.mrf.mxu0
  %v4322 = vadd.f32 %v4219, %v4321
  %4323 = vmatmul.f32.gmra.mxu0 %v4236
  %v4324 = vpop.f32.mrf.mxu0
  %v4325 = vadd.f32 %v4219, %v4324
  %4326 = vmatmul.f32.gmra.mxu0 %v4239
  %v4327 = vpop.f32.mrf.mxu0
  %v4328 = vadd.f32 %v4219, %v4327
  %4329 = vmatmul.f32.gmra.mxu0 %v4242
  %v4330 = vpop.f32.mrf.mxu0
  %v4331 = vadd.f32 %v4219, %v4330
  %4332 = vmatmul.f32.gmra.mxu0 %v4245
  %v4333 = vpop.f32.mrf.mxu0
  %v4334 = vadd.f32 %v4219, %v4333
  %4335 = vmatmul.f32.gmra.mxu0 %v4248
  %v4336 = vpop.f32.mrf.mxu0
  %v4337 = vadd.f32 %v4219, %v4336
  %4338 = vmatmul.f32.gmra.mxu0 %v4251
  %v4339 = vpop.f32.mrf.mxu0
  %v4340 = vadd.f32 %v4219, %v4339
  %4341 = vmatmul.f32.gmra.mxu0 %v4254
  %v4342 = vpop.f32.mrf.mxu0
  %v4343 = vadd.f32 %v4219, %v4342
  %4344 = vmatmul.f32.gmra.mxu0 %v4257
  %v4345 = vpop.f32.mrf.mxu0
  %v4346 = vadd.f32 %v4219, %v4345
  %4347 = vmatmul.f32.gmra.mxu0 %v4260
  %v4348 = vpop.f32.mrf.mxu0
  %v4349 = vadd.f32 %v4219, %v4348
  %4350 = vmatmul.f32.gmra.mxu0 %v4263
  %v4351 = vpop.f32.mrf.mxu0
  %v4352 = vadd.f32 %v4219, %v4351
  %4353 = vmatmul.f32.gmra.mxu0 %v4266
  %v4354 = vpop.f32.mrf.mxu0
  %v4355 = vadd.f32 %v4219, %v4354
  %4356 = vmatmul.f32.gmra.mxu0 %v4269
  %v4357 = vpop.f32.mrf.mxu0
  %v4358 = vadd.f32 %v4219, %v4357
  %4359 = vmatmul.f32.gmra.mxu0 %v4272
  %v4360 = vpop.f32.mrf.mxu0
  %v4361 = vadd.f32 %v4219, %v4360
  %4362 = vmatmul.f32.gmra.mxu0 %v4275
  %v4363 = vpop.f32.mrf.mxu0
  %v4364 = vadd.f32 %v4219, %v4363
  %4365 = vmatmul.f32.gmra.mxu0 %v4278
  %v4366 = vpop.f32.mrf.mxu0
  %v4367 = vadd.f32 %v4219, %v4366
  %4368 = vmatmul.f32.gmra.mxu0 %v4281
  %v4369 = vpop.f32.mrf.mxu0
  %v4370 = vadd.f32 %v4219, %v4369
  %4371 = vmatmul.f32.gmra.mxu0 %v4284
  %v4372 = vpop.f32.mrf.mxu0
  %v4373 = vadd.f32 %v4219, %v4372
  %4374 = vmatmul.f32.gmra.mxu0 %v4287
  %v4375 = vpop.f32.mrf.mxu0
  %v4376 = vadd.f32 %v4219, %v4375
  %4377 = vmatmul.f32.gmra.mxu0 %v4290
  %v4378 = vpop.f32.mrf.mxu0
  %v4379 = vadd.f32 %v4219, %v4378
  %4380 = vdwg.mxu0
  %vm4381 = vcmask 7168
  %4382 = vst.msk [vmem:[%s6] sm:$0xff] %vm4381, %v4310
  %4383 = vst.msk [vmem:[%s6 + $0x8] sm:$0xff] %vm4381, %v4313
  %4384 = vst.msk [vmem:[%s6 + $0x10] sm:$0xff] %vm4381, %v4316
  %4385 = vst.msk [vmem:[%s6 + $0x18] sm:$0xff] %vm4381, %v4319
  %4386 = vst.msk [vmem:[%s6 + $0x20] sm:$0xff] %vm4381, %v4322
  %4387 = vst.msk [vmem:[%s6 + $0x28] sm:$0xff] %vm4381, %v4325
  %4388 = vst.msk [vmem:[%s6 + $0x30] sm:$0xff] %vm4381, %v4328
  %4389 = vst.msk [vmem:[%s6 + $0x38] sm:$0xff] %vm4381, %v4331
  %4390 = vst.msk [vmem:[%s6 + $0x40] sm:$0xff] %vm4381, %v4334
  %4391 = vst.msk [vmem:[%s6 + $0x48] sm:$0xff] %vm4381, %v4337
  %4392 = vst.msk [vmem:[%s6 + $0x50] sm:$0xff] %vm4381, %v4340
  %4393 = vst.msk [vmem:[%s6 + $0x58] sm:$0xff] %vm4381, %v4343
  %4394 = vst.msk [vmem:[%s6 + $0x60] sm:$0xff] %vm4381, %v4346
  %4395 = vst.msk [vmem:[%s6 + $0x68] sm:$0xff] %vm4381, %v4349
  %4396 = vst.msk [vmem:[%s6 + $0x70] sm:$0xff] %vm4381, %v4352
  %4397 = vst.msk [vmem:[%s6 + $0x78] sm:$0xff] %vm4381, %v4355
  %4398 = vst.msk [vmem:[%s6 + $0x80] sm:$0xff] %vm4381, %v4358
  %4399 = vst.msk [vmem:[%s6 + $0x88] sm:$0xff] %vm4381, %v4361
  %4400 = vst.msk [vmem:[%s6 + $0x90] sm:$0xff] %vm4381, %v4364
  %4401 = vst.msk [vmem:[%s6 + $0x98] sm:$0xff] %vm4381, %v4367
  %4402 = vst.msk [vmem:[%s6 + $0xa0] sm:$0xff] %vm4381, %v4370
  %4403 = vst.msk [vmem:[%s6 + $0xa8] sm:$0xff] %vm4381, %v4373
  %4404 = vst.msk [vmem:[%s6 + $0xb0] sm:$0xff] %vm4381, %v4376
  %4405 = vst.msk [vmem:[%s6 + $0xb8] sm:$0xff] %vm4381, %v4379
  // Predicated region
  $region22: #{mrcgnn_forward.4} parent=0 // pred_check
    _
  $region23: #{mrcgnn_forward.4} parent=0 // pred_check_branch
    %4407 = sbr.rel (0) target = $region25
  $region24: #{mrcgnn_forward.4} parent=0 // pred_region
    _
  $region25: #{mrcgnn_forward.4} parent=0 // pred_fallthru
    _
  // Predicated region
  $region26: #{mrcgnn_forward.4} parent=0 // pred_check
    _
  $region27: #{mrcgnn_forward.4} parent=0 // pred_check_branch
    %4409 = sbr.rel (0) target = $region29
  $region28: #{mrcgnn_forward.4} parent=0 // pred_region
    _
  $region29: #{mrcgnn_forward.4} parent=0 // pred_fallthru
    _
  // Predicated region
  $region30: #{mrcgnn_forward.4} parent=0 // pred_check
    _
  $region31: #{mrcgnn_forward.4} parent=0 // pred_check_branch
    %4411 = sbr.rel (0) target = $region33
  $region32: #{mrcgnn_forward.4} parent=0 // pred_region
    _
  $region33: #{mrcgnn_forward.4} parent=0 // pred_fallthru
    _
  // Predicated region
  $region34: #{mrcgnn_forward.4} parent=0 // pred_check
    _
  $region35: #{mrcgnn_forward.4} parent=0 // pred_check_branch
    %4413 = sbr.rel (0) target = $region37
  $region36: #{mrcgnn_forward.4} parent=0 // pred_region
    _
  $region37: #{mrcgnn_forward.4} parent=0 // pred_fallthru
    _

</llo_original>
